<compile_context>
chip_gen: v7x
topology: tpu7x:2x2x1
jax: 0.10.0
libtpu: 0.0.40
codegen_flags: <defaults>
</compile_context>

<pallas_src>
import math
from functools import partial

import jax
import jax.numpy as jnp
from jax.experimental import pallas as pl
from jax.experimental.pallas import tpu as pltpu


# ----------------------------- Pallas kernels ------------------------------

def attn_block_kernel(x_ref, g_ref, b_ref, wq_ref, wkv_ref, wp_ref, bp_ref,
                      o_ref, *, num_heads: int, scale: float, eps: float):
    """Per-batch fused: x + proj(MHA(LN1(x)))."""
    x = x_ref[0]                                   # (N, C), native dtype
    xf = x.astype(jnp.float32)

    # --- LayerNorm (fused into the QKV matmul kernel) ---
    mu = jnp.mean(xf, axis=-1, keepdims=True)
    var = jnp.mean(jnp.square(xf - mu), axis=-1, keepdims=True)
    xn = ((xf - mu) * jax.lax.rsqrt(var + eps)) * g_ref[0].astype(jnp.float32) \
         + b_ref[0].astype(jnp.float32)
    xn = xn.astype(x.dtype)                        # feed native dtype to MXU

    # --- q / kv projections (bias-free, matches qkv_bias=False) ---
    q = jnp.dot(xn, wq_ref[...], preferred_element_type=jnp.float32)   # (N, C)
    kv = jnp.dot(xn, wkv_ref[...], preferred_element_type=jnp.float32)  # (N, 2C)

    N, C = x.shape
    hd = C // num_heads
    k = kv[:, :C]
    v = kv[:, C:]

    # --- per-head attention; output projection accumulated per head so the
    #     kernel never materialises a lane-sparse (N, hd) HBM block ---
    proj = jnp.zeros((N, C), jnp.float32)
    for h in range(num_heads):
        lo = h * hd
        qh = q[:, lo:lo + hd]
        kh = k[:, lo:lo + hd]
        vh = v[:, lo:lo + hd]
        # q @ k^T without materialising a transpose (contract last dims).
        s = jax.lax.dot_general(qh, kh, (((1,), (1,)), ((), ())),
                                preferred_element_type=jnp.float32) * scale
        s = s - jnp.max(s, axis=-1, keepdims=True)
        p = jnp.exp(s)
        # EUP approx reciprocal, folded into the (N, hd) result (not the NxN map).
        inv_l = pl.reciprocal(jnp.sum(p, axis=-1, keepdims=True), approx=True)
        oh = jnp.dot(p, vh, preferred_element_type=jnp.float32) * inv_l   # (N, hd)
        proj = proj + jnp.dot(oh.astype(x.dtype),
                              wp_ref[pl.ds(lo, hd), :],
                              preferred_element_type=jnp.float32)

    # --- proj bias + residual fused into the epilogue ---
    o_ref[0] = (xf + proj + bp_ref[0].astype(jnp.float32)).astype(o_ref.dtype)


def mlp_block_kernel(x_ref, g_ref, b_ref, w1_ref, b1_ref, wdw_ref, bdw_ref,
                     w2_ref, b2_ref, o_ref, pad_ref, *, H: int, W: int,
                     eps: float):
    """Per-batch fused: x + FC2(GELU(DWConv3x3(FC1(LN2(x)))))."""
    x = x_ref[0]                                   # (N, C), N = H*W
    xf = x.astype(jnp.float32)

    # --- LayerNorm fused into FC1 ---
    mu = jnp.mean(xf, axis=-1, keepdims=True)
    var = jnp.mean(jnp.square(xf - mu), axis=-1, keepdims=True)
    xn = (((xf - mu) * jax.lax.rsqrt(var + eps)) * g_ref[0].astype(jnp.float32)
          + b_ref[0].astype(jnp.float32)).astype(x.dtype)

    h1 = jnp.dot(xn, w1_ref[...], preferred_element_type=jnp.float32)
    h1 = h1 + b1_ref[0].astype(jnp.float32)        # (N, hidden) f32
    hidden = w1_ref.shape[1]

    # --- depthwise 3x3 conv, padding=1: halo handled in a VMEM scratch
    #     (no jnp.pad / extra HBM copy of the largest activation) ---
    pad_ref[...] = jnp.zeros((H + 2, W + 2, hidden), jnp.float32)
    pad_ref[pl.ds(1, H), pl.ds(1, W), :] = h1.reshape(H, W, hidden)
    xp = pad_ref[...]
    acc = jnp.zeros((H, W, hidden), jnp.float32)
    for kh in range(3):
        for kw in range(3):
            tap = wdw_ref[kh * 3 + kw].astype(jnp.float32)        # (hidden,)
            acc = acc + xp[kh:kh + H, kw:kw + W, :] * tap[None, None, :]
    acc = acc + bdw_ref[0][None, None, :].astype(jnp.float32)

    # --- exact (erf) GELU fused with conv epilogue ---
    act = 0.5 * acc * (1.0 + jax.lax.erf(acc * (1.0 / math.sqrt(2.0))))
    act2d = act.reshape(H * W, hidden).astype(x.dtype)

    # --- FC2 + bias + residual fused ---
    out = jnp.dot(act2d, w2_ref[...], preferred_element_type=jnp.float32)
    o_ref[0] = (xf + out + b2_ref[0].astype(jnp.float32)).astype(o_ref.dtype)


# ------------------------------ JAX wrappers --------------------------------

def attn_branch(x, ln_g, ln_b, wq, wkv, wp, bp, *, num_heads, eps=1e-5):
    B, N, C = x.shape
    hd = C // num_heads
    scale = hd ** (-0.5)
    return pl.pallas_call(
        partial(attn_block_kernel, num_heads=num_heads, scale=scale, eps=eps),
        out_shape=jax.ShapeDtypeStruct((B, N, C), x.dtype),
        grid=(B,),
        in_specs=[
            pl.BlockSpec((1, N, C), lambda b: (b, 0, 0)),
            pl.BlockSpec((1, C), lambda b: (0, 0)),
            pl.BlockSpec((1, C), lambda b: (0, 0)),
            pl.BlockSpec((C, C), lambda b: (0, 0)),
            pl.BlockSpec((C, 2 * C), lambda b: (0, 0)),
            pl.BlockSpec((C, C), lambda b: (0, 0)),
            pl.BlockSpec((1, C), lambda b: (0, 0)),
        ],
        out_specs=pl.BlockSpec((1, N, C), lambda b: (b, 0, 0)),
        compiler_params=pltpu.CompilerParams(dimension_semantics=("parallel",)),
    )(x, ln_g.reshape(1, -1), ln_b.reshape(1, -1), wq, wkv, wp, bp.reshape(1, -1))


def mlp_branch(x, ln_g, ln_b, w1, b1, wdw, bdw, w2, b2, *, H, W, eps=1e-5):
    B, N, C = x.shape
    assert N == H * W
    hidden = w1.shape[1]
    return pl.pallas_call(
        partial(mlp_block_kernel, H=H, W=W, eps=eps),
        out_shape=jax.ShapeDtypeStruct((B, N, C), x.dtype),
        grid=(B,),
        in_specs=[
            pl.BlockSpec((1, N, C), lambda b: (b, 0, 0)),
            pl.BlockSpec((1, C), lambda b: (0, 0)),
            pl.BlockSpec((1, C), lambda b: (0, 0)),
            pl.BlockSpec((C, hidden), lambda b: (0, 0)),
            pl.BlockSpec((1, hidden), lambda b: (0, 0)),
            pl.BlockSpec((9, hidden), lambda b: (0, 0)),
            pl.BlockSpec((1, hidden), lambda b: (0, 0)),
            pl.BlockSpec((hidden, C), lambda b: (0, 0)),
            pl.BlockSpec((1, C), lambda b: (0, 0)),
        ],
        out_specs=pl.BlockSpec((1, N, C), lambda b: (b, 0, 0)),
        scratch_shapes=[pltpu.VMEM((H + 2, W + 2, hidden), jnp.float32)],
        compiler_params=pltpu.CompilerParams(dimension_semantics=("parallel",)),
    )(x, ln_g.reshape(1, -1), ln_b.reshape(1, -1), w1, b1.reshape(1, -1),
      wdw, bdw.reshape(1, -1), w2, b2.reshape(1, -1))


def block_forward(x, params, H, W, num_heads):
    # x = x + attn(norm1(x));  x = x + mlp(norm2(x))
    x = attn_branch(x, params["ln1_g"], params["ln1_b"],
                    params["wq"], params["wkv"], params["wp"], params["bp"],
                    num_heads=num_heads)
    x = mlp_branch(x, params["ln2_g"], params["ln2_b"],
                   params["w1"], params["b1"], params["wdw"], params["bdw"],
                   params["w2"], params["b2"], H=H, W=W)
    return x


# ------------------------- pure-JAX reference (check) ------------------------

def block_reference(x, params, H, W, num_heads, eps=1e-5):
    B, N, C = x.shape
    hd = C // num_heads
    scale = hd ** (-0.5)

    def ln(v, g, b):
        mu = v.mean(-1, keepdims=True)
        var = ((v - mu) ** 2).mean(-1, keepdims=True)
        return (v - mu) / jnp.sqrt(var + eps) * g + b

    xn = ln(x, params["ln1_g"], params["ln1_b"])
    q = (xn @ params["wq"]).reshape(B, N, num_heads, hd).transpose(0, 2, 1, 3)
    kv = (xn @ params["wkv"]).reshape(B, N, 2, num_heads, hd).transpose(2, 0, 3, 1, 4)
    k, v = kv[0], kv[1]
    attn = jnp.einsum("bhqd,bhkd->bhqk", q, k) * scale
    attn = jax.nn.softmax(attn, axis=-1)
    ao = jnp.einsum("bhqk,bhkd->bhqd", attn, v).transpose(0, 2, 1, 3).reshape(B, N, C)
    x = x + ao @ params["wp"] + params["bp"]

    xn2 = ln(x, params["ln2_g"], params["ln2_b"])
    h1 = xn2 @ params["w1"] + params["b1"]
    hidden = h1.shape[-1]
    himg = h1.reshape(B, H, W, hidden)
    hp = jnp.pad(himg, ((0, 0), (1, 1), (1, 1), (0, 0)))
    acc = jnp.zeros_like(himg)
    for kh in range(3):
        for kw in range(3):
            acc = acc + hp[:, kh:kh + H, kw:kw + W, :] * params["wdw"][kh * 3 + kw]
    acc = acc + params["bdw"]
    act = 0.5 * acc * (1.0 + jax.lax.erf(acc * (1.0 / math.sqrt(2.0))))
    out = act.reshape(B, N, hidden) @ params["w2"] + params["b2"]
    return x + out


# --------------------------------- params ------------------------------------

def init_params(key, dim, num_heads, mlp_ratio):
    hidden = int(dim * mlp_ratio)
    ks = jax.random.split(key, 6)
    s = 0.02
    p = {
        "ln1_g": jnp.ones((dim,), jnp.float32),
        "ln1_b": jnp.zeros((dim,), jnp.float32),
        "wq": jax.random.normal(ks[0], (dim, dim), jnp.float32) * s,
        "wkv": jax.random.normal(ks[1], (dim, 2 * dim), jnp.float32) * s,
        "wp": jax.random.normal(ks[2], (dim, dim), jnp.float32) * s,
        "bp": jnp.zeros((dim,), jnp.float32),
        "ln2_g": jnp.ones((dim,), jnp.float32),
        "ln2_b": jnp.zeros((dim,), jnp.float32),
        "w1": jax.random.normal(ks[3], (dim, hidden), jnp.float32) * s,
        "b1": jnp.zeros((hidden,), jnp.float32),
        # depthwise 3x3 weights stored as (9, hidden): tap index = kh*3 + kw
        "wdw": jax.random.normal(ks[4], (9, hidden), jnp.float32) * s,
        "bdw": jnp.zeros((hidden,), jnp.float32),
        "w2": jax.random.normal(ks[5], (hidden, dim), jnp.float32) * s,
        "b2": jnp.zeros((dim,), jnp.float32),
    }
    return p, hidden


# ---------------------------------- main --------------------------------------

if __name__ == "__main__":
    B, H, W = 2, 8, 8
    N = H * W
    dim = 32
    num_heads = 4
    mlp_ratio = 4.0

    key = jax.random.PRNGKey(0)
    kx, kp = jax.random.split(key)
    x = jax.random.normal(kx, (B, N, dim), jnp.float32)
    params, hidden = init_params(kp, dim, num_heads, mlp_ratio)

    fwd = jax.jit(partial(block_forward, H=H, W=W, num_heads=num_heads))
    out = fwd(x, params)
    jax.block_until_ready(out)

    assert out.shape == (B, N, dim), out.shape
    assert bool(jnp.all(jnp.isfinite(out)))

    ref = block_reference(x, params, H, W, num_heads)
    assert bool(jnp.allclose(out, ref, atol=1e-2, rtol=1e-2)), \
        float(jnp.max(jnp.abs(out - ref)))

    # TODO(synk): dropout / drop-path (identity at p=0), sr_ratio>1 spatial
    # reduction and the coord=True CoordAtt branches are not implemented.
    print("KERNEL_OK")
</pallas_src>

<mosaic_0001>
module attributes {stable_mosaic.version = 11 : i64} {
  func.func @attn_block_kernel(%arg0: i32, %arg1: memref<1x64x32xf32, #tpu.memory_space<vmem>>, %arg2: memref<1x32xf32, #tpu.memory_space<vmem>>, %arg3: memref<1x32xf32, #tpu.memory_space<vmem>>, %arg4: memref<32x32xf32, #tpu.memory_space<vmem>>, %arg5: memref<32x64xf32, #tpu.memory_space<vmem>>, %arg6: memref<32x32xf32, #tpu.memory_space<vmem>>, %arg7: memref<1x32xf32, #tpu.memory_space<vmem>>, %arg8: memref<1x64x32xf32, #tpu.memory_space<vmem>>) attributes {dimension_semantics = [#tpu.dimension_semantics<parallel>], iteration_bounds = array<i64: 2>, scalar_prefetch = 0 : i64, scratch_operands = 0 : i64, tpu.core_type = #tpu.core_type<tc>, window_params = [{transform_indices = @transform_0, window_bounds = array<i64: 1, 64, 32>}, {pipeline_mode = #tpu.pipeline_mode<synchronous>, transform_indices = @transform_1, window_bounds = array<i64: 1, 32>}, {pipeline_mode = #tpu.pipeline_mode<synchronous>, transform_indices = @transform_2, window_bounds = array<i64: 1, 32>}, {pipeline_mode = #tpu.pipeline_mode<synchronous>, transform_indices = @transform_3, window_bounds = array<i64: 32, 32>}, {pipeline_mode = #tpu.pipeline_mode<synchronous>, transform_indices = @transform_4, window_bounds = array<i64: 32, 64>}, {pipeline_mode = #tpu.pipeline_mode<synchronous>, transform_indices = @transform_5, window_bounds = array<i64: 32, 32>}, {pipeline_mode = #tpu.pipeline_mode<synchronous>, transform_indices = @transform_6, window_bounds = array<i64: 1, 32>}, {transform_indices = @transform_7, window_bounds = array<i64: 1, 64, 32>}]} {
    %c0 = arith.constant 0 : index
    %c0_0 = arith.constant 0 : index
    %c0_1 = arith.constant 0 : index
    %0 = vector.load %arg1[%c0, %c0_0, %c0_1] : memref<1x64x32xf32, #tpu.memory_space<vmem>>, vector<1x64x32xf32>
    %1 = vector.shape_cast %0 : vector<1x64x32xf32> to vector<64x32xf32>
    %cst = arith.constant dense<0.000000e+00> : vector<64xf32>
    %2 = vector.multi_reduction <add>, %1, %cst [1] : vector<64x32xf32> to vector<64xf32>
    %3 = vector.shape_cast %2 : vector<64xf32> to vector<64x1xf32>
    %cst_2 = arith.constant 3.200000e+01 : f32
    %4 = vector.broadcast %cst_2 : f32 to vector<64x1xf32>
    %5 = arith.divf %3, %4 : vector<64x1xf32>
    %6 = vector.broadcast %5 : vector<64x1xf32> to vector<64x32xf32>
    %7 = arith.subf %1, %6 : vector<64x32xf32>
    %8 = arith.mulf %7, %7 : vector<64x32xf32>
    %cst_3 = arith.constant dense<0.000000e+00> : vector<64xf32>
    %9 = vector.multi_reduction <add>, %8, %cst_3 [1] : vector<64x32xf32> to vector<64xf32>
    %10 = vector.shape_cast %9 : vector<64xf32> to vector<64x1xf32>
    %cst_4 = arith.constant 3.200000e+01 : f32
    %11 = vector.broadcast %cst_4 : f32 to vector<64x1xf32>
    %12 = arith.divf %10, %11 : vector<64x1xf32>
    %13 = vector.broadcast %5 : vector<64x1xf32> to vector<64x32xf32>
    %14 = arith.subf %1, %13 : vector<64x32xf32>
    %cst_5 = arith.constant 9.99999974E-6 : f32
    %15 = vector.broadcast %cst_5 : f32 to vector<64x1xf32>
    %16 = arith.addf %12, %15 : vector<64x1xf32>
    %17 = math.rsqrt %16 : vector<64x1xf32>
    %18 = vector.broadcast %17 : vector<64x1xf32> to vector<64x32xf32>
    %19 = arith.mulf %14, %18 : vector<64x32xf32>
    %c0_6 = arith.constant 0 : index
    %c0_7 = arith.constant 0 : index
    %20 = vector.load %arg2[%c0_6, %c0_7] : memref<1x32xf32, #tpu.memory_space<vmem>>, vector<1x32xf32>
    %21 = vector.shape_cast %20 : vector<1x32xf32> to vector<32xf32>
    %22 = vector.shape_cast %21 : vector<32xf32> to vector<1x32xf32>
    %23 = vector.broadcast %22 : vector<1x32xf32> to vector<64x32xf32>
    %24 = arith.mulf %19, %23 : vector<64x32xf32>
    %c0_8 = arith.constant 0 : index
    %c0_9 = arith.constant 0 : index
    %25 = vector.load %arg3[%c0_8, %c0_9] : memref<1x32xf32, #tpu.memory_space<vmem>>, vector<1x32xf32>
    %26 = vector.shape_cast %25 : vector<1x32xf32> to vector<32xf32>
    %27 = vector.shape_cast %26 : vector<32xf32> to vector<1x32xf32>
    %28 = vector.broadcast %27 : vector<1x32xf32> to vector<64x32xf32>
    %29 = arith.addf %24, %28 : vector<64x32xf32>
    %c0_10 = arith.constant 0 : index
    %c0_11 = arith.constant 0 : index
    %30 = vector.load %arg4[%c0_10, %c0_11] : memref<32x32xf32, #tpu.memory_space<vmem>>, vector<32x32xf32>
    %cst_12 = arith.constant dense<0.000000e+00> : vector<64x32xf32>
    %31 = tpu.matmul %29, %30, %cst_12 {dimension_numbers = #tpu.dot_dimension_numbers<[1], [0], [0], [1], [0, 0, 1, 1], [], []>} : vector<64x32xf32>, vector<32x32xf32>, vector<64x32xf32> -> vector<64x32xf32>
    %c0_13 = arith.constant 0 : index
    %c0_14 = arith.constant 0 : index
    %32 = vector.load %arg5[%c0_13, %c0_14] : memref<32x64xf32, #tpu.memory_space<vmem>>, vector<32x64xf32>
    %cst_15 = arith.constant dense<0.000000e+00> : vector<64x64xf32>
    %33 = tpu.matmul %29, %32, %cst_15 {dimension_numbers = #tpu.dot_dimension_numbers<[1], [0], [0], [1], [0, 0, 1, 1], [], []>} : vector<64x32xf32>, vector<32x64xf32>, vector<64x64xf32> -> vector<64x64xf32>
    %34 = vector.extract_strided_slice %33 {offsets = [0, 0], sizes = [64, 32], strides = [1, 1]} : vector<64x64xf32> to vector<64x32xf32>
    %35 = vector.extract_strided_slice %33 {offsets = [0, 32], sizes = [64, 32], strides = [1, 1]} : vector<64x64xf32> to vector<64x32xf32>
    %cst_16 = arith.constant 0.000000e+00 : f32
    %36 = vector.broadcast %cst_16 : f32 to vector<64x32xf32>
    %37 = vector.extract_strided_slice %31 {offsets = [0, 0], sizes = [64, 8], strides = [1, 1]} : vector<64x32xf32> to vector<64x8xf32>
    %38 = vector.extract_strided_slice %34 {offsets = [0, 0], sizes = [64, 8], strides = [1, 1]} : vector<64x32xf32> to vector<64x8xf32>
    %39 = vector.extract_strided_slice %35 {offsets = [0, 0], sizes = [64, 8], strides = [1, 1]} : vector<64x32xf32> to vector<64x8xf32>
    %cst_17 = arith.constant dense<0.000000e+00> : vector<64x64xf32>
    %40 = tpu.matmul %37, %38, %cst_17 {dimension_numbers = #tpu.dot_dimension_numbers<[1], [1], [0], [0], [0, 0, 1, 0], [], []>} : vector<64x8xf32>, vector<64x8xf32>, vector<64x64xf32> -> vector<64x64xf32>
    %cst_18 = arith.constant 0.353553385 : f32
    %41 = vector.broadcast %cst_18 : f32 to vector<64x64xf32>
    %42 = arith.mulf %40, %41 : vector<64x64xf32>
    %cst_19 = arith.constant dense<0xFF800000> : vector<64xf32>
    %43 = vector.multi_reduction <maximumf>, %42, %cst_19 [1] : vector<64x64xf32> to vector<64xf32>
    %44 = vector.shape_cast %43 : vector<64xf32> to vector<64x1xf32>
    %45 = vector.broadcast %44 : vector<64x1xf32> to vector<64x64xf32>
    %46 = arith.subf %42, %45 : vector<64x64xf32>
    %47 = math.exp %46 : vector<64x64xf32>
    %cst_20 = arith.constant dense<0.000000e+00> : vector<64xf32>
    %48 = vector.multi_reduction <add>, %47, %cst_20 [1] : vector<64x64xf32> to vector<64xf32>
    %49 = vector.shape_cast %48 : vector<64xf32> to vector<64x1xf32>
    %50 = tpu.reciprocal %49 {approx = true} : vector<64x1xf32> -> vector<64x1xf32>
    %cst_21 = arith.constant dense<0.000000e+00> : vector<64x8xf32>
    %51 = tpu.matmul %47, %39, %cst_21 {dimension_numbers = #tpu.dot_dimension_numbers<[1], [0], [0], [1], [0, 0, 1, 1], [], []>} : vector<64x64xf32>, vector<64x8xf32>, vector<64x8xf32> -> vector<64x8xf32>
    %52 = vector.broadcast %50 : vector<64x1xf32> to vector<64x8xf32>
    %53 = arith.mulf %51, %52 : vector<64x8xf32>
    %c0_22 = arith.constant 0 : index
    %c0_23 = arith.constant 0 : index
    %54 = vector.load %arg6[%c0_22, %c0_23] : memref<32x32xf32, #tpu.memory_space<vmem>>, vector<8x32xf32>
    %cst_24 = arith.constant dense<0.000000e+00> : vector<64x32xf32>
    %55 = tpu.matmul %53, %54, %cst_24 {dimension_numbers = #tpu.dot_dimension_numbers<[1], [0], [0], [1], [0, 0, 1, 1], [], []>} : vector<64x8xf32>, vector<8x32xf32>, vector<64x32xf32> -> vector<64x32xf32>
    %56 = arith.addf %36, %55 : vector<64x32xf32>
    %57 = vector.extract_strided_slice %31 {offsets = [0, 8], sizes = [64, 8], strides = [1, 1]} : vector<64x32xf32> to vector<64x8xf32>
    %58 = vector.extract_strided_slice %34 {offsets = [0, 8], sizes = [64, 8], strides = [1, 1]} : vector<64x32xf32> to vector<64x8xf32>
    %59 = vector.extract_strided_slice %35 {offsets = [0, 8], sizes = [64, 8], strides = [1, 1]} : vector<64x32xf32> to vector<64x8xf32>
    %cst_25 = arith.constant dense<0.000000e+00> : vector<64x64xf32>
    %60 = tpu.matmul %57, %58, %cst_25 {dimension_numbers = #tpu.dot_dimension_numbers<[1], [1], [0], [0], [0, 0, 1, 0], [], []>} : vector<64x8xf32>, vector<64x8xf32>, vector<64x64xf32> -> vector<64x64xf32>
    %cst_26 = arith.constant 0.353553385 : f32
    %61 = vector.broadcast %cst_26 : f32 to vector<64x64xf32>
    %62 = arith.mulf %60, %61 : vector<64x64xf32>
    %cst_27 = arith.constant dense<0xFF800000> : vector<64xf32>
    %63 = vector.multi_reduction <maximumf>, %62, %cst_27 [1] : vector<64x64xf32> to vector<64xf32>
    %64 = vector.shape_cast %63 : vector<64xf32> to vector<64x1xf32>
    %65 = vector.broadcast %64 : vector<64x1xf32> to vector<64x64xf32>
    %66 = arith.subf %62, %65 : vector<64x64xf32>
    %67 = math.exp %66 : vector<64x64xf32>
    %cst_28 = arith.constant dense<0.000000e+00> : vector<64xf32>
    %68 = vector.multi_reduction <add>, %67, %cst_28 [1] : vector<64x64xf32> to vector<64xf32>
    %69 = vector.shape_cast %68 : vector<64xf32> to vector<64x1xf32>
    %70 = tpu.reciprocal %69 {approx = true} : vector<64x1xf32> -> vector<64x1xf32>
    %cst_29 = arith.constant dense<0.000000e+00> : vector<64x8xf32>
    %71 = tpu.matmul %67, %59, %cst_29 {dimension_numbers = #tpu.dot_dimension_numbers<[1], [0], [0], [1], [0, 0, 1, 1], [], []>} : vector<64x64xf32>, vector<64x8xf32>, vector<64x8xf32> -> vector<64x8xf32>
    %72 = vector.broadcast %70 : vector<64x1xf32> to vector<64x8xf32>
    %73 = arith.mulf %71, %72 : vector<64x8xf32>
    %c8 = arith.constant 8 : index
    %c0_30 = arith.constant 0 : index
    %74 = vector.load %arg6[%c8, %c0_30] : memref<32x32xf32, #tpu.memory_space<vmem>>, vector<8x32xf32>
    %cst_31 = arith.constant dense<0.000000e+00> : vector<64x32xf32>
    %75 = tpu.matmul %73, %74, %cst_31 {dimension_numbers = #tpu.dot_dimension_numbers<[1], [0], [0], [1], [0, 0, 1, 1], [], []>} : vector<64x8xf32>, vector<8x32xf32>, vector<64x32xf32> -> vector<64x32xf32>
    %76 = arith.addf %56, %75 : vector<64x32xf32>
    %77 = vector.extract_strided_slice %31 {offsets = [0, 16], sizes = [64, 8], strides = [1, 1]} : vector<64x32xf32> to vector<64x8xf32>
    %78 = vector.extract_strided_slice %34 {offsets = [0, 16], sizes = [64, 8], strides = [1, 1]} : vector<64x32xf32> to vector<64x8xf32>
    %79 = vector.extract_strided_slice %35 {offsets = [0, 16], sizes = [64, 8], strides = [1, 1]} : vector<64x32xf32> to vector<64x8xf32>
    %cst_32 = arith.constant dense<0.000000e+00> : vector<64x64xf32>
    %80 = tpu.matmul %77, %78, %cst_32 {dimension_numbers = #tpu.dot_dimension_numbers<[1], [1], [0], [0], [0, 0, 1, 0], [], []>} : vector<64x8xf32>, vector<64x8xf32>, vector<64x64xf32> -> vector<64x64xf32>
    %cst_33 = arith.constant 0.353553385 : f32
    %81 = vector.broadcast %cst_33 : f32 to vector<64x64xf32>
    %82 = arith.mulf %80, %81 : vector<64x64xf32>
    %cst_34 = arith.constant dense<0xFF800000> : vector<64xf32>
    %83 = vector.multi_reduction <maximumf>, %82, %cst_34 [1] : vector<64x64xf32> to vector<64xf32>
    %84 = vector.shape_cast %83 : vector<64xf32> to vector<64x1xf32>
    %85 = vector.broadcast %84 : vector<64x1xf32> to vector<64x64xf32>
    %86 = arith.subf %82, %85 : vector<64x64xf32>
    %87 = math.exp %86 : vector<64x64xf32>
    %cst_35 = arith.constant dense<0.000000e+00> : vector<64xf32>
    %88 = vector.multi_reduction <add>, %87, %cst_35 [1] : vector<64x64xf32> to vector<64xf32>
    %89 = vector.shape_cast %88 : vector<64xf32> to vector<64x1xf32>
    %90 = tpu.reciprocal %89 {approx = true} : vector<64x1xf32> -> vector<64x1xf32>
    %cst_36 = arith.constant dense<0.000000e+00> : vector<64x8xf32>
    %91 = tpu.matmul %87, %79, %cst_36 {dimension_numbers = #tpu.dot_dimension_numbers<[1], [0], [0], [1], [0, 0, 1, 1], [], []>} : vector<64x64xf32>, vector<64x8xf32>, vector<64x8xf32> -> vector<64x8xf32>
    %92 = vector.broadcast %90 : vector<64x1xf32> to vector<64x8xf32>
    %93 = arith.mulf %91, %92 : vector<64x8xf32>
    %c16 = arith.constant 16 : index
    %c0_37 = arith.constant 0 : index
    %94 = vector.load %arg6[%c16, %c0_37] : memref<32x32xf32, #tpu.memory_space<vmem>>, vector<8x32xf32>
    %cst_38 = arith.constant dense<0.000000e+00> : vector<64x32xf32>
    %95 = tpu.matmul %93, %94, %cst_38 {dimension_numbers = #tpu.dot_dimension_numbers<[1], [0], [0], [1], [0, 0, 1, 1], [], []>} : vector<64x8xf32>, vector<8x32xf32>, vector<64x32xf32> -> vector<64x32xf32>
    %96 = arith.addf %76, %95 : vector<64x32xf32>
    %97 = vector.extract_strided_slice %31 {offsets = [0, 24], sizes = [64, 8], strides = [1, 1]} : vector<64x32xf32> to vector<64x8xf32>
    %98 = vector.extract_strided_slice %34 {offsets = [0, 24], sizes = [64, 8], strides = [1, 1]} : vector<64x32xf32> to vector<64x8xf32>
    %99 = vector.extract_strided_slice %35 {offsets = [0, 24], sizes = [64, 8], strides = [1, 1]} : vector<64x32xf32> to vector<64x8xf32>
    %cst_39 = arith.constant dense<0.000000e+00> : vector<64x64xf32>
    %100 = tpu.matmul %97, %98, %cst_39 {dimension_numbers = #tpu.dot_dimension_numbers<[1], [1], [0], [0], [0, 0, 1, 0], [], []>} : vector<64x8xf32>, vector<64x8xf32>, vector<64x64xf32> -> vector<64x64xf32>
    %cst_40 = arith.constant 0.353553385 : f32
    %101 = vector.broadcast %cst_40 : f32 to vector<64x64xf32>
    %102 = arith.mulf %100, %101 : vector<64x64xf32>
    %cst_41 = arith.constant dense<0xFF800000> : vector<64xf32>
    %103 = vector.multi_reduction <maximumf>, %102, %cst_41 [1] : vector<64x64xf32> to vector<64xf32>
    %104 = vector.shape_cast %103 : vector<64xf32> to vector<64x1xf32>
    %105 = vector.broadcast %104 : vector<64x1xf32> to vector<64x64xf32>
    %106 = arith.subf %102, %105 : vector<64x64xf32>
    %107 = math.exp %106 : vector<64x64xf32>
    %cst_42 = arith.constant dense<0.000000e+00> : vector<64xf32>
    %108 = vector.multi_reduction <add>, %107, %cst_42 [1] : vector<64x64xf32> to vector<64xf32>
    %109 = vector.shape_cast %108 : vector<64xf32> to vector<64x1xf32>
    %110 = tpu.reciprocal %109 {approx = true} : vector<64x1xf32> -> vector<64x1xf32>
    %cst_43 = arith.constant dense<0.000000e+00> : vector<64x8xf32>
    %111 = tpu.matmul %107, %99, %cst_43 {dimension_numbers = #tpu.dot_dimension_numbers<[1], [0], [0], [1], [0, 0, 1, 1], [], []>} : vector<64x64xf32>, vector<64x8xf32>, vector<64x8xf32> -> vector<64x8xf32>
    %112 = vector.broadcast %110 : vector<64x1xf32> to vector<64x8xf32>
    %113 = arith.mulf %111, %112 : vector<64x8xf32>
    %c24 = arith.constant 24 : index
    %c0_44 = arith.constant 0 : index
    %114 = vector.load %arg6[%c24, %c0_44] : memref<32x32xf32, #tpu.memory_space<vmem>>, vector<8x32xf32>
    %cst_45 = arith.constant dense<0.000000e+00> : vector<64x32xf32>
    %115 = tpu.matmul %113, %114, %cst_45 {dimension_numbers = #tpu.dot_dimension_numbers<[1], [0], [0], [1], [0, 0, 1, 1], [], []>} : vector<64x8xf32>, vector<8x32xf32>, vector<64x32xf32> -> vector<64x32xf32>
    %116 = arith.addf %96, %115 : vector<64x32xf32>
    %117 = arith.addf %1, %116 : vector<64x32xf32>
    %c0_46 = arith.constant 0 : index
    %c0_47 = arith.constant 0 : index
    %118 = vector.load %arg7[%c0_46, %c0_47] : memref<1x32xf32, #tpu.memory_space<vmem>>, vector<1x32xf32>
    %119 = vector.shape_cast %118 : vector<1x32xf32> to vector<32xf32>
    %120 = vector.shape_cast %119 : vector<32xf32> to vector<1x32xf32>
    %121 = vector.broadcast %120 : vector<1x32xf32> to vector<64x32xf32>
    %122 = arith.addf %117, %121 : vector<64x32xf32>
    %c0_48 = arith.constant 0 : index
    %c0_49 = arith.constant 0 : index
    %c0_50 = arith.constant 0 : index
    %123 = vector.load %arg8[%c0_48, %c0_49, %c0_50] : memref<1x64x32xf32, #tpu.memory_space<vmem>>, vector<1x64x32xf32>
    %124 = vector.shape_cast %123 : vector<1x64x32xf32> to vector<64x32xf32>
    %125 = vector.shape_cast %122 : vector<64x32xf32> to vector<1x64x32xf32>
    tpu.vector_store %arg8[%c0_48, %c0_49, %c0_50], %125 {strides = array<i32>} : memref<1x64x32xf32, #tpu.memory_space<vmem>>, vector<1x64x32xf32>,
    return
  }
  func.func @transform_0(%arg0: i32) -> (i32, i32, i32) {
    %c0_i32 = arith.constant 0 : i32
    %c0_i32_0 = arith.constant 0 : i32
    %c0_i32_1 = arith.constant 0 : i32
    return %arg0, %c0_i32, %c0_i32_0 : i32, i32, i32
  }
  func.func @transform_1(%arg0: i32) -> (i32, i32) {
    %c0_i32 = arith.constant 0 : i32
    %c0_i32_0 = arith.constant 0 : i32
    %c0_i32_1 = arith.constant 0 : i32
    return %c0_i32, %c0_i32_0 : i32, i32
  }
  func.func @transform_2(%arg0: i32) -> (i32, i32) {
    %c0_i32 = arith.constant 0 : i32
    %c0_i32_0 = arith.constant 0 : i32
    %c0_i32_1 = arith.constant 0 : i32
    return %c0_i32, %c0_i32_0 : i32, i32
  }
  func.func @transform_3(%arg0: i32) -> (i32, i32) {
    %c0_i32 = arith.constant 0 : i32
    %c0_i32_0 = arith.constant 0 : i32
    %c0_i32_1 = arith.constant 0 : i32
    return %c0_i32, %c0_i32_0 : i32, i32
  }
  func.func @transform_4(%arg0: i32) -> (i32, i32) {
    %c0_i32 = arith.constant 0 : i32
    %c0_i32_0 = arith.constant 0 : i32
    %c0_i32_1 = arith.constant 0 : i32
    return %c0_i32, %c0_i32_0 : i32, i32
  }
  func.func @transform_5(%arg0: i32) -> (i32, i32) {
    %c0_i32 = arith.constant 0 : i32
    %c0_i32_0 = arith.constant 0 : i32
    %c0_i32_1 = arith.constant 0 : i32
    return %c0_i32, %c0_i32_0 : i32, i32
  }
  func.func @transform_6(%arg0: i32) -> (i32, i32) {
    %c0_i32 = arith.constant 0 : i32
    %c0_i32_0 = arith.constant 0 : i32
    %c0_i32_1 = arith.constant 0 : i32
    return %c0_i32, %c0_i32_0 : i32, i32
  }
  func.func @transform_7(%arg0: i32) -> (i32, i32, i32) {
    %c0_i32 = arith.constant 0 : i32
    %c0_i32_0 = arith.constant 0 : i32
    %c0_i32_1 = arith.constant 0 : i32
    return %arg0, %c0_i32, %c0_i32_0 : i32, i32, i32
  }
}

module attributes {stable_mosaic.version = 11 : i64} {
  func.func @mlp_block_kernel(%arg0: i32, %arg1: memref<1x64x32xf32, #tpu.memory_space<vmem>>, %arg2: memref<1x32xf32, #tpu.memory_space<vmem>>, %arg3: memref<1x32xf32, #tpu.memory_space<vmem>>, %arg4: memref<32x128xf32, #tpu.memory_space<vmem>>, %arg5: memref<1x128xf32, #tpu.memory_space<vmem>>, %arg6: memref<9x128xf32, #tpu.memory_space<vmem>>, %arg7: memref<1x128xf32, #tpu.memory_space<vmem>>, %arg8: memref<128x32xf32, #tpu.memory_space<vmem>>, %arg9: memref<1x32xf32, #tpu.memory_space<vmem>>, %arg10: memref<1x64x32xf32, #tpu.memory_space<vmem>>, %arg11: memref<10x10x128xf32, #tpu.memory_space<vmem>>) attributes {dimension_semantics = [#tpu.dimension_semantics<parallel>], iteration_bounds = array<i64: 2>, scalar_prefetch = 0 : i64, scratch_operands = 1 : i64, tpu.core_type = #tpu.core_type<tc>, window_params = [{transform_indices = @transform_0, window_bounds = array<i64: 1, 64, 32>}, {pipeline_mode = #tpu.pipeline_mode<synchronous>, transform_indices = @transform_1, window_bounds = array<i64: 1, 32>}, {pipeline_mode = #tpu.pipeline_mode<synchronous>, transform_indices = @transform_2, window_bounds = array<i64: 1, 32>}, {pipeline_mode = #tpu.pipeline_mode<synchronous>, transform_indices = @transform_3, window_bounds = array<i64: 32, 128>}, {pipeline_mode = #tpu.pipeline_mode<synchronous>, transform_indices = @transform_4, window_bounds = array<i64: 1, 128>}, {pipeline_mode = #tpu.pipeline_mode<synchronous>, transform_indices = @transform_5, window_bounds = array<i64: 9, 128>}, {pipeline_mode = #tpu.pipeline_mode<synchronous>, transform_indices = @transform_6, window_bounds = array<i64: 1, 128>}, {pipeline_mode = #tpu.pipeline_mode<synchronous>, transform_indices = @transform_7, window_bounds = array<i64: 128, 32>}, {pipeline_mode = #tpu.pipeline_mode<synchronous>, transform_indices = @transform_8, window_bounds = array<i64: 1, 32>}, {transform_indices = @transform_9, window_bounds = array<i64: 1, 64, 32>}]} {
    %c0 = arith.constant 0 : index
    %c0_0 = arith.constant 0 : index
    %c0_1 = arith.constant 0 : index
    %0 = vector.load %arg1[%c0, %c0_0, %c0_1] : memref<1x64x32xf32, #tpu.memory_space<vmem>>, vector<1x64x32xf32>
    %1 = vector.shape_cast %0 : vector<1x64x32xf32> to vector<64x32xf32>
    %cst = arith.constant dense<0.000000e+00> : vector<64xf32>
    %2 = vector.multi_reduction <add>, %1, %cst [1] : vector<64x32xf32> to vector<64xf32>
    %3 = vector.shape_cast %2 : vector<64xf32> to vector<64x1xf32>
    %cst_2 = arith.constant 3.200000e+01 : f32
    %4 = vector.broadcast %cst_2 : f32 to vector<64x1xf32>
    %5 = arith.divf %3, %4 : vector<64x1xf32>
    %6 = vector.broadcast %5 : vector<64x1xf32> to vector<64x32xf32>
    %7 = arith.subf %1, %6 : vector<64x32xf32>
    %8 = arith.mulf %7, %7 : vector<64x32xf32>
    %cst_3 = arith.constant dense<0.000000e+00> : vector<64xf32>
    %9 = vector.multi_reduction <add>, %8, %cst_3 [1] : vector<64x32xf32> to vector<64xf32>
    %10 = vector.shape_cast %9 : vector<64xf32> to vector<64x1xf32>
    %cst_4 = arith.constant 3.200000e+01 : f32
    %11 = vector.broadcast %cst_4 : f32 to vector<64x1xf32>
    %12 = arith.divf %10, %11 : vector<64x1xf32>
    %13 = vector.broadcast %5 : vector<64x1xf32> to vector<64x32xf32>
    %14 = arith.subf %1, %13 : vector<64x32xf32>
    %cst_5 = arith.constant 9.99999974E-6 : f32
    %15 = vector.broadcast %cst_5 : f32 to vector<64x1xf32>
    %16 = arith.addf %12, %15 : vector<64x1xf32>
    %17 = math.rsqrt %16 : vector<64x1xf32>
    %18 = vector.broadcast %17 : vector<64x1xf32> to vector<64x32xf32>
    %19 = arith.mulf %14, %18 : vector<64x32xf32>
    %c0_6 = arith.constant 0 : index
    %c0_7 = arith.constant 0 : index
    %20 = vector.load %arg2[%c0_6, %c0_7] : memref<1x32xf32, #tpu.memory_space<vmem>>, vector<1x32xf32>
    %21 = vector.shape_cast %20 : vector<1x32xf32> to vector<32xf32>
    %22 = vector.shape_cast %21 : vector<32xf32> to vector<1x32xf32>
    %23 = vector.broadcast %22 : vector<1x32xf32> to vector<64x32xf32>
    %24 = arith.mulf %19, %23 : vector<64x32xf32>
    %c0_8 = arith.constant 0 : index
    %c0_9 = arith.constant 0 : index
    %25 = vector.load %arg3[%c0_8, %c0_9] : memref<1x32xf32, #tpu.memory_space<vmem>>, vector<1x32xf32>
    %26 = vector.shape_cast %25 : vector<1x32xf32> to vector<32xf32>
    %27 = vector.shape_cast %26 : vector<32xf32> to vector<1x32xf32>
    %28 = vector.broadcast %27 : vector<1x32xf32> to vector<64x32xf32>
    %29 = arith.addf %24, %28 : vector<64x32xf32>
    %c0_10 = arith.constant 0 : index
    %c0_11 = arith.constant 0 : index
    %30 = vector.load %arg4[%c0_10, %c0_11] : memref<32x128xf32, #tpu.memory_space<vmem>>, vector<32x128xf32>
    %cst_12 = arith.constant dense<0.000000e+00> : vector<64x128xf32>
    %31 = tpu.matmul %29, %30, %cst_12 {dimension_numbers = #tpu.dot_dimension_numbers<[1], [0], [0], [1], [0, 0, 1, 1], [], []>} : vector<64x32xf32>, vector<32x128xf32>, vector<64x128xf32> -> vector<64x128xf32>
    %c0_13 = arith.constant 0 : index
    %c0_14 = arith.constant 0 : index
    %32 = vector.load %arg5[%c0_13, %c0_14] : memref<1x128xf32, #tpu.memory_space<vmem>>, vector<1x128xf32>
    %33 = vector.shape_cast %32 : vector<1x128xf32> to vector<128xf32>
    %34 = vector.shape_cast %33 : vector<128xf32> to vector<1x128xf32>
    %35 = vector.broadcast %34 : vector<1x128xf32> to vector<64x128xf32>
    %36 = arith.addf %31, %35 : vector<64x128xf32>
    %cst_15 = arith.constant 0.000000e+00 : f32
    %37 = vector.broadcast %cst_15 : f32 to vector<10x10x128xf32>
    %c0_16 = arith.constant 0 : index
    %c0_17 = arith.constant 0 : index
    %c0_18 = arith.constant 0 : index
    %38 = vector.load %arg11[%c0_16, %c0_17, %c0_18] : memref<10x10x128xf32, #tpu.memory_space<vmem>>, vector<10x10x128xf32>
    tpu.vector_store %arg11[%c0_16, %c0_17, %c0_18], %37 {strides = array<i32>} : memref<10x10x128xf32, #tpu.memory_space<vmem>>, vector<10x10x128xf32>,
    %39 = vector.shape_cast %36 : vector<64x128xf32> to vector<8x8x128xf32>
    %c1 = arith.constant 1 : index
    %c1_19 = arith.constant 1 : index
    %c0_20 = arith.constant 0 : index
    %40 = vector.load %arg11[%c1, %c1_19, %c0_20] : memref<10x10x128xf32, #tpu.memory_space<vmem>>, vector<8x8x128xf32>
    tpu.vector_store %arg11[%c1, %c1_19, %c0_20], %39 {strides = array<i32>} : memref<10x10x128xf32, #tpu.memory_space<vmem>>, vector<8x8x128xf32>,
    %c0_21 = arith.constant 0 : index
    %c0_22 = arith.constant 0 : index
    %c0_23 = arith.constant 0 : index
    %41 = vector.load %arg11[%c0_21, %c0_22, %c0_23] : memref<10x10x128xf32, #tpu.memory_space<vmem>>, vector<10x10x128xf32>
    %cst_24 = arith.constant 0.000000e+00 : f32
    %42 = vector.broadcast %cst_24 : f32 to vector<8x8x128xf32>
    %c0_25 = arith.constant 0 : index
    %c0_26 = arith.constant 0 : index
    %43 = vector.load %arg6[%c0_25, %c0_26] : memref<9x128xf32, #tpu.memory_space<vmem>>, vector<1x128xf32>
    %44 = vector.shape_cast %43 : vector<1x128xf32> to vector<128xf32>
    %45 = vector.extract_strided_slice %41 {offsets = [0, 0, 0], sizes = [8, 8, 128], strides = [1, 1, 1]} : vector<10x10x128xf32> to vector<8x8x128xf32>
    %46 = vector.shape_cast %44 : vector<128xf32> to vector<1x1x128xf32>
    %47 = vector.broadcast %46 : vector<1x1x128xf32> to vector<8x8x128xf32>
    %48 = arith.mulf %45, %47 : vector<8x8x128xf32>
    %49 = arith.addf %42, %48 : vector<8x8x128xf32>
    %c1_27 = arith.constant 1 : index
    %c0_28 = arith.constant 0 : index
    %50 = vector.load %arg6[%c1_27, %c0_28] : memref<9x128xf32, #tpu.memory_space<vmem>>, vector<1x128xf32>
    %51 = vector.shape_cast %50 : vector<1x128xf32> to vector<128xf32>
    %52 = vector.extract_strided_slice %41 {offsets = [0, 1, 0], sizes = [8, 8, 128], strides = [1, 1, 1]} : vector<10x10x128xf32> to vector<8x8x128xf32>
    %53 = vector.shape_cast %51 : vector<128xf32> to vector<1x1x128xf32>
    %54 = vector.broadcast %53 : vector<1x1x128xf32> to vector<8x8x128xf32>
    %55 = arith.mulf %52, %54 : vector<8x8x128xf32>
    %56 = arith.addf %49, %55 : vector<8x8x128xf32>
    %c2 = arith.constant 2 : index
    %c0_29 = arith.constant 0 : index
    %57 = vector.load %arg6[%c2, %c0_29] : memref<9x128xf32, #tpu.memory_space<vmem>>, vector<1x128xf32>
    %58 = vector.shape_cast %57 : vector<1x128xf32> to vector<128xf32>
    %59 = vector.extract_strided_slice %41 {offsets = [0, 2, 0], sizes = [8, 8, 128], strides = [1, 1, 1]} : vector<10x10x128xf32> to vector<8x8x128xf32>
    %60 = vector.shape_cast %58 : vector<128xf32> to vector<1x1x128xf32>
    %61 = vector.broadcast %60 : vector<1x1x128xf32> to vector<8x8x128xf32>
    %62 = arith.mulf %59, %61 : vector<8x8x128xf32>
    %63 = arith.addf %56, %62 : vector<8x8x128xf32>
    %c3 = arith.constant 3 : index
    %c0_30 = arith.constant 0 : index
    %64 = vector.load %arg6[%c3, %c0_30] : memref<9x128xf32, #tpu.memory_space<vmem>>, vector<1x128xf32>
    %65 = vector.shape_cast %64 : vector<1x128xf32> to vector<128xf32>
    %66 = vector.extract_strided_slice %41 {offsets = [1, 0, 0], sizes = [8, 8, 128], strides = [1, 1, 1]} : vector<10x10x128xf32> to vector<8x8x128xf32>
    %67 = vector.shape_cast %65 : vector<128xf32> to vector<1x1x128xf32>
    %68 = vector.broadcast %67 : vector<1x1x128xf32> to vector<8x8x128xf32>
    %69 = arith.mulf %66, %68 : vector<8x8x128xf32>
    %70 = arith.addf %63, %69 : vector<8x8x128xf32>
    %c4 = arith.constant 4 : index
    %c0_31 = arith.constant 0 : index
    %71 = vector.load %arg6[%c4, %c0_31] : memref<9x128xf32, #tpu.memory_space<vmem>>, vector<1x128xf32>
    %72 = vector.shape_cast %71 : vector<1x128xf32> to vector<128xf32>
    %73 = vector.extract_strided_slice %41 {offsets = [1, 1, 0], sizes = [8, 8, 128], strides = [1, 1, 1]} : vector<10x10x128xf32> to vector<8x8x128xf32>
    %74 = vector.shape_cast %72 : vector<128xf32> to vector<1x1x128xf32>
    %75 = vector.broadcast %74 : vector<1x1x128xf32> to vector<8x8x128xf32>
    %76 = arith.mulf %73, %75 : vector<8x8x128xf32>
    %77 = arith.addf %70, %76 : vector<8x8x128xf32>
    %c5 = arith.constant 5 : index
    %c0_32 = arith.constant 0 : index
    %78 = vector.load %arg6[%c5, %c0_32] : memref<9x128xf32, #tpu.memory_space<vmem>>, vector<1x128xf32>
    %79 = vector.shape_cast %78 : vector<1x128xf32> to vector<128xf32>
    %80 = vector.extract_strided_slice %41 {offsets = [1, 2, 0], sizes = [8, 8, 128], strides = [1, 1, 1]} : vector<10x10x128xf32> to vector<8x8x128xf32>
    %81 = vector.shape_cast %79 : vector<128xf32> to vector<1x1x128xf32>
    %82 = vector.broadcast %81 : vector<1x1x128xf32> to vector<8x8x128xf32>
    %83 = arith.mulf %80, %82 : vector<8x8x128xf32>
    %84 = arith.addf %77, %83 : vector<8x8x128xf32>
    %c6 = arith.constant 6 : index
    %c0_33 = arith.constant 0 : index
    %85 = vector.load %arg6[%c6, %c0_33] : memref<9x128xf32, #tpu.memory_space<vmem>>, vector<1x128xf32>
    %86 = vector.shape_cast %85 : vector<1x128xf32> to vector<128xf32>
    %87 = vector.extract_strided_slice %41 {offsets = [2, 0, 0], sizes = [8, 8, 128], strides = [1, 1, 1]} : vector<10x10x128xf32> to vector<8x8x128xf32>
    %88 = vector.shape_cast %86 : vector<128xf32> to vector<1x1x128xf32>
    %89 = vector.broadcast %88 : vector<1x1x128xf32> to vector<8x8x128xf32>
    %90 = arith.mulf %87, %89 : vector<8x8x128xf32>
    %91 = arith.addf %84, %90 : vector<8x8x128xf32>
    %c7 = arith.constant 7 : index
    %c0_34 = arith.constant 0 : index
    %92 = vector.load %arg6[%c7, %c0_34] : memref<9x128xf32, #tpu.memory_space<vmem>>, vector<1x128xf32>
    %93 = vector.shape_cast %92 : vector<1x128xf32> to vector<128xf32>
    %94 = vector.extract_strided_slice %41 {offsets = [2, 1, 0], sizes = [8, 8, 128], strides = [1, 1, 1]} : vector<10x10x128xf32> to vector<8x8x128xf32>
    %95 = vector.shape_cast %93 : vector<128xf32> to vector<1x1x128xf32>
    %96 = vector.broadcast %95 : vector<1x1x128xf32> to vector<8x8x128xf32>
    %97 = arith.mulf %94, %96 : vector<8x8x128xf32>
    %98 = arith.addf %91, %97 : vector<8x8x128xf32>
    %c8 = arith.constant 8 : index
    %c0_35 = arith.constant 0 : index
    %99 = vector.load %arg6[%c8, %c0_35] : memref<9x128xf32, #tpu.memory_space<vmem>>, vector<1x128xf32>
    %100 = vector.shape_cast %99 : vector<1x128xf32> to vector<128xf32>
    %101 = vector.extract_strided_slice %41 {offsets = [2, 2, 0], sizes = [8, 8, 128], strides = [1, 1, 1]} : vector<10x10x128xf32> to vector<8x8x128xf32>
    %102 = vector.shape_cast %100 : vector<128xf32> to vector<1x1x128xf32>
    %103 = vector.broadcast %102 : vector<1x1x128xf32> to vector<8x8x128xf32>
    %104 = arith.mulf %101, %103 : vector<8x8x128xf32>
    %105 = arith.addf %98, %104 : vector<8x8x128xf32>
    %c0_36 = arith.constant 0 : index
    %c0_37 = arith.constant 0 : index
    %106 = vector.load %arg7[%c0_36, %c0_37] : memref<1x128xf32, #tpu.memory_space<vmem>>, vector<1x128xf32>
    %107 = vector.shape_cast %106 : vector<1x128xf32> to vector<128xf32>
    %108 = vector.shape_cast %107 : vector<128xf32> to vector<1x1x128xf32>
    %109 = vector.broadcast %108 : vector<1x1x128xf32> to vector<8x8x128xf32>
    %110 = arith.addf %105, %109 : vector<8x8x128xf32>
    %cst_38 = arith.constant 5.000000e-01 : f32
    %111 = vector.broadcast %cst_38 : f32 to vector<8x8x128xf32>
    %112 = arith.mulf %111, %110 : vector<8x8x128xf32>
    %cst_39 = arith.constant 0.707106769 : f32
    %113 = vector.broadcast %cst_39 : f32 to vector<8x8x128xf32>
    %114 = arith.mulf %110, %113 : vector<8x8x128xf32>
    %115 = math.erf %114 : vector<8x8x128xf32>
    %cst_40 = arith.constant 1.000000e+00 : f32
    %116 = vector.broadcast %cst_40 : f32 to vector<8x8x128xf32>
    %117 = arith.addf %116, %115 : vector<8x8x128xf32>
    %118 = arith.mulf %112, %117 : vector<8x8x128xf32>
    %119 = vector.shape_cast %118 : vector<8x8x128xf32> to vector<64x128xf32>
    %c0_41 = arith.constant 0 : index
    %c0_42 = arith.constant 0 : index
    %120 = vector.load %arg8[%c0_41, %c0_42] : memref<128x32xf32, #tpu.memory_space<vmem>>, vector<128x32xf32>
    %cst_43 = arith.constant dense<0.000000e+00> : vector<64x32xf32>
    %121 = tpu.matmul %119, %120, %cst_43 {dimension_numbers = #tpu.dot_dimension_numbers<[1], [0], [0], [1], [0, 0, 1, 1], [], []>} : vector<64x128xf32>, vector<128x32xf32>, vector<64x32xf32> -> vector<64x32xf32>
    %122 = arith.addf %1, %121 : vector<64x32xf32>
    %c0_44 = arith.constant 0 : index
    %c0_45 = arith.constant 0 : index
    %123 = vector.load %arg9[%c0_44, %c0_45] : memref<1x32xf32, #tpu.memory_space<vmem>>, vector<1x32xf32>
    %124 = vector.shape_cast %123 : vector<1x32xf32> to vector<32xf32>
    %125 = vector.shape_cast %124 : vector<32xf32> to vector<1x32xf32>
    %126 = vector.broadcast %125 : vector<1x32xf32> to vector<64x32xf32>
    %127 = arith.addf %122, %126 : vector<64x32xf32>
    %c0_46 = arith.constant 0 : index
    %c0_47 = arith.constant 0 : index
    %c0_48 = arith.constant 0 : index
    %128 = vector.load %arg10[%c0_46, %c0_47, %c0_48] : memref<1x64x32xf32, #tpu.memory_space<vmem>>, vector<1x64x32xf32>
    %129 = vector.shape_cast %128 : vector<1x64x32xf32> to vector<64x32xf32>
    %130 = vector.shape_cast %127 : vector<64x32xf32> to vector<1x64x32xf32>
    tpu.vector_store %arg10[%c0_46, %c0_47, %c0_48], %130 {strides = array<i32>} : memref<1x64x32xf32, #tpu.memory_space<vmem>>, vector<1x64x32xf32>,
    return
  }
  func.func @transform_0(%arg0: i32) -> (i32, i32, i32) {
    %c0_i32 = arith.constant 0 : i32
    %c0_i32_0 = arith.constant 0 : i32
    %c0_i32_1 = arith.constant 0 : i32
    return %arg0, %c0_i32, %c0_i32_0 : i32, i32, i32
  }
  func.func @transform_1(%arg0: i32) -> (i32, i32) {
    %c0_i32 = arith.constant 0 : i32
    %c0_i32_0 = arith.constant 0 : i32
    %c0_i32_1 = arith.constant 0 : i32
    return %c0_i32, %c0_i32_0 : i32, i32
  }
  func.func @transform_2(%arg0: i32) -> (i32, i32) {
    %c0_i32 = arith.constant 0 : i32
    %c0_i32_0 = arith.constant 0 : i32
    %c0_i32_1 = arith.constant 0 : i32
    return %c0_i32, %c0_i32_0 : i32, i32
  }
  func.func @transform_3(%arg0: i32) -> (i32, i32) {
    %c0_i32 = arith.constant 0 : i32
    %c0_i32_0 = arith.constant 0 : i32
    %c0_i32_1 = arith.constant 0 : i32
    return %c0_i32, %c0_i32_0 : i32, i32
  }
  func.func @transform_4(%arg0: i32) -> (i32, i32) {
    %c0_i32 = arith.constant 0 : i32
    %c0_i32_0 = arith.constant 0 : i32
    %c0_i32_1 = arith.constant 0 : i32
    return %c0_i32, %c0_i32_0 : i32, i32
  }
  func.func @transform_5(%arg0: i32) -> (i32, i32) {
    %c0_i32 = arith.constant 0 : i32
    %c0_i32_0 = arith.constant 0 : i32
    %c0_i32_1 = arith.constant 0 : i32
    return %c0_i32, %c0_i32_0 : i32, i32
  }
  func.func @transform_6(%arg0: i32) -> (i32, i32) {
    %c0_i32 = arith.constant 0 : i32
    %c0_i32_0 = arith.constant 0 : i32
    %c0_i32_1 = arith.constant 0 : i32
    return %c0_i32, %c0_i32_0 : i32, i32
  }
  func.func @transform_7(%arg0: i32) -> (i32, i32) {
    %c0_i32 = arith.constant 0 : i32
    %c0_i32_0 = arith.constant 0 : i32
    %c0_i32_1 = arith.constant 0 : i32
    return %c0_i32, %c0_i32_0 : i32, i32
  }
  func.func @transform_8(%arg0: i32) -> (i32, i32) {
    %c0_i32 = arith.constant 0 : i32
    %c0_i32_0 = arith.constant 0 : i32
    %c0_i32_1 = arith.constant 0 : i32
    return %c0_i32, %c0_i32_0 : i32, i32
  }
  func.func @transform_9(%arg0: i32) -> (i32, i32, i32) {
    %c0_i32 = arith.constant 0 : i32
    %c0_i32_0 = arith.constant 0 : i32
    %c0_i32_1 = arith.constant 0 : i32
    return %arg0, %c0_i32, %c0_i32_0 : i32, i32, i32
  }
}

</mosaic_0001>

<llo_original>
// kernel: block_forward.3
$region0: #{block_forward.3}
  #allocation0 [shape = 'u32[]', space=smem, size = 0x4, offset = 0x4, fixed_abs, tag = 'smem constant byte address 0x4 - core index']
  #allocation1 [shape = 'u32[144,128]{1,0:T(1,128)}', space=vmem, size = 0x12000, scoped, tag = 'internal scratch']
  #allocation2 [shape = 'f32[10,10,128]{2,1,0:T(8,128)}', space=vmem, size = 0x14000, scoped, tag = 'scratch operand']
  %s0 = inlined_call_operand.vmem [shape: f32[2,64,32], index: 0, kind: input, shape index: {}]
  %s1 = inlined_call_operand.vmem [shape: f32[1,32], index: 1, kind: input, shape index: {}]
  %s2 = inlined_call_operand.vmem [shape: f32[1,32], index: 2, kind: input, shape index: {}]
  %s3 = inlined_call_operand.vmem [shape: f32[32,128], index: 3, kind: input, shape index: {}]
  %s4 = inlined_call_operand.vmem [shape: f32[1,128], index: 4, kind: input, shape index: {}]
  %s5 = inlined_call_operand.vmem [shape: f32[9,128], index: 5, kind: input, shape index: {}]
  %s6 = inlined_call_operand.vmem [shape: f32[1,128], index: 6, kind: input, shape index: {}]
  %s7 = inlined_call_operand.vmem [shape: f32[128,32], index: 7, kind: input, shape index: {}]
  %s8 = inlined_call_operand.vmem [shape: f32[1,32], index: 8, kind: input, shape index: {}]
  %s9 = inlined_call_operand.vmem [shape: f32[2,64,32], index: 9, kind: output, shape index: {}]
  %s10 = sld [smem:[#allocation0]]
  $region69: #{block_forward.3} parent=0
    _
  %s12 = ssub.s32 1, %s10
  %s13 = scalar_select 0, %s12, %s10
  loop: start=0, step=1, limit=4
  $region2: #{block_forward.3} parent=0 // loop_pre_header
    _
  $region3: #{block_forward.3} parent=0 // loop_header
    %s15 = sphi 0, %s19
    %p16 = scmp.ge.s32.totalorder %s15, 4
    %s25 = sphi 0, %s27
    %s28 = sphi 0, %s25
    %s29 = sphi 0, %s28
    %s45 = sphi 0, %s29
    %s49 = sphi 0, %s49
    %s51 = sphi 0, %s49
    %s52 = sphi 0, %s51
    %s66 = sphi 0, %s52
    %s70 = sphi 0, %s70
    %s72 = sphi 0, %s70
    %s73 = sphi 0, %s72
    %s87 = sphi 0, %s73
    %s91 = sphi 0, %s91
    %s93 = sphi 0, %s91
    %s94 = sphi 0, %s93
    %s108 = sphi 0, %s94
    %s112 = sphi 0, %s112
    %s114 = sphi 0, %s112
    %s115 = sphi 0, %s114
    %s129 = sphi 0, %s115
    %s133 = sphi 0, %s133
    %s135 = sphi 0, %s133
    %s136 = sphi 0, %s135
    %s150 = sphi 0, %s136
    %s154 = sphi 0, %s154
    %s156 = sphi 0, %s154
    %s157 = sphi 0, %s156
    %s171 = sphi 0, %s157
    %s175 = sphi 0, %s175
    %s177 = sphi 0, %s175
    %s178 = sphi 0, %s177
    %s192 = sphi 0, %s178
    %s196 = sphi 0, %s196
    %s198 = sphi 0, %s196
    %s199 = sphi 0, %s198
    %s213 = sphi 0, %s199
    %s219 = sphi 0, %s221
    %s222 = sphi 0, %s219
    %s223 = sphi 0, %s222
    %s239 = sphi 0, %s223
  $region4: #{block_forward.3} parent=0 // loop_header_branch
    %18 = sbr.rel (%p16) target = $region8
  $region5: #{block_forward.3} parent=0 // loop_body
    %s20 = ssub.s32 %s15, 1
    %s21 = ssub.s32 %s15, 2
    %s22 = sadd.s32 %s15, 1
    %s23 = ssub.s32 %s15, %s22
    %p24 = scmp.eq.s32.totalorder %s23, 0
    %s26 = sadd.s32 %s25, 1
    %s27 = scalar_select %p24, %s25, %s26
    %p30 = pneg %p24
    %p31 = scmp.eq.s32.totalorder %s15, 1
    %p32 = por %p30, %p31
    %p33 = scmp.ne.s32.totalorder %s25, %s28
    %p34 = scmp.eq.s32.totalorder %s15, 0
    %p35 = por %p33, %p34
    %p36 = scmp.ne.s32.totalorder %s25, %s28
    %p37 = scmp.eq.s32.totalorder %s20, 1
    %p38 = por %p36, %p37
    %p39 = scmp.ne.s32.totalorder %s28, %s29
    %p40 = scmp.eq.s32.totalorder %s20, 0
    %p41 = por %p39, %p40
    %p42 = scmp.ne.s32.totalorder %s28, %s29
    %p43 = scmp.eq.s32.totalorder %s21, 1
    %p44 = por %p42, %p43
    %p46 = scmp.ne.s32.totalorder %s29, %s45
    %p47 = scmp.eq.s32.totalorder %s21, 0
    %p48 = por %p46, %p47
    %s50 = sadd.s32 %s49, 1
    %p53 = scmp.eq.s32.totalorder %s15, 1
    %p54 = scmp.ne.s32.totalorder %s49, %s51
    %p55 = scmp.eq.s32.totalorder %s15, 0
    %p56 = por %p54, %p55
    %p57 = scmp.ne.s32.totalorder %s49, %s51
    %p58 = scmp.eq.s32.totalorder %s20, 1
    %p59 = por %p57, %p58
    %p60 = scmp.ne.s32.totalorder %s51, %s52
    %p61 = scmp.eq.s32.totalorder %s20, 0
    %p62 = por %p60, %p61
    %p63 = scmp.ne.s32.totalorder %s51, %s52
    %p64 = scmp.eq.s32.totalorder %s21, 1
    %p65 = por %p63, %p64
    %p67 = scmp.ne.s32.totalorder %s52, %s66
    %p68 = scmp.eq.s32.totalorder %s21, 0
    %p69 = por %p67, %p68
    %s71 = sadd.s32 %s70, 1
    %p74 = scmp.eq.s32.totalorder %s15, 1
    %p75 = scmp.ne.s32.totalorder %s70, %s72
    %p76 = scmp.eq.s32.totalorder %s15, 0
    %p77 = por %p75, %p76
    %p78 = scmp.ne.s32.totalorder %s70, %s72
    %p79 = scmp.eq.s32.totalorder %s20, 1
    %p80 = por %p78, %p79
    %p81 = scmp.ne.s32.totalorder %s72, %s73
    %p82 = scmp.eq.s32.totalorder %s20, 0
    %p83 = por %p81, %p82
    %p84 = scmp.ne.s32.totalorder %s72, %s73
    %p85 = scmp.eq.s32.totalorder %s21, 1
    %p86 = por %p84, %p85
    %p88 = scmp.ne.s32.totalorder %s73, %s87
    %p89 = scmp.eq.s32.totalorder %s21, 0
    %p90 = por %p88, %p89
    %s92 = sadd.s32 %s91, 1
    %p95 = scmp.eq.s32.totalorder %s15, 1
    %p96 = scmp.ne.s32.totalorder %s91, %s93
    %p97 = scmp.eq.s32.totalorder %s15, 0
    %p98 = por %p96, %p97
    %p99 = scmp.ne.s32.totalorder %s91, %s93
    %p100 = scmp.eq.s32.totalorder %s20, 1
    %p101 = por %p99, %p100
    %p102 = scmp.ne.s32.totalorder %s93, %s94
    %p103 = scmp.eq.s32.totalorder %s20, 0
    %p104 = por %p102, %p103
    %p105 = scmp.ne.s32.totalorder %s93, %s94
    %p106 = scmp.eq.s32.totalorder %s21, 1
    %p107 = por %p105, %p106
    %p109 = scmp.ne.s32.totalorder %s94, %s108
    %p110 = scmp.eq.s32.totalorder %s21, 0
    %p111 = por %p109, %p110
    %s113 = sadd.s32 %s112, 1
    %p116 = scmp.eq.s32.totalorder %s15, 1
    %p117 = scmp.ne.s32.totalorder %s112, %s114
    %p118 = scmp.eq.s32.totalorder %s15, 0
    %p119 = por %p117, %p118
    %p120 = scmp.ne.s32.totalorder %s112, %s114
    %p121 = scmp.eq.s32.totalorder %s20, 1
    %p122 = por %p120, %p121
    %p123 = scmp.ne.s32.totalorder %s114, %s115
    %p124 = scmp.eq.s32.totalorder %s20, 0
    %p125 = por %p123, %p124
    %p126 = scmp.ne.s32.totalorder %s114, %s115
    %p127 = scmp.eq.s32.totalorder %s21, 1
    %p128 = por %p126, %p127
    %p130 = scmp.ne.s32.totalorder %s115, %s129
    %p131 = scmp.eq.s32.totalorder %s21, 0
    %p132 = por %p130, %p131
    %s134 = sadd.s32 %s133, 1
    %p137 = scmp.eq.s32.totalorder %s15, 1
    %p138 = scmp.ne.s32.totalorder %s133, %s135
    %p139 = scmp.eq.s32.totalorder %s15, 0
    %p140 = por %p138, %p139
    %p141 = scmp.ne.s32.totalorder %s133, %s135
    %p142 = scmp.eq.s32.totalorder %s20, 1
    %p143 = por %p141, %p142
    %p144 = scmp.ne.s32.totalorder %s135, %s136
    %p145 = scmp.eq.s32.totalorder %s20, 0
    %p146 = por %p144, %p145
    %p147 = scmp.ne.s32.totalorder %s135, %s136
    %p148 = scmp.eq.s32.totalorder %s21, 1
    %p149 = por %p147, %p148
    %p151 = scmp.ne.s32.totalorder %s136, %s150
    %p152 = scmp.eq.s32.totalorder %s21, 0
    %p153 = por %p151, %p152
    %s155 = sadd.s32 %s154, 1
    %p158 = scmp.eq.s32.totalorder %s15, 1
    %p159 = scmp.ne.s32.totalorder %s154, %s156
    %p160 = scmp.eq.s32.totalorder %s15, 0
    %p161 = por %p159, %p160
    %p162 = scmp.ne.s32.totalorder %s154, %s156
    %p163 = scmp.eq.s32.totalorder %s20, 1
    %p164 = por %p162, %p163
    %p165 = scmp.ne.s32.totalorder %s156, %s157
    %p166 = scmp.eq.s32.totalorder %s20, 0
    %p167 = por %p165, %p166
    %p168 = scmp.ne.s32.totalorder %s156, %s157
    %p169 = scmp.eq.s32.totalorder %s21, 1
    %p170 = por %p168, %p169
    %p172 = scmp.ne.s32.totalorder %s157, %s171
    %p173 = scmp.eq.s32.totalorder %s21, 0
    %p174 = por %p172, %p173
    %s176 = sadd.s32 %s175, 1
    %p179 = scmp.eq.s32.totalorder %s15, 1
    %p180 = scmp.ne.s32.totalorder %s175, %s177
    %p181 = scmp.eq.s32.totalorder %s15, 0
    %p182 = por %p180, %p181
    %p183 = scmp.ne.s32.totalorder %s175, %s177
    %p184 = scmp.eq.s32.totalorder %s20, 1
    %p185 = por %p183, %p184
    %p186 = scmp.ne.s32.totalorder %s177, %s178
    %p187 = scmp.eq.s32.totalorder %s20, 0
    %p188 = por %p186, %p187
    %p189 = scmp.ne.s32.totalorder %s177, %s178
    %p190 = scmp.eq.s32.totalorder %s21, 1
    %p191 = por %p189, %p190
    %p193 = scmp.ne.s32.totalorder %s178, %s192
    %p194 = scmp.eq.s32.totalorder %s21, 0
    %p195 = por %p193, %p194
    %s197 = sadd.s32 %s196, 1
    %p200 = scmp.eq.s32.totalorder %s15, 1
    %p201 = scmp.ne.s32.totalorder %s196, %s198
    %p202 = scmp.eq.s32.totalorder %s15, 0
    %p203 = por %p201, %p202
    %p204 = scmp.ne.s32.totalorder %s196, %s198
    %p205 = scmp.eq.s32.totalorder %s20, 1
    %p206 = por %p204, %p205
    %p207 = scmp.ne.s32.totalorder %s198, %s199
    %p208 = scmp.eq.s32.totalorder %s20, 0
    %p209 = por %p207, %p208
    %p210 = scmp.ne.s32.totalorder %s198, %s199
    %p211 = scmp.eq.s32.totalorder %s21, 1
    %p212 = por %p210, %p211
    %p214 = scmp.ne.s32.totalorder %s199, %s213
    %p215 = scmp.eq.s32.totalorder %s21, 0
    %p216 = por %p214, %p215
    %s217 = ssub.s32 %s15, %s22
    %p218 = scmp.eq.s32.totalorder %s217, 0
    %s220 = sadd.s32 %s219, 1
    %s221 = scalar_select %p218, %s219, %s220
    %p224 = pneg %p218
    %p225 = scmp.eq.s32.totalorder %s15, 1
    %p226 = por %p224, %p225
    %p227 = scmp.ne.s32.totalorder %s219, %s222
    %p228 = scmp.eq.s32.totalorder %s15, 0
    %p229 = por %p227, %p228
    %p230 = scmp.ne.s32.totalorder %s219, %s222
    %p231 = scmp.eq.s32.totalorder %s20, 1
    %p232 = por %p230, %p231
    %p233 = scmp.ne.s32.totalorder %s222, %s223
    %p234 = scmp.eq.s32.totalorder %s20, 0
    %p235 = por %p233, %p234
    %p236 = scmp.ne.s32.totalorder %s222, %s223
    %p237 = scmp.eq.s32.totalorder %s21, 1
    %p238 = por %p236, %p237
    %p240 = scmp.ne.s32.totalorder %s223, %s239
    %p241 = scmp.eq.s32.totalorder %s21, 0
    %p242 = por %p240, %p241
    %p243 = scmp.le.s32.totalorder 1, %s15
    %p244 = scmp.lt.s32.totalorder %s15, 3
    %p245 = pnand %p243, %p244
    %p246 = pneg %p245
    // Predicated region
    $region9: #{block_forward.3} parent=5 // pred_check
      _
    $region10: #{block_forward.3} parent=5 // pred_check_branch
      %248 = sbr.rel (%p245) target = $region12
    $region11: #{block_forward.3} parent=5 // pred_region
      %s249 = ssub.s32 %s15, 1
      // Predicated region
      $region13: #{block_forward.3} parent=11 // pred_check
        %p250 = pneg %p62
      $region14: #{block_forward.3} parent=11 // pred_check_branch
        %252 = sbr.rel (%p250) target = $region16
      $region15: #{block_forward.3} parent=11 // pred_region
        _
      $region16: #{block_forward.3} parent=11 // pred_fallthru
        _
      // Predicated region
      $region17: #{block_forward.3} parent=11 // pred_check
        %p253 = pneg %p83
      $region18: #{block_forward.3} parent=11 // pred_check_branch
        %255 = sbr.rel (%p253) target = $region20
      $region19: #{block_forward.3} parent=11 // pred_region
        _
      $region20: #{block_forward.3} parent=11 // pred_fallthru
        _
      // Predicated region
      $region21: #{block_forward.3} parent=11 // pred_check
        %p256 = pneg %p104
      $region22: #{block_forward.3} parent=11 // pred_check_branch
        %258 = sbr.rel (%p256) target = $region24
      $region23: #{block_forward.3} parent=11 // pred_region
        _
      $region24: #{block_forward.3} parent=11 // pred_fallthru
        _
      // Predicated region
      $region25: #{block_forward.3} parent=11 // pred_check
        %p259 = pneg %p125
      $region26: #{block_forward.3} parent=11 // pred_check_branch
        %261 = sbr.rel (%p259) target = $region28
      $region27: #{block_forward.3} parent=11 // pred_region
        _
      $region28: #{block_forward.3} parent=11 // pred_fallthru
        _
      // Predicated region
      $region29: #{block_forward.3} parent=11 // pred_check
        %p262 = pneg %p146
      $region30: #{block_forward.3} parent=11 // pred_check_branch
        %264 = sbr.rel (%p262) target = $region32
      $region31: #{block_forward.3} parent=11 // pred_region
        _
      $region32: #{block_forward.3} parent=11 // pred_fallthru
        _
      // Predicated region
      $region33: #{block_forward.3} parent=11 // pred_check
        %p265 = pneg %p167
      $region34: #{block_forward.3} parent=11 // pred_check_branch
        %267 = sbr.rel (%p265) target = $region36
      $region35: #{block_forward.3} parent=11 // pred_region
        _
      $region36: #{block_forward.3} parent=11 // pred_fallthru
        _
      // Predicated region
      $region37: #{block_forward.3} parent=11 // pred_check
        %p268 = pneg %p188
      $region38: #{block_forward.3} parent=11 // pred_check_branch
        %270 = sbr.rel (%p268) target = $region40
      $region39: #{block_forward.3} parent=11 // pred_region
        _
      $region40: #{block_forward.3} parent=11 // pred_fallthru
        _
      // Predicated region
      $region41: #{block_forward.3} parent=11 // pred_check
        %p271 = pneg %p209
      $region42: #{block_forward.3} parent=11 // pred_check_branch
        %273 = sbr.rel (%p271) target = $region44
      $region43: #{block_forward.3} parent=11 // pred_region
        _
      $region44: #{block_forward.3} parent=11 // pred_fallthru
        _
    $region12: #{block_forward.3} parent=5 // pred_fallthru
      _
    %p274 = scmp.lt.s32.totalorder %s15, 2
    // Predicated region
    $region45: #{block_forward.3} parent=5 // pred_check
      %p275 = pneg %p274
    $region46: #{block_forward.3} parent=5 // pred_check_branch
      %277 = sbr.rel (%p275) target = $region48
    $region47: #{block_forward.3} parent=5 // pred_region
      // Predicated region
      $region49: #{block_forward.3} parent=47 // pred_check
        %p278 = pneg %p35
      $region50: #{block_forward.3} parent=47 // pred_check_branch
        %280 = sbr.rel (%p278) target = $region52
      $region51: #{block_forward.3} parent=47 // pred_region
        %p281 = scmp.lt.s32.totalorder %s15, 1
        %s282 = scalar_select %p281, %s15, 1
        %s283 = smul.addr %s282, 8
        %s284 = smul.addr %s283, 8
        %s285 = scalar_lea.vmem %s0, %s284
      $region52: #{block_forward.3} parent=47 // pred_fallthru
        _
    $region48: #{block_forward.3} parent=5 // pred_fallthru
      _
    %p286 = scmp.le.s32.totalorder 1, %s15
    %p287 = scmp.lt.s32.totalorder %s15, 3
    %p288 = pnand %p286, %p287
    %p289 = pneg %p288
    // Predicated region
    $region53: #{block_forward.3} parent=5 // pred_check
      _
    $region54: #{block_forward.3} parent=5 // pred_check_branch
      %291 = sbr.rel (%p288) target = $region56
    $region55: #{block_forward.3} parent=5 // pred_region
      %s292 = ssub.s32 %s15, 1
      %p293 = scmp.lt.s32.totalorder %s20, 1
      %s294 = scalar_select %p293, %s20, 1
      %s295 = smul.addr %s294, 8
      %s296 = smul.addr %s295, 8
      %s297 = scalar_lea.vmem %s0, %s296
      %p298 = pneg %p41
      %p299 = pneg %p38
      %p300 = pneg %p62
      %p301 = pneg %p59
      %p302 = pneg %p83
      %p303 = pneg %p80
      %p304 = pneg %p104
      %p305 = pneg %p101
      %p306 = pneg %p125
      %p307 = pneg %p122
      %p308 = pneg %p146
      %p309 = pneg %p143
      %p310 = pneg %p167
      %p311 = pneg %p164
      %p312 = pneg %p188
      %p313 = pneg %p185
      %p314 = pneg %p209
      %p315 = pneg %p206
      %p316 = pneg %p235
      %p317 = pneg %p232
      %p318 = scmp.lt.s32.totalorder %s20, 1
      %s319 = scalar_select %p318, %s20, 1
      %s320 = smul.addr %s319, 8
      %s321 = smul.addr %s320, 8
      %s322 = scalar_lea.vmem %s9, %s321
      %p323 = scmp.lt.s32.totalorder %s20, 1
      %s324 = scalar_select %p323, %s20, 1
      %s325 = smul.addr %s324, 8
      %s326 = smul.addr %s325, 8
      %s327 = scalar_lea.vmem %s0, %s326
      %p328 = scmp.lt.s32.totalorder %s20, 1
      %s329 = scalar_select %p328, %s20, 1
      %s330 = smul.addr %s329, 8
      %s331 = smul.addr %s330, 8
      %s332 = scalar_lea.vmem %s9, %s331
      %v333 = vld [vmem:[%s327] sm:$0xff]
      %v334 = vld [vmem:[%s327 + $0x8] sm:$0xff]
      %v335 = vld [vmem:[%s327 + $0x10] sm:$0xff]
      %v336 = vld [vmem:[%s327 + $0x18] sm:$0xff]
      %v337 = vld [vmem:[%s327 + $0x20] sm:$0xff]
      %v338 = vld [vmem:[%s327 + $0x28] sm:$0xff]
      %v339 = vld [vmem:[%s327 + $0x30] sm:$0xff]
      %v340 = vld [vmem:[%s327 + $0x38] sm:$0xff]
      %vm341 = vcmask 261120
      %v342 = vsel %vm341, %v333, 0.0
      %343 = vadd.xlane.f32.xlu0 %v342
      %v344 = vpop.xlane.xlu0 %343
      %v345 = vsel %vm341, %v334, 0.0
      %346 = vadd.xlane.f32.xlu0 %v345
      %v347 = vpop.xlane.xlu0 %346
      %v348 = vsel %vm341, %v335, 0.0
      %349 = vadd.xlane.f32.xlu0 %v348
      %v350 = vpop.xlane.xlu0 %349
      %v351 = vsel %vm341, %v336, 0.0
      %352 = vadd.xlane.f32.xlu0 %v351
      %v353 = vpop.xlane.xlu0 %352
      %v354 = vsel %vm341, %v337, 0.0
      %355 = vadd.xlane.f32.xlu0 %v354
      %v356 = vpop.xlane.xlu0 %355
      %v357 = vsel %vm341, %v338, 0.0
      %358 = vadd.xlane.f32.xlu0 %v357
      %v359 = vpop.xlane.xlu0 %358
      %v360 = vsel %vm341, %v339, 0.0
      %361 = vadd.xlane.f32.xlu0 %v360
      %v362 = vpop.xlane.xlu0 %361
      %v363 = vsel %vm341, %v340, 0.0
      %364 = vadd.xlane.f32.xlu0 %v363
      %v365 = vpop.xlane.xlu0 %364
      %v366 = vrcp.pop 32.0
      %v367 = vmul.f32 %v344, %v366
      %v368 = vmul.f32 %v347, %v366
      %v369 = vmul.f32 %v350, %v366
      %v370 = vmul.f32 %v353, %v366
      %v371 = vmul.f32 %v356, %v366
      %v372 = vmul.f32 %v359, %v366
      %v373 = vmul.f32 %v362, %v366
      %v374 = vmul.f32 %v365, %v366
      %v375 = vsub.f32 %v333, %v367
      %v376 = vsub.f32 %v334, %v368
      %v377 = vsub.f32 %v335, %v369
      %v378 = vsub.f32 %v336, %v370
      %v379 = vsub.f32 %v337, %v371
      %v380 = vsub.f32 %v338, %v372
      %v381 = vsub.f32 %v339, %v373
      %v382 = vsub.f32 %v340, %v374
      %v383 = vmul.f32 %v375, %v375
      %v384 = vmul.f32 %v376, %v376
      %v385 = vmul.f32 %v377, %v377
      %v386 = vmul.f32 %v378, %v378
      %v387 = vmul.f32 %v379, %v379
      %v388 = vmul.f32 %v380, %v380
      %v389 = vmul.f32 %v381, %v381
      %v390 = vmul.f32 %v382, %v382
      %v391 = vsel %vm341, %v383, 0.0
      %392 = vadd.xlane.f32.xlu0 %v391
      %v393 = vpop.xlane.xlu0 %392
      %v394 = vsel %vm341, %v384, 0.0
      %395 = vadd.xlane.f32.xlu0 %v394
      %v396 = vpop.xlane.xlu0 %395
      %v397 = vsel %vm341, %v385, 0.0
      %398 = vadd.xlane.f32.xlu0 %v397
      %v399 = vpop.xlane.xlu0 %398
      %v400 = vsel %vm341, %v386, 0.0
      %401 = vadd.xlane.f32.xlu0 %v400
      %v402 = vpop.xlane.xlu0 %401
      %v403 = vsel %vm341, %v387, 0.0
      %404 = vadd.xlane.f32.xlu0 %v403
      %v405 = vpop.xlane.xlu0 %404
      %v406 = vsel %vm341, %v388, 0.0
      %407 = vadd.xlane.f32.xlu0 %v406
      %v408 = vpop.xlane.xlu0 %407
      %v409 = vsel %vm341, %v389, 0.0
      %410 = vadd.xlane.f32.xlu0 %v409
      %v411 = vpop.xlane.xlu0 %410
      %v412 = vsel %vm341, %v390, 0.0
      %413 = vadd.xlane.f32.xlu0 %v412
      %v414 = vpop.xlane.xlu0 %413
      %v415 = vmul.f32 %v393, %v366
      %v416 = vmul.f32 %v396, %v366
      %v417 = vmul.f32 %v399, %v366
      %v418 = vmul.f32 %v402, %v366
      %v419 = vmul.f32 %v405, %v366
      %v420 = vmul.f32 %v408, %v366
      %v421 = vmul.f32 %v411, %v366
      %v422 = vmul.f32 %v414, %v366
      %v423 = vadd.f32 %v415, 1e-05
      %v424 = vadd.f32 %v416, 1e-05
      %v425 = vadd.f32 %v417, 1e-05
      %v426 = vadd.f32 %v418, 1e-05
      %v427 = vadd.f32 %v419, 1e-05
      %v428 = vadd.f32 %v420, 1e-05
      %v429 = vadd.f32 %v421, 1e-05
      %v430 = vadd.f32 %v422, 1e-05
      %v431 = vrsqrt.pop %v423
      %v432 = vrsqrt.pop %v424
      %v433 = vrsqrt.pop %v425
      %v434 = vrsqrt.pop %v426
      %v435 = vrsqrt.pop %v427
      %v436 = vrsqrt.pop %v428
      %v437 = vrsqrt.pop %v429
      %v438 = vrsqrt.pop %v430
      %v439 = vmul.f32 %v375, %v431
      %v440 = vmul.f32 %v376, %v432
      %v441 = vmul.f32 %v377, %v433
      %v442 = vmul.f32 %v378, %v434
      %v443 = vmul.f32 %v379, %v435
      %v444 = vmul.f32 %v380, %v436
      %v445 = vmul.f32 %v381, %v437
      %v446 = vmul.f32 %v382, %v438
      %v447 = vld [vmem:[%s1] sm:$0x1]
      %v449 = vlaneseq
      %v450 = vshrl.u32 %v449, 7
      %v451 = vsub.s32 0, %v450
      %v452 = vrot.slane %v447, %v451
      %v454 = vmul.f32 %v439, %v452
      %v455 = vmul.f32 %v440, %v452
      %v456 = vmul.f32 %v441, %v452
      %v457 = vmul.f32 %v442, %v452
      %v458 = vmul.f32 %v443, %v452
      %v459 = vmul.f32 %v444, %v452
      %v460 = vmul.f32 %v445, %v452
      %v461 = vmul.f32 %v446, %v452
      %v462 = vld [vmem:[%s2] sm:$0x1]
      %v464 = vlaneseq
      %v465 = vshrl.u32 %v464, 7
      %v466 = vsub.s32 0, %v465
      %v467 = vrot.slane %v462, %v466
      %v469 = vadd.f32 %v454, %v467
      %v470 = vadd.f32 %v455, %v467
      %v471 = vadd.f32 %v456, %v467
      %v472 = vadd.f32 %v457, %v467
      %v473 = vadd.f32 %v458, %v467
      %v474 = vadd.f32 %v459, %v467
      %v475 = vadd.f32 %v460, %v467
      %v476 = vadd.f32 %v461, %v467
      %v477 = vld [vmem:[%s3] sm:$0xff]
      %v478 = vld [vmem:[%s3 + $0x8] sm:$0xff]
      %v479 = vld [vmem:[%s3 + $0x10] sm:$0xff]
      %v480 = vld [vmem:[%s3 + $0x18] sm:$0xff]
      %v481 = vld [vmem:[%s4] sm:$0x1]
      %v483 = vlaneseq
      %v484 = vshrl.u32 %v483, 7
      %v485 = vsub.s32 0, %v484
      %v486 = vrot.slane %v481, %v485
      %v489 = vsel %vm341, %v469, 0
      %v492 = vsel %vm341, %v470, 0
      %v495 = vsel %vm341, %v471, 0
      %v498 = vsel %vm341, %v472, 0
      %v501 = vsel %vm341, %v473, 0
      %v504 = vsel %vm341, %v474, 0
      %v507 = vsel %vm341, %v475, 0
      %v510 = vsel %vm341, %v476, 0
      %512 = vmatprep.subr.mxu0 0.0
      %513 = vmatpush1.msra.mxu0 %v477
      %514 = vmatprep.subr.mxu0 0.0
      %515 = vmatpush1.msra.mxu0 %v478
      %516 = vmatprep.subr.mxu0 0.0
      %517 = vmatpush1.msra.mxu0 %v479
      %518 = vmatprep.subr.mxu0 0.0
      %519 = vmatpush1.msra.mxu0 %v480
      %520 = vmatprep.subr.mxu0 0.0
      %521 = vmatpush1.msra.mxu0 0.0
      %522 = vmatprep.subr.mxu0 0.0
      %523 = vmatpush1.msra.mxu0 0.0
      %524 = vmatprep.subr.mxu0 0.0
      %525 = vmatpush1.msra.mxu0 0.0
      %526 = vmatprep.subr.mxu0 0.0
      %527 = vmatpush1.msra.mxu0 0.0
      %528 = vmatprep.subr.mxu0 0.0
      %529 = vmatpush1.msra.mxu0 0.0
      %530 = vmatprep.subr.mxu0 0.0
      %531 = vmatpush1.msra.mxu0 0.0
      %532 = vmatprep.subr.mxu0 0.0
      %533 = vmatpush1.msra.mxu0 0.0
      %534 = vmatprep.subr.mxu0 0.0
      %535 = vmatpush1.msra.mxu0 0.0
      %536 = vmatprep.subr.mxu0 0.0
      %537 = vmatpush1.msra.mxu0 0.0
      %538 = vmatprep.subr.mxu0 0.0
      %539 = vmatpush1.msra.mxu0 0.0
      %540 = vmatprep.subr.mxu0 0.0
      %541 = vmatpush1.msra.mxu0 0.0
      %542 = vmatprep.subr.mxu0 0.0
      %543 = vmatpush1.msra.mxu0 0.0
      %544 = vmatprep.subr.mxu0 0.0
      %545 = vmatpush1.msra.mxu0 0.0
      %546 = vmatprep.subr.mxu0 0.0
      %547 = vmatpush1.msra.mxu0 0.0
      %548 = vmatprep.subr.mxu0 0.0
      %549 = vmatpush1.msra.mxu0 0.0
      %550 = vmatprep.subr.mxu0 0.0
      %551 = vmatpush1.msra.mxu0 0.0
      %552 = vmatprep.subr.mxu0 0.0
      %553 = vmatpush1.msra.mxu0 0.0
      %554 = vmatprep.subr.mxu0 0.0
      %555 = vmatpush1.msra.mxu0 0.0
      %556 = vmatprep.subr.mxu0 0.0
      %557 = vmatpush1.msra.mxu0 0.0
      %558 = vmatprep.subr.mxu0 0.0
      %559 = vmatpush1.msra.mxu0 0.0
      %560 = vmatprep.subr.mxu0 0.0
      %561 = vmatpush1.msra.mxu0 0.0
      %562 = vmatprep.subr.mxu0 0.0
      %563 = vmatpush1.msra.mxu0 0.0
      %564 = vmatprep.subr.mxu0 0.0
      %565 = vmatpush1.msra.mxu0 0.0
      %566 = vmatprep.subr.mxu0 0.0
      %567 = vmatpush1.msra.mxu0 0.0
      %568 = vmatprep.subr.mxu0 0.0
      %569 = vmatpush1.msra.mxu0 0.0
      %570 = vmatprep.subr.mxu0 0.0
      %571 = vmatpush1.msra.mxu0 0.0
      %572 = vmatprep.subr.mxu0 0.0
      %573 = vmatpush1.msra.mxu0 0.0
      %574 = vmatprep.subr.mxu0 0.0
      %575 = vmatpush1.msra.mxu0 0.0
      %576 = vmatprep.mubr.f32.mxu0 0.0
      %577 = vmatmul.mubr.f32.gmra.mrb[0].mxu0 %v489
      %v578 = vpop.f32.mrb[0].mxu0
      %v579 = vadd.f32 %v486, %v578
      %v580 = vpop.f32.mrb[0].mxu0
      %581 = vmatprep.mubr.f32.mxu0 0.0
      %582 = vmatmul.mubr.f32.gmra.mrb[0].mxu0 %v492
      %v583 = vpop.f32.mrb[0].mxu0
      %v584 = vadd.f32 %v486, %v583
      %v585 = vpop.f32.mrb[0].mxu0
      %586 = vmatprep.mubr.f32.mxu0 0.0
      %587 = vmatmul.mubr.f32.gmra.mrb[0].mxu0 %v495
      %v588 = vpop.f32.mrb[0].mxu0
      %v589 = vadd.f32 %v486, %v588
      %v590 = vpop.f32.mrb[0].mxu0
      %591 = vmatprep.mubr.f32.mxu0 0.0
      %592 = vmatmul.mubr.f32.gmra.mrb[0].mxu0 %v498
      %v593 = vpop.f32.mrb[0].mxu0
      %v594 = vadd.f32 %v486, %v593
      %v595 = vpop.f32.mrb[0].mxu0
      %596 = vmatprep.mubr.f32.mxu0 0.0
      %597 = vmatmul.mubr.f32.gmra.mrb[0].mxu0 %v501
      %v598 = vpop.f32.mrb[0].mxu0
      %v599 = vadd.f32 %v486, %v598
      %v600 = vpop.f32.mrb[0].mxu0
      %601 = vmatprep.mubr.f32.mxu0 0.0
      %602 = vmatmul.mubr.f32.gmra.mrb[0].mxu0 %v504
      %v603 = vpop.f32.mrb[0].mxu0
      %v604 = vadd.f32 %v486, %v603
      %v605 = vpop.f32.mrb[0].mxu0
      %606 = vmatprep.mubr.f32.mxu0 0.0
      %607 = vmatmul.mubr.f32.gmra.mrb[0].mxu0 %v507
      %v608 = vpop.f32.mrb[0].mxu0
      %v609 = vadd.f32 %v486, %v608
      %v610 = vpop.f32.mrb[0].mxu0
      %611 = vmatprep.mubr.f32.mxu0 0.0
      %612 = vmatmul.mubr.f32.gmra.mrb[0].mxu0 %v510
      %v613 = vpop.f32.mrb[0].mxu0
      %v614 = vadd.f32 %v486, %v613
      %v615 = vpop.f32.mrb[0].mxu0
      %616 = vdwg.mxu0
      %617 = vst [vmem:[#allocation2] sm:$0xff] 0.0
      %618 = vst [vmem:[#allocation2 + $0x8] sm:$0x3] 0.0
      %619 = vst [vmem:[#allocation2 + $0x10] sm:$0xff] 0.0
      %620 = vst [vmem:[#allocation2 + $0x18] sm:$0x3] 0.0
      %621 = vst [vmem:[#allocation2 + $0x20] sm:$0xff] 0.0
      %622 = vst [vmem:[#allocation2 + $0x28] sm:$0x3] 0.0
      %623 = vst [vmem:[#allocation2 + $0x30] sm:$0xff] 0.0
      %624 = vst [vmem:[#allocation2 + $0x38] sm:$0x3] 0.0
      %625 = vst [vmem:[#allocation2 + $0x40] sm:$0xff] 0.0
      %626 = vst [vmem:[#allocation2 + $0x48] sm:$0x3] 0.0
      %627 = vst [vmem:[#allocation2 + $0x50] sm:$0xff] 0.0
      %628 = vst [vmem:[#allocation2 + $0x58] sm:$0x3] 0.0
      %629 = vst [vmem:[#allocation2 + $0x60] sm:$0xff] 0.0
      %630 = vst [vmem:[#allocation2 + $0x68] sm:$0x3] 0.0
      %631 = vst [vmem:[#allocation2 + $0x70] sm:$0xff] 0.0
      %632 = vst [vmem:[#allocation2 + $0x78] sm:$0x3] 0.0
      %633 = vst [vmem:[#allocation2 + $0x80] sm:$0xff] 0.0
      %634 = vst [vmem:[#allocation2 + $0x88] sm:$0x3] 0.0
      %635 = vst [vmem:[#allocation2 + $0x90] sm:$0xff] 0.0
      %636 = vst [vmem:[#allocation2 + $0x98] sm:$0x3] 0.0
      %s637 = scalar_lea.vmem [#allocation2], 16
      %638 = vst [vmem:[%s637 + $0x1] sm:$0xff] %v579
      %639 = vst [vmem:[%s637 + $0x11] sm:$0xff] %v584
      %640 = vst [vmem:[%s637 + $0x21] sm:$0xff] %v589
      %641 = vst [vmem:[%s637 + $0x31] sm:$0xff] %v594
      %642 = vst [vmem:[%s637 + $0x41] sm:$0xff] %v599
      %643 = vst [vmem:[%s637 + $0x51] sm:$0xff] %v604
      %644 = vst [vmem:[%s637 + $0x61] sm:$0xff] %v609
      %645 = vst [vmem:[%s637 + $0x71] sm:$0xff] %v614
      %v646 = vld [vmem:[#allocation2] sm:$0xff]
      %v647 = vld [vmem:[#allocation2 + $0x8] sm:$0x3]
      %v648 = vld [vmem:[#allocation2 + $0x10] sm:$0xff]
      %v649 = vld [vmem:[#allocation2 + $0x18] sm:$0x3]
      %v650 = vld [vmem:[#allocation2 + $0x20] sm:$0xff]
      %v651 = vld [vmem:[#allocation2 + $0x28] sm:$0x3]
      %v652 = vld [vmem:[#allocation2 + $0x30] sm:$0xff]
      %v653 = vld [vmem:[#allocation2 + $0x38] sm:$0x3]
      %v654 = vld [vmem:[#allocation2 + $0x40] sm:$0xff]
      %v655 = vld [vmem:[#allocation2 + $0x48] sm:$0x3]
      %v656 = vld [vmem:[#allocation2 + $0x50] sm:$0xff]
      %v657 = vld [vmem:[#allocation2 + $0x58] sm:$0x3]
      %v658 = vld [vmem:[#allocation2 + $0x60] sm:$0xff]
      %v659 = vld [vmem:[#allocation2 + $0x68] sm:$0x3]
      %v660 = vld [vmem:[#allocation2 + $0x70] sm:$0xff]
      %v661 = vld [vmem:[#allocation2 + $0x78] sm:$0x3]
      %v662 = vld [vmem:[#allocation2 + $0x80] sm:$0xff]
      %v663 = vld [vmem:[#allocation2 + $0x88] sm:$0x3]
      %v664 = vld [vmem:[#allocation2 + $0x90] sm:$0xff]
      %v665 = vld [vmem:[#allocation2 + $0x98] sm:$0x3]
      %v666 = vld [vmem:[%s5] sm:$0x1]
      %v667 = vlaneseq
      %v668 = vshrl.u32 %v667, 7
      %v669 = vsub.s32 0, %v668
      %v670 = vrot.slane %v666, %v669
      %v671 = vmul.f32 %v646, %v670
      %v672 = vmul.f32 %v648, %v670
      %v673 = vmul.f32 %v650, %v670
      %v674 = vmul.f32 %v652, %v670
      %v675 = vmul.f32 %v654, %v670
      %v676 = vmul.f32 %v656, %v670
      %v677 = vmul.f32 %v658, %v670
      %v678 = vmul.f32 %v660, %v670
      %v679 = vadd.f32 %v671, 0.0
      %v680 = vadd.f32 %v672, 0.0
      %v681 = vadd.f32 %v673, 0.0
      %v682 = vadd.f32 %v674, 0.0
      %v683 = vadd.f32 %v675, 0.0
      %v684 = vadd.f32 %v676, 0.0
      %v685 = vadd.f32 %v677, 0.0
      %v686 = vadd.f32 %v678, 0.0
      %v687 = vld [vmem:[%s5 + $0x1] sm:$0x1]
      %v688 = vlaneseq
      %v689 = vshrl.u32 %v688, 7
      %v690 = vsub.s32 0, %v689
      %v691 = vrot.slane %v687, %v690
      %v692 = vmul.f32 %v646, %v691
      %v693 = vmul.f32 %v647, %v691
      %v694 = vmul.f32 %v648, %v691
      %v695 = vmul.f32 %v649, %v691
      %v696 = vmul.f32 %v650, %v691
      %v697 = vmul.f32 %v651, %v691
      %v698 = vmul.f32 %v652, %v691
      %v699 = vmul.f32 %v653, %v691
      %v700 = vmul.f32 %v654, %v691
      %v701 = vmul.f32 %v655, %v691
      %v702 = vmul.f32 %v656, %v691
      %v703 = vmul.f32 %v657, %v691
      %v704 = vmul.f32 %v658, %v691
      %v705 = vmul.f32 %v659, %v691
      %v706 = vmul.f32 %v660, %v691
      %v707 = vmul.f32 %v661, %v691
      %vm724 = vcmask 1046528
      %v725 = vrot.slane %v692, 1
      %v726 = vrot.slane %v693, 1
      %v727 = vsel %vm724, %v725, %v726
      %v728 = vrot.slane %v694, 1
      %v729 = vrot.slane %v695, 1
      %v730 = vsel %vm724, %v728, %v729
      %v731 = vrot.slane %v696, 1
      %v732 = vrot.slane %v697, 1
      %v733 = vsel %vm724, %v731, %v732
      %v734 = vrot.slane %v698, 1
      %v735 = vrot.slane %v699, 1
      %v736 = vsel %vm724, %v734, %v735
      %v737 = vrot.slane %v700, 1
      %v738 = vrot.slane %v701, 1
      %v739 = vsel %vm724, %v737, %v738
      %v740 = vrot.slane %v702, 1
      %v741 = vrot.slane %v703, 1
      %v742 = vsel %vm724, %v740, %v741
      %v743 = vrot.slane %v704, 1
      %v744 = vrot.slane %v705, 1
      %v745 = vsel %vm724, %v743, %v744
      %v746 = vrot.slane %v706, 1
      %v747 = vrot.slane %v707, 1
      %v748 = vsel %vm724, %v746, %v747
      %v757 = vadd.f32 %v679, %v727
      %v758 = vadd.f32 %v680, %v730
      %v759 = vadd.f32 %v681, %v733
      %v760 = vadd.f32 %v682, %v736
      %v761 = vadd.f32 %v683, %v739
      %v762 = vadd.f32 %v684, %v742
      %v763 = vadd.f32 %v685, %v745
      %v764 = vadd.f32 %v686, %v748
      %v765 = vld [vmem:[%s5 + $0x2] sm:$0x1]
      %v766 = vlaneseq
      %v767 = vshrl.u32 %v766, 7
      %v768 = vsub.s32 0, %v767
      %v769 = vrot.slane %v765, %v768
      %v770 = vmul.f32 %v646, %v769
      %v771 = vmul.f32 %v647, %v769
      %v772 = vmul.f32 %v648, %v769
      %v773 = vmul.f32 %v649, %v769
      %v774 = vmul.f32 %v650, %v769
      %v775 = vmul.f32 %v651, %v769
      %v776 = vmul.f32 %v652, %v769
      %v777 = vmul.f32 %v653, %v769
      %v778 = vmul.f32 %v654, %v769
      %v779 = vmul.f32 %v655, %v769
      %v780 = vmul.f32 %v656, %v769
      %v781 = vmul.f32 %v657, %v769
      %v782 = vmul.f32 %v658, %v769
      %v783 = vmul.f32 %v659, %v769
      %v784 = vmul.f32 %v660, %v769
      %v785 = vmul.f32 %v661, %v769
      %vm802 = vcmask 1045504
      %v803 = vrot.slane %v770, 2
      %v804 = vrot.slane %v771, 2
      %v805 = vsel %vm802, %v803, %v804
      %v806 = vrot.slane %v772, 2
      %v807 = vrot.slane %v773, 2
      %v808 = vsel %vm802, %v806, %v807
      %v809 = vrot.slane %v774, 2
      %v810 = vrot.slane %v775, 2
      %v811 = vsel %vm802, %v809, %v810
      %v812 = vrot.slane %v776, 2
      %v813 = vrot.slane %v777, 2
      %v814 = vsel %vm802, %v812, %v813
      %v815 = vrot.slane %v778, 2
      %v816 = vrot.slane %v779, 2
      %v817 = vsel %vm802, %v815, %v816
      %v818 = vrot.slane %v780, 2
      %v819 = vrot.slane %v781, 2
      %v820 = vsel %vm802, %v818, %v819
      %v821 = vrot.slane %v782, 2
      %v822 = vrot.slane %v783, 2
      %v823 = vsel %vm802, %v821, %v822
      %v824 = vrot.slane %v784, 2
      %v825 = vrot.slane %v785, 2
      %v826 = vsel %vm802, %v824, %v825
      %v835 = vadd.f32 %v757, %v805
      %v836 = vadd.f32 %v758, %v808
      %v837 = vadd.f32 %v759, %v811
      %v838 = vadd.f32 %v760, %v814
      %v839 = vadd.f32 %v761, %v817
      %v840 = vadd.f32 %v762, %v820
      %v841 = vadd.f32 %v763, %v823
      %v842 = vadd.f32 %v764, %v826
      %v843 = vld [vmem:[%s5 + $0x3] sm:$0x1]
      %v844 = vlaneseq
      %v845 = vshrl.u32 %v844, 7
      %v846 = vsub.s32 0, %v845
      %v847 = vrot.slane %v843, %v846
      %v848 = vmul.f32 %v648, %v847
      %v849 = vmul.f32 %v650, %v847
      %v850 = vmul.f32 %v652, %v847
      %v851 = vmul.f32 %v654, %v847
      %v852 = vmul.f32 %v656, %v847
      %v853 = vmul.f32 %v658, %v847
      %v854 = vmul.f32 %v660, %v847
      %v855 = vmul.f32 %v662, %v847
      %v856 = vadd.f32 %v835, %v848
      %v857 = vadd.f32 %v836, %v849
      %v858 = vadd.f32 %v837, %v850
      %v859 = vadd.f32 %v838, %v851
      %v860 = vadd.f32 %v839, %v852
      %v861 = vadd.f32 %v840, %v853
      %v862 = vadd.f32 %v841, %v854
      %v863 = vadd.f32 %v842, %v855
      %v864 = vld [vmem:[%s5 + $0x4] sm:$0x1]
      %v865 = vlaneseq
      %v866 = vshrl.u32 %v865, 7
      %v867 = vsub.s32 0, %v866
      %v868 = vrot.slane %v864, %v867
      %v869 = vmul.f32 %v648, %v868
      %v870 = vmul.f32 %v649, %v868
      %v871 = vmul.f32 %v650, %v868
      %v872 = vmul.f32 %v651, %v868
      %v873 = vmul.f32 %v652, %v868
      %v874 = vmul.f32 %v653, %v868
      %v875 = vmul.f32 %v654, %v868
      %v876 = vmul.f32 %v655, %v868
      %v877 = vmul.f32 %v656, %v868
      %v878 = vmul.f32 %v657, %v868
      %v879 = vmul.f32 %v658, %v868
      %v880 = vmul.f32 %v659, %v868
      %v881 = vmul.f32 %v660, %v868
      %v882 = vmul.f32 %v661, %v868
      %v883 = vmul.f32 %v662, %v868
      %v884 = vmul.f32 %v663, %v868
      %v901 = vrot.slane %v869, 1
      %v902 = vrot.slane %v870, 1
      %v903 = vsel %vm724, %v901, %v902
      %v904 = vrot.slane %v871, 1
      %v905 = vrot.slane %v872, 1
      %v906 = vsel %vm724, %v904, %v905
      %v907 = vrot.slane %v873, 1
      %v908 = vrot.slane %v874, 1
      %v909 = vsel %vm724, %v907, %v908
      %v910 = vrot.slane %v875, 1
      %v911 = vrot.slane %v876, 1
      %v912 = vsel %vm724, %v910, %v911
      %v913 = vrot.slane %v877, 1
      %v914 = vrot.slane %v878, 1
      %v915 = vsel %vm724, %v913, %v914
      %v916 = vrot.slane %v879, 1
      %v917 = vrot.slane %v880, 1
      %v918 = vsel %vm724, %v916, %v917
      %v919 = vrot.slane %v881, 1
      %v920 = vrot.slane %v882, 1
      %v921 = vsel %vm724, %v919, %v920
      %v922 = vrot.slane %v883, 1
      %v923 = vrot.slane %v884, 1
      %v924 = vsel %vm724, %v922, %v923
      %v933 = vadd.f32 %v856, %v903
      %v934 = vadd.f32 %v857, %v906
      %v935 = vadd.f32 %v858, %v909
      %v936 = vadd.f32 %v859, %v912
      %v937 = vadd.f32 %v860, %v915
      %v938 = vadd.f32 %v861, %v918
      %v939 = vadd.f32 %v862, %v921
      %v940 = vadd.f32 %v863, %v924
      %v941 = vld [vmem:[%s5 + $0x5] sm:$0x1]
      %v942 = vlaneseq
      %v943 = vshrl.u32 %v942, 7
      %v944 = vsub.s32 0, %v943
      %v945 = vrot.slane %v941, %v944
      %v946 = vmul.f32 %v648, %v945
      %v947 = vmul.f32 %v649, %v945
      %v948 = vmul.f32 %v650, %v945
      %v949 = vmul.f32 %v651, %v945
      %v950 = vmul.f32 %v652, %v945
      %v951 = vmul.f32 %v653, %v945
      %v952 = vmul.f32 %v654, %v945
      %v953 = vmul.f32 %v655, %v945
      %v954 = vmul.f32 %v656, %v945
      %v955 = vmul.f32 %v657, %v945
      %v956 = vmul.f32 %v658, %v945
      %v957 = vmul.f32 %v659, %v945
      %v958 = vmul.f32 %v660, %v945
      %v959 = vmul.f32 %v661, %v945
      %v960 = vmul.f32 %v662, %v945
      %v961 = vmul.f32 %v663, %v945
      %v978 = vrot.slane %v946, 2
      %v979 = vrot.slane %v947, 2
      %v980 = vsel %vm802, %v978, %v979
      %v981 = vrot.slane %v948, 2
      %v982 = vrot.slane %v949, 2
      %v983 = vsel %vm802, %v981, %v982
      %v984 = vrot.slane %v950, 2
      %v985 = vrot.slane %v951, 2
      %v986 = vsel %vm802, %v984, %v985
      %v987 = vrot.slane %v952, 2
      %v988 = vrot.slane %v953, 2
      %v989 = vsel %vm802, %v987, %v988
      %v990 = vrot.slane %v954, 2
      %v991 = vrot.slane %v955, 2
      %v992 = vsel %vm802, %v990, %v991
      %v993 = vrot.slane %v956, 2
      %v994 = vrot.slane %v957, 2
      %v995 = vsel %vm802, %v993, %v994
      %v996 = vrot.slane %v958, 2
      %v997 = vrot.slane %v959, 2
      %v998 = vsel %vm802, %v996, %v997
      %v999 = vrot.slane %v960, 2
      %v1000 = vrot.slane %v961, 2
      %v1001 = vsel %vm802, %v999, %v1000
      %v1010 = vadd.f32 %v933, %v980
      %v1011 = vadd.f32 %v934, %v983
      %v1012 = vadd.f32 %v935, %v986
      %v1013 = vadd.f32 %v936, %v989
      %v1014 = vadd.f32 %v937, %v992
      %v1015 = vadd.f32 %v938, %v995
      %v1016 = vadd.f32 %v939, %v998
      %v1017 = vadd.f32 %v940, %v1001
      %v1018 = vld [vmem:[%s5 + $0x6] sm:$0x1]
      %v1019 = vlaneseq
      %v1020 = vshrl.u32 %v1019, 7
      %v1021 = vsub.s32 0, %v1020
      %v1022 = vrot.slane %v1018, %v1021
      %v1023 = vmul.f32 %v650, %v1022
      %v1024 = vmul.f32 %v652, %v1022
      %v1025 = vmul.f32 %v654, %v1022
      %v1026 = vmul.f32 %v656, %v1022
      %v1027 = vmul.f32 %v658, %v1022
      %v1028 = vmul.f32 %v660, %v1022
      %v1029 = vmul.f32 %v662, %v1022
      %v1030 = vmul.f32 %v664, %v1022
      %v1031 = vadd.f32 %v1010, %v1023
      %v1032 = vadd.f32 %v1011, %v1024
      %v1033 = vadd.f32 %v1012, %v1025
      %v1034 = vadd.f32 %v1013, %v1026
      %v1035 = vadd.f32 %v1014, %v1027
      %v1036 = vadd.f32 %v1015, %v1028
      %v1037 = vadd.f32 %v1016, %v1029
      %v1038 = vadd.f32 %v1017, %v1030
      %v1039 = vld [vmem:[%s5 + $0x7] sm:$0x1]
      %v1040 = vlaneseq
      %v1041 = vshrl.u32 %v1040, 7
      %v1042 = vsub.s32 0, %v1041
      %v1043 = vrot.slane %v1039, %v1042
      %v1044 = vmul.f32 %v650, %v1043
      %v1045 = vmul.f32 %v651, %v1043
      %v1046 = vmul.f32 %v652, %v1043
      %v1047 = vmul.f32 %v653, %v1043
      %v1048 = vmul.f32 %v654, %v1043
      %v1049 = vmul.f32 %v655, %v1043
      %v1050 = vmul.f32 %v656, %v1043
      %v1051 = vmul.f32 %v657, %v1043
      %v1052 = vmul.f32 %v658, %v1043
      %v1053 = vmul.f32 %v659, %v1043
      %v1054 = vmul.f32 %v660, %v1043
      %v1055 = vmul.f32 %v661, %v1043
      %v1056 = vmul.f32 %v662, %v1043
      %v1057 = vmul.f32 %v663, %v1043
      %v1058 = vmul.f32 %v664, %v1043
      %v1059 = vmul.f32 %v665, %v1043
      %v1076 = vrot.slane %v1044, 1
      %v1077 = vrot.slane %v1045, 1
      %v1078 = vsel %vm724, %v1076, %v1077
      %v1079 = vrot.slane %v1046, 1
      %v1080 = vrot.slane %v1047, 1
      %v1081 = vsel %vm724, %v1079, %v1080
      %v1082 = vrot.slane %v1048, 1
      %v1083 = vrot.slane %v1049, 1
      %v1084 = vsel %vm724, %v1082, %v1083
      %v1085 = vrot.slane %v1050, 1
      %v1086 = vrot.slane %v1051, 1
      %v1087 = vsel %vm724, %v1085, %v1086
      %v1088 = vrot.slane %v1052, 1
      %v1089 = vrot.slane %v1053, 1
      %v1090 = vsel %vm724, %v1088, %v1089
      %v1091 = vrot.slane %v1054, 1
      %v1092 = vrot.slane %v1055, 1
      %v1093 = vsel %vm724, %v1091, %v1092
      %v1094 = vrot.slane %v1056, 1
      %v1095 = vrot.slane %v1057, 1
      %v1096 = vsel %vm724, %v1094, %v1095
      %v1097 = vrot.slane %v1058, 1
      %v1098 = vrot.slane %v1059, 1
      %v1099 = vsel %vm724, %v1097, %v1098
      %v1108 = vadd.f32 %v1031, %v1078
      %v1109 = vadd.f32 %v1032, %v1081
      %v1110 = vadd.f32 %v1033, %v1084
      %v1111 = vadd.f32 %v1034, %v1087
      %v1112 = vadd.f32 %v1035, %v1090
      %v1113 = vadd.f32 %v1036, %v1093
      %v1114 = vadd.f32 %v1037, %v1096
      %v1115 = vadd.f32 %v1038, %v1099
      %v1116 = vld [vmem:[%s5 + $0x8] sm:$0x1]
      %v1117 = vlaneseq
      %v1118 = vshrl.u32 %v1117, 7
      %v1119 = vsub.s32 0, %v1118
      %v1120 = vrot.slane %v1116, %v1119
      %v1121 = vmul.f32 %v650, %v1120
      %v1122 = vmul.f32 %v651, %v1120
      %v1123 = vmul.f32 %v652, %v1120
      %v1124 = vmul.f32 %v653, %v1120
      %v1125 = vmul.f32 %v654, %v1120
      %v1126 = vmul.f32 %v655, %v1120
      %v1127 = vmul.f32 %v656, %v1120
      %v1128 = vmul.f32 %v657, %v1120
      %v1129 = vmul.f32 %v658, %v1120
      %v1130 = vmul.f32 %v659, %v1120
      %v1131 = vmul.f32 %v660, %v1120
      %v1132 = vmul.f32 %v661, %v1120
      %v1133 = vmul.f32 %v662, %v1120
      %v1134 = vmul.f32 %v663, %v1120
      %v1135 = vmul.f32 %v664, %v1120
      %v1136 = vmul.f32 %v665, %v1120
      %v1153 = vrot.slane %v1121, 2
      %v1154 = vrot.slane %v1122, 2
      %v1155 = vsel %vm802, %v1153, %v1154
      %v1156 = vrot.slane %v1123, 2
      %v1157 = vrot.slane %v1124, 2
      %v1158 = vsel %vm802, %v1156, %v1157
      %v1159 = vrot.slane %v1125, 2
      %v1160 = vrot.slane %v1126, 2
      %v1161 = vsel %vm802, %v1159, %v1160
      %v1162 = vrot.slane %v1127, 2
      %v1163 = vrot.slane %v1128, 2
      %v1164 = vsel %vm802, %v1162, %v1163
      %v1165 = vrot.slane %v1129, 2
      %v1166 = vrot.slane %v1130, 2
      %v1167 = vsel %vm802, %v1165, %v1166
      %v1168 = vrot.slane %v1131, 2
      %v1169 = vrot.slane %v1132, 2
      %v1170 = vsel %vm802, %v1168, %v1169
      %v1171 = vrot.slane %v1133, 2
      %v1172 = vrot.slane %v1134, 2
      %v1173 = vsel %vm802, %v1171, %v1172
      %v1174 = vrot.slane %v1135, 2
      %v1175 = vrot.slane %v1136, 2
      %v1176 = vsel %vm802, %v1174, %v1175
      %v1185 = vadd.f32 %v1108, %v1155
      %v1186 = vadd.f32 %v1109, %v1158
      %v1187 = vadd.f32 %v1110, %v1161
      %v1188 = vadd.f32 %v1111, %v1164
      %v1189 = vadd.f32 %v1112, %v1167
      %v1190 = vadd.f32 %v1113, %v1170
      %v1191 = vadd.f32 %v1114, %v1173
      %v1192 = vadd.f32 %v1115, %v1176
      %v1193 = vld [vmem:[%s6] sm:$0x1]
      %v1195 = vlaneseq
      %v1196 = vshrl.u32 %v1195, 7
      %v1197 = vsub.s32 0, %v1196
      %v1198 = vrot.slane %v1193, %v1197
      %v1200 = vadd.f32 %v1185, %v1198
      %v1201 = vadd.f32 %v1186, %v1198
      %v1202 = vadd.f32 %v1187, %v1198
      %v1203 = vadd.f32 %v1188, %v1198
      %v1204 = vadd.f32 %v1189, %v1198
      %v1205 = vadd.f32 %v1190, %v1198
      %v1206 = vadd.f32 %v1191, %v1198
      %v1207 = vadd.f32 %v1192, %v1198
      %v1208 = vmul.f32 %v1200, 0.5
      %v1209 = vmul.f32 %v1201, 0.5
      %v1210 = vmul.f32 %v1202, 0.5
      %v1211 = vmul.f32 %v1203, 0.5
      %v1212 = vmul.f32 %v1204, 0.5
      %v1213 = vmul.f32 %v1205, 0.5
      %v1214 = vmul.f32 %v1206, 0.5
      %v1215 = vmul.f32 %v1207, 0.5
      %v1216 = vmul.f32 %v1200, 0.70710677
      %v1217 = vmul.f32 %v1201, 0.70710677
      %v1218 = vmul.f32 %v1202, 0.70710677
      %v1219 = vmul.f32 %v1203, 0.70710677
      %v1220 = vmul.f32 %v1204, 0.70710677
      %v1221 = vmul.f32 %v1205, 0.70710677
      %v1222 = vmul.f32 %v1206, 0.70710677
      %v1223 = vmul.f32 %v1207, 0.70710677
      %v1224 = verf.f32.pop %v1216
      %v1225 = verf.f32.pop %v1217
      %v1226 = verf.f32.pop %v1218
      %v1227 = verf.f32.pop %v1219
      %v1228 = verf.f32.pop %v1220
      %v1229 = verf.f32.pop %v1221
      %v1230 = verf.f32.pop %v1222
      %v1231 = verf.f32.pop %v1223
      %v1232 = vadd.f32 %v1224, 1.0
      %v1233 = vadd.f32 %v1225, 1.0
      %v1234 = vadd.f32 %v1226, 1.0
      %v1235 = vadd.f32 %v1227, 1.0
      %v1236 = vadd.f32 %v1228, 1.0
      %v1237 = vadd.f32 %v1229, 1.0
      %v1238 = vadd.f32 %v1230, 1.0
      %v1239 = vadd.f32 %v1231, 1.0
      %v1240 = vmul.f32 %v1208, %v1232
      %v1241 = vmul.f32 %v1209, %v1233
      %v1242 = vmul.f32 %v1210, %v1234
      %v1243 = vmul.f32 %v1211, %v1235
      %v1244 = vmul.f32 %v1212, %v1236
      %v1245 = vmul.f32 %v1213, %v1237
      %v1246 = vmul.f32 %v1214, %v1238
      %v1247 = vmul.f32 %v1215, %v1239
      %v1248 = vld [vmem:[%s7] sm:$0xff]
      %v1249 = vld [vmem:[%s7 + $0x8] sm:$0xff]
      %v1250 = vld [vmem:[%s7 + $0x10] sm:$0xff]
      %v1251 = vld [vmem:[%s7 + $0x18] sm:$0xff]
      %v1252 = vld [vmem:[%s7 + $0x20] sm:$0xff]
      %v1253 = vld [vmem:[%s7 + $0x28] sm:$0xff]
      %v1254 = vld [vmem:[%s7 + $0x30] sm:$0xff]
      %v1255 = vld [vmem:[%s7 + $0x38] sm:$0xff]
      %v1256 = vld [vmem:[%s7 + $0x40] sm:$0xff]
      %v1257 = vld [vmem:[%s7 + $0x48] sm:$0xff]
      %v1258 = vld [vmem:[%s7 + $0x50] sm:$0xff]
      %v1259 = vld [vmem:[%s7 + $0x58] sm:$0xff]
      %v1260 = vld [vmem:[%s7 + $0x60] sm:$0xff]
      %v1261 = vld [vmem:[%s7 + $0x68] sm:$0xff]
      %v1262 = vld [vmem:[%s7 + $0x70] sm:$0xff]
      %v1263 = vld [vmem:[%s7 + $0x78] sm:$0xff]
      %1264 = vmatprep.subr.mxu0 0.0
      %1265 = vmatpush1.msra.mxu0 %v1248
      %1266 = vmatprep.subr.mxu0 0.0
      %1267 = vmatpush1.msra.mxu0 %v1249
      %1268 = vmatprep.subr.mxu0 0.0
      %1269 = vmatpush1.msra.mxu0 %v1250
      %1270 = vmatprep.subr.mxu0 0.0
      %1271 = vmatpush1.msra.mxu0 %v1251
      %1272 = vmatprep.subr.mxu0 0.0
      %1273 = vmatpush1.msra.mxu0 %v1252
      %1274 = vmatprep.subr.mxu0 0.0
      %1275 = vmatpush1.msra.mxu0 %v1253
      %1276 = vmatprep.subr.mxu0 0.0
      %1277 = vmatpush1.msra.mxu0 %v1254
      %1278 = vmatprep.subr.mxu0 0.0
      %1279 = vmatpush1.msra.mxu0 %v1255
      %1280 = vmatprep.subr.mxu0 0.0
      %1281 = vmatpush1.msra.mxu0 %v1256
      %1282 = vmatprep.subr.mxu0 0.0
      %1283 = vmatpush1.msra.mxu0 %v1257
      %1284 = vmatprep.subr.mxu0 0.0
      %1285 = vmatpush1.msra.mxu0 %v1258
      %1286 = vmatprep.subr.mxu0 0.0
      %1287 = vmatpush1.msra.mxu0 %v1259
      %1288 = vmatprep.subr.mxu0 0.0
      %1289 = vmatpush1.msra.mxu0 %v1260
      %1290 = vmatprep.subr.mxu0 0.0
      %1291 = vmatpush1.msra.mxu0 %v1261
      %1292 = vmatprep.subr.mxu0 0.0
      %1293 = vmatpush1.msra.mxu0 %v1262
      %1294 = vmatprep.subr.mxu0 0.0
      %1295 = vmatpush1.msra.mxu0 %v1263
      %1296 = vmatprep.subr.mxu0 0.0
      %1297 = vmatpush1.msra.mxu0 0.0
      %1298 = vmatprep.subr.mxu0 0.0
      %1299 = vmatpush1.msra.mxu0 0.0
      %1300 = vmatprep.subr.mxu0 0.0
      %1301 = vmatpush1.msra.mxu0 0.0
      %1302 = vmatprep.subr.mxu0 0.0
      %1303 = vmatpush1.msra.mxu0 0.0
      %1304 = vmatprep.subr.mxu0 0.0
      %1305 = vmatpush1.msra.mxu0 0.0
      %1306 = vmatprep.subr.mxu0 0.0
      %1307 = vmatpush1.msra.mxu0 0.0
      %1308 = vmatprep.subr.mxu0 0.0
      %1309 = vmatpush1.msra.mxu0 0.0
      %1310 = vmatprep.subr.mxu0 0.0
      %1311 = vmatpush1.msra.mxu0 0.0
      %1312 = vmatprep.subr.mxu0 0.0
      %1313 = vmatpush1.msra.mxu0 0.0
      %1314 = vmatprep.subr.mxu0 0.0
      %1315 = vmatpush1.msra.mxu0 0.0
      %1316 = vmatprep.subr.mxu0 0.0
      %1317 = vmatpush1.msra.mxu0 0.0
      %1318 = vmatprep.subr.mxu0 0.0
      %1319 = vmatpush1.msra.mxu0 0.0
      %1320 = vmatprep.subr.mxu0 0.0
      %1321 = vmatpush1.msra.mxu0 0.0
      %1322 = vmatprep.subr.mxu0 0.0
      %1323 = vmatpush1.msra.mxu0 0.0
      %1324 = vmatprep.subr.mxu0 0.0
      %1325 = vmatpush1.msra.mxu0 0.0
      %1326 = vmatprep.subr.mxu0 0.0
      %1327 = vmatpush1.msra.mxu0 0.0
      %1328 = vmatprep.mubr.f32.mxu0 0.0
      %1329 = vmatmul.mubr.f32.gmra.mrb[0].mxu0 %v1240
      %v1330 = vpop.f32.mrb[0].mxu0
      %v1331 = vadd.f32 0.0, %v1330
      %v1332 = vpop.f32.mrb[0].mxu0
      %1333 = vmatprep.mubr.f32.mxu0 0.0
      %1334 = vmatmul.mubr.f32.gmra.mrb[0].mxu0 %v1241
      %v1335 = vpop.f32.mrb[0].mxu0
      %v1336 = vadd.f32 0.0, %v1335
      %v1337 = vpop.f32.mrb[0].mxu0
      %1338 = vmatprep.mubr.f32.mxu0 0.0
      %1339 = vmatmul.mubr.f32.gmra.mrb[0].mxu0 %v1242
      %v1340 = vpop.f32.mrb[0].mxu0
      %v1341 = vadd.f32 0.0, %v1340
      %v1342 = vpop.f32.mrb[0].mxu0
      %1343 = vmatprep.mubr.f32.mxu0 0.0
      %1344 = vmatmul.mubr.f32.gmra.mrb[0].mxu0 %v1243
      %v1345 = vpop.f32.mrb[0].mxu0
      %v1346 = vadd.f32 0.0, %v1345
      %v1347 = vpop.f32.mrb[0].mxu0
      %1348 = vmatprep.mubr.f32.mxu0 0.0
      %1349 = vmatmul.mubr.f32.gmra.mrb[0].mxu0 %v1244
      %v1350 = vpop.f32.mrb[0].mxu0
      %v1351 = vadd.f32 0.0, %v1350
      %v1352 = vpop.f32.mrb[0].mxu0
      %1353 = vmatprep.mubr.f32.mxu0 0.0
      %1354 = vmatmul.mubr.f32.gmra.mrb[0].mxu0 %v1245
      %v1355 = vpop.f32.mrb[0].mxu0
      %v1356 = vadd.f32 0.0, %v1355
      %v1357 = vpop.f32.mrb[0].mxu0
      %1358 = vmatprep.mubr.f32.mxu0 0.0
      %1359 = vmatmul.mubr.f32.gmra.mrb[0].mxu0 %v1246
      %v1360 = vpop.f32.mrb[0].mxu0
      %v1361 = vadd.f32 0.0, %v1360
      %v1362 = vpop.f32.mrb[0].mxu0
      %1363 = vmatprep.mubr.f32.mxu0 0.0
      %1364 = vmatmul.mubr.f32.gmra.mrb[0].mxu0 %v1247
      %v1365 = vpop.f32.mrb[0].mxu0
      %v1366 = vadd.f32 0.0, %v1365
      %v1367 = vpop.f32.mrb[0].mxu0
      %1368 = vdwg.mxu0
      %v1369 = vadd.f32 %v333, %v1331
      %v1370 = vadd.f32 %v334, %v1336
      %v1371 = vadd.f32 %v335, %v1341
      %v1372 = vadd.f32 %v336, %v1346
      %v1373 = vadd.f32 %v337, %v1351
      %v1374 = vadd.f32 %v338, %v1356
      %v1375 = vadd.f32 %v339, %v1361
      %v1376 = vadd.f32 %v340, %v1366
      %v1377 = vld [vmem:[%s8] sm:$0x1]
      %v1379 = vlaneseq
      %v1380 = vshrl.u32 %v1379, 7
      %v1381 = vsub.s32 0, %v1380
      %v1382 = vrot.slane %v1377, %v1381
      %v1384 = vadd.f32 %v1369, %v1382
      %v1385 = vadd.f32 %v1370, %v1382
      %v1386 = vadd.f32 %v1371, %v1382
      %v1387 = vadd.f32 %v1372, %v1382
      %v1388 = vadd.f32 %v1373, %v1382
      %v1389 = vadd.f32 %v1374, %v1382
      %v1390 = vadd.f32 %v1375, %v1382
      %v1391 = vadd.f32 %v1376, %v1382
      %1392 = vst.msk [vmem:[%s332] sm:$0xff] %vm341, %v1384
      %1393 = vst.msk [vmem:[%s332 + $0x8] sm:$0xff] %vm341, %v1385
      %1394 = vst.msk [vmem:[%s332 + $0x10] sm:$0xff] %vm341, %v1386
      %1395 = vst.msk [vmem:[%s332 + $0x18] sm:$0xff] %vm341, %v1387
      %1396 = vst.msk [vmem:[%s332 + $0x20] sm:$0xff] %vm341, %v1388
      %1397 = vst.msk [vmem:[%s332 + $0x28] sm:$0xff] %vm341, %v1389
      %1398 = vst.msk [vmem:[%s332 + $0x30] sm:$0xff] %vm341, %v1390
      %1399 = vst.msk [vmem:[%s332 + $0x38] sm:$0xff] %vm341, %v1391
      %p1400 = scmp.lt.s32.totalorder %s20, 1
      %s1401 = scalar_select %p1400, %s20, 1
      %s1402 = smul.addr %s1401, 8
      %s1403 = smul.addr %s1402, 8
      %s1404 = scalar_lea.vmem %s9, %s1403
      // Predicated region
      $region57: #{block_forward.3} parent=55 // pred_check
        %p1405 = pneg %p232
      $region58: #{block_forward.3} parent=55 // pred_check_branch
        %1407 = sbr.rel (%p1405) target = $region60
      $region59: #{block_forward.3} parent=55 // pred_region
        _
      $region60: #{block_forward.3} parent=55 // pred_fallthru
        _
    $region56: #{block_forward.3} parent=5 // pred_fallthru
      _
    %p1408 = scmp.le.s32.totalorder 2, %s15
    // Predicated region
    $region61: #{block_forward.3} parent=5 // pred_check
      %p1409 = pneg %p1408
    $region62: #{block_forward.3} parent=5 // pred_check_branch
      %1411 = sbr.rel (%p1409) target = $region64
    $region63: #{block_forward.3} parent=5 // pred_region
      %s1412 = ssub.s32 %s15, 2
      // Predicated region
      $region65: #{block_forward.3} parent=63 // pred_check
        %p1413 = pneg %p238
      $region66: #{block_forward.3} parent=63 // pred_check_branch
        %1415 = sbr.rel (%p1413) target = $region68
      $region67: #{block_forward.3} parent=63 // pred_region
        %p1416 = scmp.lt.s32.totalorder %s21, 1
        %s1417 = scalar_select %p1416, %s21, 1
        %s1418 = smul.addr %s1417, 8
        %s1419 = smul.addr %s1418, 8
        %s1420 = scalar_lea.vmem %s9, %s1419
      $region68: #{block_forward.3} parent=63 // pred_fallthru
        _
    $region64: #{block_forward.3} parent=5 // pred_fallthru
      _
  $region6: #{block_forward.3} parent=0 // loop_footer
    %s19 = sadd.s32 1, %s15
  $region7: #{block_forward.3} parent=0 // loop_footer_branch
    %14 = sbr.rel target = $region3
  $region8: #{block_forward.3} parent=0 // loop_exit
    _

// kernel: block_forward.2
$region0: #{block_forward.2}
  #allocation0 [shape = 'u32[]', space=smem, size = 0x4, offset = 0x4, fixed_abs, tag = 'smem constant byte address 0x4 - core index']
  #allocation1 [shape = 'u32[144,128]{1,0:T(1,128)}', space=vmem, size = 0x12000, scoped, tag = 'internal scratch']
  %s0 = inlined_call_operand.vmem [shape: f32[2,64,32], index: 0, kind: input, shape index: {}]
  %s1 = inlined_call_operand.vmem [shape: f32[1,32], index: 1, kind: input, shape index: {}]
  %s2 = inlined_call_operand.vmem [shape: f32[1,32], index: 2, kind: input, shape index: {}]
  %s3 = inlined_call_operand.vmem [shape: f32[32,32], index: 3, kind: input, shape index: {}]
  %s4 = inlined_call_operand.vmem [shape: f32[32,64], index: 4, kind: input, shape index: {}]
  %s5 = inlined_call_operand.vmem [shape: f32[32,32], index: 5, kind: input, shape index: {}]
  %s6 = inlined_call_operand.vmem [shape: f32[1,32], index: 6, kind: input, shape index: {}]
  %s7 = inlined_call_operand.vmem [shape: f32[2,64,32], index: 7, kind: output, shape index: {}]
  %s8 = sld [smem:[#allocation0]]
  $region61: #{block_forward.2} parent=0
    _
  %s10 = ssub.s32 1, %s8
  %s11 = scalar_select 0, %s10, %s8
  loop: start=0, step=1, limit=4
  $region2: #{block_forward.2} parent=0 // loop_pre_header
    _
  $region3: #{block_forward.2} parent=0 // loop_header
    %s13 = sphi 0, %s17
    %p14 = scmp.ge.s32.totalorder %s13, 4
    %s23 = sphi 0, %s25
    %s26 = sphi 0, %s23
    %s27 = sphi 0, %s26
    %s43 = sphi 0, %s27
    %s47 = sphi 0, %s47
    %s49 = sphi 0, %s47
    %s50 = sphi 0, %s49
    %s64 = sphi 0, %s50
    %s68 = sphi 0, %s68
    %s70 = sphi 0, %s68
    %s71 = sphi 0, %s70
    %s85 = sphi 0, %s71
    %s89 = sphi 0, %s89
    %s91 = sphi 0, %s89
    %s92 = sphi 0, %s91
    %s106 = sphi 0, %s92
    %s110 = sphi 0, %s110
    %s112 = sphi 0, %s110
    %s113 = sphi 0, %s112
    %s127 = sphi 0, %s113
    %s131 = sphi 0, %s131
    %s133 = sphi 0, %s131
    %s134 = sphi 0, %s133
    %s148 = sphi 0, %s134
    %s152 = sphi 0, %s152
    %s154 = sphi 0, %s152
    %s155 = sphi 0, %s154
    %s169 = sphi 0, %s155
    %s175 = sphi 0, %s177
    %s178 = sphi 0, %s175
    %s179 = sphi 0, %s178
    %s195 = sphi 0, %s179
  $region4: #{block_forward.2} parent=0 // loop_header_branch
    %16 = sbr.rel (%p14) target = $region8
  $region5: #{block_forward.2} parent=0 // loop_body
    %s18 = ssub.s32 %s13, 1
    %s19 = ssub.s32 %s13, 2
    %s20 = sadd.s32 %s13, 1
    %s21 = ssub.s32 %s13, %s20
    %p22 = scmp.eq.s32.totalorder %s21, 0
    %s24 = sadd.s32 %s23, 1
    %s25 = scalar_select %p22, %s23, %s24
    %p28 = pneg %p22
    %p29 = scmp.eq.s32.totalorder %s13, 1
    %p30 = por %p28, %p29
    %p31 = scmp.ne.s32.totalorder %s23, %s26
    %p32 = scmp.eq.s32.totalorder %s13, 0
    %p33 = por %p31, %p32
    %p34 = scmp.ne.s32.totalorder %s23, %s26
    %p35 = scmp.eq.s32.totalorder %s18, 1
    %p36 = por %p34, %p35
    %p37 = scmp.ne.s32.totalorder %s26, %s27
    %p38 = scmp.eq.s32.totalorder %s18, 0
    %p39 = por %p37, %p38
    %p40 = scmp.ne.s32.totalorder %s26, %s27
    %p41 = scmp.eq.s32.totalorder %s19, 1
    %p42 = por %p40, %p41
    %p44 = scmp.ne.s32.totalorder %s27, %s43
    %p45 = scmp.eq.s32.totalorder %s19, 0
    %p46 = por %p44, %p45
    %s48 = sadd.s32 %s47, 1
    %p51 = scmp.eq.s32.totalorder %s13, 1
    %p52 = scmp.ne.s32.totalorder %s47, %s49
    %p53 = scmp.eq.s32.totalorder %s13, 0
    %p54 = por %p52, %p53
    %p55 = scmp.ne.s32.totalorder %s47, %s49
    %p56 = scmp.eq.s32.totalorder %s18, 1
    %p57 = por %p55, %p56
    %p58 = scmp.ne.s32.totalorder %s49, %s50
    %p59 = scmp.eq.s32.totalorder %s18, 0
    %p60 = por %p58, %p59
    %p61 = scmp.ne.s32.totalorder %s49, %s50
    %p62 = scmp.eq.s32.totalorder %s19, 1
    %p63 = por %p61, %p62
    %p65 = scmp.ne.s32.totalorder %s50, %s64
    %p66 = scmp.eq.s32.totalorder %s19, 0
    %p67 = por %p65, %p66
    %s69 = sadd.s32 %s68, 1
    %p72 = scmp.eq.s32.totalorder %s13, 1
    %p73 = scmp.ne.s32.totalorder %s68, %s70
    %p74 = scmp.eq.s32.totalorder %s13, 0
    %p75 = por %p73, %p74
    %p76 = scmp.ne.s32.totalorder %s68, %s70
    %p77 = scmp.eq.s32.totalorder %s18, 1
    %p78 = por %p76, %p77
    %p79 = scmp.ne.s32.totalorder %s70, %s71
    %p80 = scmp.eq.s32.totalorder %s18, 0
    %p81 = por %p79, %p80
    %p82 = scmp.ne.s32.totalorder %s70, %s71
    %p83 = scmp.eq.s32.totalorder %s19, 1
    %p84 = por %p82, %p83
    %p86 = scmp.ne.s32.totalorder %s71, %s85
    %p87 = scmp.eq.s32.totalorder %s19, 0
    %p88 = por %p86, %p87
    %s90 = sadd.s32 %s89, 1
    %p93 = scmp.eq.s32.totalorder %s13, 1
    %p94 = scmp.ne.s32.totalorder %s89, %s91
    %p95 = scmp.eq.s32.totalorder %s13, 0
    %p96 = por %p94, %p95
    %p97 = scmp.ne.s32.totalorder %s89, %s91
    %p98 = scmp.eq.s32.totalorder %s18, 1
    %p99 = por %p97, %p98
    %p100 = scmp.ne.s32.totalorder %s91, %s92
    %p101 = scmp.eq.s32.totalorder %s18, 0
    %p102 = por %p100, %p101
    %p103 = scmp.ne.s32.totalorder %s91, %s92
    %p104 = scmp.eq.s32.totalorder %s19, 1
    %p105 = por %p103, %p104
    %p107 = scmp.ne.s32.totalorder %s92, %s106
    %p108 = scmp.eq.s32.totalorder %s19, 0
    %p109 = por %p107, %p108
    %s111 = sadd.s32 %s110, 1
    %p114 = scmp.eq.s32.totalorder %s13, 1
    %p115 = scmp.ne.s32.totalorder %s110, %s112
    %p116 = scmp.eq.s32.totalorder %s13, 0
    %p117 = por %p115, %p116
    %p118 = scmp.ne.s32.totalorder %s110, %s112
    %p119 = scmp.eq.s32.totalorder %s18, 1
    %p120 = por %p118, %p119
    %p121 = scmp.ne.s32.totalorder %s112, %s113
    %p122 = scmp.eq.s32.totalorder %s18, 0
    %p123 = por %p121, %p122
    %p124 = scmp.ne.s32.totalorder %s112, %s113
    %p125 = scmp.eq.s32.totalorder %s19, 1
    %p126 = por %p124, %p125
    %p128 = scmp.ne.s32.totalorder %s113, %s127
    %p129 = scmp.eq.s32.totalorder %s19, 0
    %p130 = por %p128, %p129
    %s132 = sadd.s32 %s131, 1
    %p135 = scmp.eq.s32.totalorder %s13, 1
    %p136 = scmp.ne.s32.totalorder %s131, %s133
    %p137 = scmp.eq.s32.totalorder %s13, 0
    %p138 = por %p136, %p137
    %p139 = scmp.ne.s32.totalorder %s131, %s133
    %p140 = scmp.eq.s32.totalorder %s18, 1
    %p141 = por %p139, %p140
    %p142 = scmp.ne.s32.totalorder %s133, %s134
    %p143 = scmp.eq.s32.totalorder %s18, 0
    %p144 = por %p142, %p143
    %p145 = scmp.ne.s32.totalorder %s133, %s134
    %p146 = scmp.eq.s32.totalorder %s19, 1
    %p147 = por %p145, %p146
    %p149 = scmp.ne.s32.totalorder %s134, %s148
    %p150 = scmp.eq.s32.totalorder %s19, 0
    %p151 = por %p149, %p150
    %s153 = sadd.s32 %s152, 1
    %p156 = scmp.eq.s32.totalorder %s13, 1
    %p157 = scmp.ne.s32.totalorder %s152, %s154
    %p158 = scmp.eq.s32.totalorder %s13, 0
    %p159 = por %p157, %p158
    %p160 = scmp.ne.s32.totalorder %s152, %s154
    %p161 = scmp.eq.s32.totalorder %s18, 1
    %p162 = por %p160, %p161
    %p163 = scmp.ne.s32.totalorder %s154, %s155
    %p164 = scmp.eq.s32.totalorder %s18, 0
    %p165 = por %p163, %p164
    %p166 = scmp.ne.s32.totalorder %s154, %s155
    %p167 = scmp.eq.s32.totalorder %s19, 1
    %p168 = por %p166, %p167
    %p170 = scmp.ne.s32.totalorder %s155, %s169
    %p171 = scmp.eq.s32.totalorder %s19, 0
    %p172 = por %p170, %p171
    %s173 = ssub.s32 %s13, %s20
    %p174 = scmp.eq.s32.totalorder %s173, 0
    %s176 = sadd.s32 %s175, 1
    %s177 = scalar_select %p174, %s175, %s176
    %p180 = pneg %p174
    %p181 = scmp.eq.s32.totalorder %s13, 1
    %p182 = por %p180, %p181
    %p183 = scmp.ne.s32.totalorder %s175, %s178
    %p184 = scmp.eq.s32.totalorder %s13, 0
    %p185 = por %p183, %p184
    %p186 = scmp.ne.s32.totalorder %s175, %s178
    %p187 = scmp.eq.s32.totalorder %s18, 1
    %p188 = por %p186, %p187
    %p189 = scmp.ne.s32.totalorder %s178, %s179
    %p190 = scmp.eq.s32.totalorder %s18, 0
    %p191 = por %p189, %p190
    %p192 = scmp.ne.s32.totalorder %s178, %s179
    %p193 = scmp.eq.s32.totalorder %s19, 1
    %p194 = por %p192, %p193
    %p196 = scmp.ne.s32.totalorder %s179, %s195
    %p197 = scmp.eq.s32.totalorder %s19, 0
    %p198 = por %p196, %p197
    %p199 = scmp.le.s32.totalorder 1, %s13
    %p200 = scmp.lt.s32.totalorder %s13, 3
    %p201 = pnand %p199, %p200
    %p202 = pneg %p201
    // Predicated region
    $region9: #{block_forward.2} parent=5 // pred_check
      _
    $region10: #{block_forward.2} parent=5 // pred_check_branch
      %204 = sbr.rel (%p201) target = $region12
    $region11: #{block_forward.2} parent=5 // pred_region
      %s205 = ssub.s32 %s13, 1
      // Predicated region
      $region13: #{block_forward.2} parent=11 // pred_check
        %p206 = pneg %p60
      $region14: #{block_forward.2} parent=11 // pred_check_branch
        %208 = sbr.rel (%p206) target = $region16
      $region15: #{block_forward.2} parent=11 // pred_region
        _
      $region16: #{block_forward.2} parent=11 // pred_fallthru
        _
      // Predicated region
      $region17: #{block_forward.2} parent=11 // pred_check
        %p209 = pneg %p81
      $region18: #{block_forward.2} parent=11 // pred_check_branch
        %211 = sbr.rel (%p209) target = $region20
      $region19: #{block_forward.2} parent=11 // pred_region
        _
      $region20: #{block_forward.2} parent=11 // pred_fallthru
        _
      // Predicated region
      $region21: #{block_forward.2} parent=11 // pred_check
        %p212 = pneg %p102
      $region22: #{block_forward.2} parent=11 // pred_check_branch
        %214 = sbr.rel (%p212) target = $region24
      $region23: #{block_forward.2} parent=11 // pred_region
        _
      $region24: #{block_forward.2} parent=11 // pred_fallthru
        _
      // Predicated region
      $region25: #{block_forward.2} parent=11 // pred_check
        %p215 = pneg %p123
      $region26: #{block_forward.2} parent=11 // pred_check_branch
        %217 = sbr.rel (%p215) target = $region28
      $region27: #{block_forward.2} parent=11 // pred_region
        _
      $region28: #{block_forward.2} parent=11 // pred_fallthru
        _
      // Predicated region
      $region29: #{block_forward.2} parent=11 // pred_check
        %p218 = pneg %p144
      $region30: #{block_forward.2} parent=11 // pred_check_branch
        %220 = sbr.rel (%p218) target = $region32
      $region31: #{block_forward.2} parent=11 // pred_region
        _
      $region32: #{block_forward.2} parent=11 // pred_fallthru
        _
      // Predicated region
      $region33: #{block_forward.2} parent=11 // pred_check
        %p221 = pneg %p165
      $region34: #{block_forward.2} parent=11 // pred_check_branch
        %223 = sbr.rel (%p221) target = $region36
      $region35: #{block_forward.2} parent=11 // pred_region
        _
      $region36: #{block_forward.2} parent=11 // pred_fallthru
        _
    $region12: #{block_forward.2} parent=5 // pred_fallthru
      _
    %p224 = scmp.lt.s32.totalorder %s13, 2
    // Predicated region
    $region37: #{block_forward.2} parent=5 // pred_check
      %p225 = pneg %p224
    $region38: #{block_forward.2} parent=5 // pred_check_branch
      %227 = sbr.rel (%p225) target = $region40
    $region39: #{block_forward.2} parent=5 // pred_region
      // Predicated region
      $region41: #{block_forward.2} parent=39 // pred_check
        %p228 = pneg %p33
      $region42: #{block_forward.2} parent=39 // pred_check_branch
        %230 = sbr.rel (%p228) target = $region44
      $region43: #{block_forward.2} parent=39 // pred_region
        %p231 = scmp.lt.s32.totalorder %s13, 1
        %s232 = scalar_select %p231, %s13, 1
        %s233 = smul.addr %s232, 8
        %s234 = smul.addr %s233, 8
        %s235 = scalar_lea.vmem %s0, %s234
      $region44: #{block_forward.2} parent=39 // pred_fallthru
        _
    $region40: #{block_forward.2} parent=5 // pred_fallthru
      _
    %p236 = scmp.le.s32.totalorder 1, %s13
    %p237 = scmp.lt.s32.totalorder %s13, 3
    %p238 = pnand %p236, %p237
    %p239 = pneg %p238
    // Predicated region
    $region45: #{block_forward.2} parent=5 // pred_check
      _
    $region46: #{block_forward.2} parent=5 // pred_check_branch
      %241 = sbr.rel (%p238) target = $region48
    $region47: #{block_forward.2} parent=5 // pred_region
      %s242 = ssub.s32 %s13, 1
      %p243 = scmp.lt.s32.totalorder %s18, 1
      %s244 = scalar_select %p243, %s18, 1
      %s245 = smul.addr %s244, 8
      %s246 = smul.addr %s245, 8
      %s247 = scalar_lea.vmem %s0, %s246
      %p248 = pneg %p39
      %p249 = pneg %p36
      %p250 = pneg %p60
      %p251 = pneg %p57
      %p252 = pneg %p81
      %p253 = pneg %p78
      %p254 = pneg %p102
      %p255 = pneg %p99
      %p256 = pneg %p123
      %p257 = pneg %p120
      %p258 = pneg %p144
      %p259 = pneg %p141
      %p260 = pneg %p165
      %p261 = pneg %p162
      %p262 = pneg %p191
      %p263 = pneg %p188
      %p264 = scmp.lt.s32.totalorder %s18, 1
      %s265 = scalar_select %p264, %s18, 1
      %s266 = smul.addr %s265, 8
      %s267 = smul.addr %s266, 8
      %s268 = scalar_lea.vmem %s7, %s267
      %p269 = scmp.lt.s32.totalorder %s18, 1
      %s270 = scalar_select %p269, %s18, 1
      %s271 = smul.addr %s270, 8
      %s272 = smul.addr %s271, 8
      %s273 = scalar_lea.vmem %s0, %s272
      %p274 = scmp.lt.s32.totalorder %s18, 1
      %s275 = scalar_select %p274, %s18, 1
      %s276 = smul.addr %s275, 8
      %s277 = smul.addr %s276, 8
      %s278 = scalar_lea.vmem %s7, %s277
      %v279 = vld [vmem:[%s273] sm:$0xff]
      %v280 = vld [vmem:[%s273 + $0x8] sm:$0xff]
      %v281 = vld [vmem:[%s273 + $0x10] sm:$0xff]
      %v282 = vld [vmem:[%s273 + $0x18] sm:$0xff]
      %v283 = vld [vmem:[%s273 + $0x20] sm:$0xff]
      %v284 = vld [vmem:[%s273 + $0x28] sm:$0xff]
      %v285 = vld [vmem:[%s273 + $0x30] sm:$0xff]
      %v286 = vld [vmem:[%s273 + $0x38] sm:$0xff]
      %vm287 = vcmask 261120
      %v288 = vsel %vm287, %v279, 0.0
      %289 = vadd.xlane.f32.xlu0 %v288
      %v290 = vpop.xlane.xlu0 %289
      %v291 = vsel %vm287, %v280, 0.0
      %292 = vadd.xlane.f32.xlu0 %v291
      %v293 = vpop.xlane.xlu0 %292
      %v294 = vsel %vm287, %v281, 0.0
      %295 = vadd.xlane.f32.xlu0 %v294
      %v296 = vpop.xlane.xlu0 %295
      %v297 = vsel %vm287, %v282, 0.0
      %298 = vadd.xlane.f32.xlu0 %v297
      %v299 = vpop.xlane.xlu0 %298
      %v300 = vsel %vm287, %v283, 0.0
      %301 = vadd.xlane.f32.xlu0 %v300
      %v302 = vpop.xlane.xlu0 %301
      %v303 = vsel %vm287, %v284, 0.0
      %304 = vadd.xlane.f32.xlu0 %v303
      %v305 = vpop.xlane.xlu0 %304
      %v306 = vsel %vm287, %v285, 0.0
      %307 = vadd.xlane.f32.xlu0 %v306
      %v308 = vpop.xlane.xlu0 %307
      %v309 = vsel %vm287, %v286, 0.0
      %310 = vadd.xlane.f32.xlu0 %v309
      %v311 = vpop.xlane.xlu0 %310
      %v312 = vrcp.pop 32.0
      %v313 = vmul.f32 %v290, %v312
      %v314 = vmul.f32 %v293, %v312
      %v315 = vmul.f32 %v296, %v312
      %v316 = vmul.f32 %v299, %v312
      %v317 = vmul.f32 %v302, %v312
      %v318 = vmul.f32 %v305, %v312
      %v319 = vmul.f32 %v308, %v312
      %v320 = vmul.f32 %v311, %v312
      %v321 = vsub.f32 %v279, %v313
      %v322 = vsub.f32 %v280, %v314
      %v323 = vsub.f32 %v281, %v315
      %v324 = vsub.f32 %v282, %v316
      %v325 = vsub.f32 %v283, %v317
      %v326 = vsub.f32 %v284, %v318
      %v327 = vsub.f32 %v285, %v319
      %v328 = vsub.f32 %v286, %v320
      %v329 = vmul.f32 %v321, %v321
      %v330 = vmul.f32 %v322, %v322
      %v331 = vmul.f32 %v323, %v323
      %v332 = vmul.f32 %v324, %v324
      %v333 = vmul.f32 %v325, %v325
      %v334 = vmul.f32 %v326, %v326
      %v335 = vmul.f32 %v327, %v327
      %v336 = vmul.f32 %v328, %v328
      %v337 = vsel %vm287, %v329, 0.0
      %338 = vadd.xlane.f32.xlu0 %v337
      %v339 = vpop.xlane.xlu0 %338
      %v340 = vsel %vm287, %v330, 0.0
      %341 = vadd.xlane.f32.xlu0 %v340
      %v342 = vpop.xlane.xlu0 %341
      %v343 = vsel %vm287, %v331, 0.0
      %344 = vadd.xlane.f32.xlu0 %v343
      %v345 = vpop.xlane.xlu0 %344
      %v346 = vsel %vm287, %v332, 0.0
      %347 = vadd.xlane.f32.xlu0 %v346
      %v348 = vpop.xlane.xlu0 %347
      %v349 = vsel %vm287, %v333, 0.0
      %350 = vadd.xlane.f32.xlu0 %v349
      %v351 = vpop.xlane.xlu0 %350
      %v352 = vsel %vm287, %v334, 0.0
      %353 = vadd.xlane.f32.xlu0 %v352
      %v354 = vpop.xlane.xlu0 %353
      %v355 = vsel %vm287, %v335, 0.0
      %356 = vadd.xlane.f32.xlu0 %v355
      %v357 = vpop.xlane.xlu0 %356
      %v358 = vsel %vm287, %v336, 0.0
      %359 = vadd.xlane.f32.xlu0 %v358
      %v360 = vpop.xlane.xlu0 %359
      %v361 = vmul.f32 %v339, %v312
      %v362 = vmul.f32 %v342, %v312
      %v363 = vmul.f32 %v345, %v312
      %v364 = vmul.f32 %v348, %v312
      %v365 = vmul.f32 %v351, %v312
      %v366 = vmul.f32 %v354, %v312
      %v367 = vmul.f32 %v357, %v312
      %v368 = vmul.f32 %v360, %v312
      %v369 = vadd.f32 %v361, 1e-05
      %v370 = vadd.f32 %v362, 1e-05
      %v371 = vadd.f32 %v363, 1e-05
      %v372 = vadd.f32 %v364, 1e-05
      %v373 = vadd.f32 %v365, 1e-05
      %v374 = vadd.f32 %v366, 1e-05
      %v375 = vadd.f32 %v367, 1e-05
      %v376 = vadd.f32 %v368, 1e-05
      %v377 = vrsqrt.pop %v369
      %v378 = vrsqrt.pop %v370
      %v379 = vrsqrt.pop %v371
      %v380 = vrsqrt.pop %v372
      %v381 = vrsqrt.pop %v373
      %v382 = vrsqrt.pop %v374
      %v383 = vrsqrt.pop %v375
      %v384 = vrsqrt.pop %v376
      %v385 = vmul.f32 %v321, %v377
      %v386 = vmul.f32 %v322, %v378
      %v387 = vmul.f32 %v323, %v379
      %v388 = vmul.f32 %v324, %v380
      %v389 = vmul.f32 %v325, %v381
      %v390 = vmul.f32 %v326, %v382
      %v391 = vmul.f32 %v327, %v383
      %v392 = vmul.f32 %v328, %v384
      %v393 = vld [vmem:[%s1] sm:$0x1]
      %v395 = vlaneseq
      %v396 = vshrl.u32 %v395, 7
      %v397 = vsub.s32 0, %v396
      %v398 = vrot.slane %v393, %v397
      %v400 = vmul.f32 %v385, %v398
      %v401 = vmul.f32 %v386, %v398
      %v402 = vmul.f32 %v387, %v398
      %v403 = vmul.f32 %v388, %v398
      %v404 = vmul.f32 %v389, %v398
      %v405 = vmul.f32 %v390, %v398
      %v406 = vmul.f32 %v391, %v398
      %v407 = vmul.f32 %v392, %v398
      %v408 = vld [vmem:[%s2] sm:$0x1]
      %v410 = vlaneseq
      %v411 = vshrl.u32 %v410, 7
      %v412 = vsub.s32 0, %v411
      %v413 = vrot.slane %v408, %v412
      %v415 = vadd.f32 %v400, %v413
      %v416 = vadd.f32 %v401, %v413
      %v417 = vadd.f32 %v402, %v413
      %v418 = vadd.f32 %v403, %v413
      %v419 = vadd.f32 %v404, %v413
      %v420 = vadd.f32 %v405, %v413
      %v421 = vadd.f32 %v406, %v413
      %v422 = vadd.f32 %v407, %v413
      %v423 = vld [vmem:[%s3] sm:$0xff]
      %v424 = vld [vmem:[%s3 + $0x8] sm:$0xff]
      %v425 = vld [vmem:[%s3 + $0x10] sm:$0xff]
      %v426 = vld [vmem:[%s3 + $0x18] sm:$0xff]
      %v428 = vsel %vm287, %v415, 0
      %v431 = vsel %vm287, %v416, 0
      %v434 = vsel %vm287, %v417, 0
      %v437 = vsel %vm287, %v418, 0
      %v440 = vsel %vm287, %v419, 0
      %v443 = vsel %vm287, %v420, 0
      %v446 = vsel %vm287, %v421, 0
      %v449 = vsel %vm287, %v422, 0
      %451 = vmatprep.subr.mxu0 0.0
      %452 = vmatpush1.msra.mxu0 %v423
      %453 = vmatprep.subr.mxu0 0.0
      %454 = vmatpush1.msra.mxu0 %v424
      %455 = vmatprep.subr.mxu0 0.0
      %456 = vmatpush1.msra.mxu0 %v425
      %457 = vmatprep.subr.mxu0 0.0
      %458 = vmatpush1.msra.mxu0 %v426
      %459 = vmatprep.subr.mxu0 0.0
      %460 = vmatpush1.msra.mxu0 0.0
      %461 = vmatprep.subr.mxu0 0.0
      %462 = vmatpush1.msra.mxu0 0.0
      %463 = vmatprep.subr.mxu0 0.0
      %464 = vmatpush1.msra.mxu0 0.0
      %465 = vmatprep.subr.mxu0 0.0
      %466 = vmatpush1.msra.mxu0 0.0
      %467 = vmatprep.subr.mxu0 0.0
      %468 = vmatpush1.msra.mxu0 0.0
      %469 = vmatprep.subr.mxu0 0.0
      %470 = vmatpush1.msra.mxu0 0.0
      %471 = vmatprep.subr.mxu0 0.0
      %472 = vmatpush1.msra.mxu0 0.0
      %473 = vmatprep.subr.mxu0 0.0
      %474 = vmatpush1.msra.mxu0 0.0
      %475 = vmatprep.subr.mxu0 0.0
      %476 = vmatpush1.msra.mxu0 0.0
      %477 = vmatprep.subr.mxu0 0.0
      %478 = vmatpush1.msra.mxu0 0.0
      %479 = vmatprep.subr.mxu0 0.0
      %480 = vmatpush1.msra.mxu0 0.0
      %481 = vmatprep.subr.mxu0 0.0
      %482 = vmatpush1.msra.mxu0 0.0
      %483 = vmatprep.subr.mxu0 0.0
      %484 = vmatpush1.msra.mxu0 0.0
      %485 = vmatprep.subr.mxu0 0.0
      %486 = vmatpush1.msra.mxu0 0.0
      %487 = vmatprep.subr.mxu0 0.0
      %488 = vmatpush1.msra.mxu0 0.0
      %489 = vmatprep.subr.mxu0 0.0
      %490 = vmatpush1.msra.mxu0 0.0
      %491 = vmatprep.subr.mxu0 0.0
      %492 = vmatpush1.msra.mxu0 0.0
      %493 = vmatprep.subr.mxu0 0.0
      %494 = vmatpush1.msra.mxu0 0.0
      %495 = vmatprep.subr.mxu0 0.0
      %496 = vmatpush1.msra.mxu0 0.0
      %497 = vmatprep.subr.mxu0 0.0
      %498 = vmatpush1.msra.mxu0 0.0
      %499 = vmatprep.subr.mxu0 0.0
      %500 = vmatpush1.msra.mxu0 0.0
      %501 = vmatprep.subr.mxu0 0.0
      %502 = vmatpush1.msra.mxu0 0.0
      %503 = vmatprep.subr.mxu0 0.0
      %504 = vmatpush1.msra.mxu0 0.0
      %505 = vmatprep.subr.mxu0 0.0
      %506 = vmatpush1.msra.mxu0 0.0
      %507 = vmatprep.subr.mxu0 0.0
      %508 = vmatpush1.msra.mxu0 0.0
      %509 = vmatprep.subr.mxu0 0.0
      %510 = vmatpush1.msra.mxu0 0.0
      %511 = vmatprep.subr.mxu0 0.0
      %512 = vmatpush1.msra.mxu0 0.0
      %513 = vmatprep.subr.mxu0 0.0
      %514 = vmatpush1.msra.mxu0 0.0
      %515 = vmatprep.mubr.f32.mxu0 0.0
      %516 = vmatmul.mubr.f32.gmra.mrb[0].mxu0 %v428
      %v517 = vpop.f32.mrb[0].mxu0
      %v518 = vadd.f32 0.0, %v517
      %v519 = vpop.f32.mrb[0].mxu0
      %520 = vmatprep.mubr.f32.mxu0 0.0
      %521 = vmatmul.mubr.f32.gmra.mrb[0].mxu0 %v431
      %v522 = vpop.f32.mrb[0].mxu0
      %v523 = vadd.f32 0.0, %v522
      %v524 = vpop.f32.mrb[0].mxu0
      %525 = vmatprep.mubr.f32.mxu0 0.0
      %526 = vmatmul.mubr.f32.gmra.mrb[0].mxu0 %v434
      %v527 = vpop.f32.mrb[0].mxu0
      %v528 = vadd.f32 0.0, %v527
      %v529 = vpop.f32.mrb[0].mxu0
      %530 = vmatprep.mubr.f32.mxu0 0.0
      %531 = vmatmul.mubr.f32.gmra.mrb[0].mxu0 %v437
      %v532 = vpop.f32.mrb[0].mxu0
      %v533 = vadd.f32 0.0, %v532
      %v534 = vpop.f32.mrb[0].mxu0
      %535 = vmatprep.mubr.f32.mxu0 0.0
      %536 = vmatmul.mubr.f32.gmra.mrb[0].mxu0 %v440
      %v537 = vpop.f32.mrb[0].mxu0
      %v538 = vadd.f32 0.0, %v537
      %v539 = vpop.f32.mrb[0].mxu0
      %540 = vmatprep.mubr.f32.mxu0 0.0
      %541 = vmatmul.mubr.f32.gmra.mrb[0].mxu0 %v443
      %v542 = vpop.f32.mrb[0].mxu0
      %v543 = vadd.f32 0.0, %v542
      %v544 = vpop.f32.mrb[0].mxu0
      %545 = vmatprep.mubr.f32.mxu0 0.0
      %546 = vmatmul.mubr.f32.gmra.mrb[0].mxu0 %v446
      %v547 = vpop.f32.mrb[0].mxu0
      %v548 = vadd.f32 0.0, %v547
      %v549 = vpop.f32.mrb[0].mxu0
      %550 = vmatprep.mubr.f32.mxu0 0.0
      %551 = vmatmul.mubr.f32.gmra.mrb[0].mxu0 %v449
      %v552 = vpop.f32.mrb[0].mxu0
      %v553 = vadd.f32 0.0, %v552
      %v554 = vpop.f32.mrb[0].mxu0
      %555 = vdwg.mxu0
      %v556 = vld [vmem:[%s4] sm:$0xff]
      %v557 = vld [vmem:[%s4 + $0x8] sm:$0xff]
      %v558 = vld [vmem:[%s4 + $0x10] sm:$0xff]
      %v559 = vld [vmem:[%s4 + $0x18] sm:$0xff]
      %560 = vmatprep.subr.mxu0 0.0
      %561 = vmatpush1.msra.mxu0 %v556
      %562 = vmatprep.subr.mxu0 0.0
      %563 = vmatpush1.msra.mxu0 %v557
      %564 = vmatprep.subr.mxu0 0.0
      %565 = vmatpush1.msra.mxu0 %v558
      %566 = vmatprep.subr.mxu0 0.0
      %567 = vmatpush1.msra.mxu0 %v559
      %568 = vmatprep.subr.mxu0 0.0
      %569 = vmatpush1.msra.mxu0 0.0
      %570 = vmatprep.subr.mxu0 0.0
      %571 = vmatpush1.msra.mxu0 0.0
      %572 = vmatprep.subr.mxu0 0.0
      %573 = vmatpush1.msra.mxu0 0.0
      %574 = vmatprep.subr.mxu0 0.0
      %575 = vmatpush1.msra.mxu0 0.0
      %576 = vmatprep.subr.mxu0 0.0
      %577 = vmatpush1.msra.mxu0 0.0
      %578 = vmatprep.subr.mxu0 0.0
      %579 = vmatpush1.msra.mxu0 0.0
      %580 = vmatprep.subr.mxu0 0.0
      %581 = vmatpush1.msra.mxu0 0.0
      %582 = vmatprep.subr.mxu0 0.0
      %583 = vmatpush1.msra.mxu0 0.0
      %584 = vmatprep.subr.mxu0 0.0
      %585 = vmatpush1.msra.mxu0 0.0
      %586 = vmatprep.subr.mxu0 0.0
      %587 = vmatpush1.msra.mxu0 0.0
      %588 = vmatprep.subr.mxu0 0.0
      %589 = vmatpush1.msra.mxu0 0.0
      %590 = vmatprep.subr.mxu0 0.0
      %591 = vmatpush1.msra.mxu0 0.0
      %592 = vmatprep.subr.mxu0 0.0
      %593 = vmatpush1.msra.mxu0 0.0
      %594 = vmatprep.subr.mxu0 0.0
      %595 = vmatpush1.msra.mxu0 0.0
      %596 = vmatprep.subr.mxu0 0.0
      %597 = vmatpush1.msra.mxu0 0.0
      %598 = vmatprep.subr.mxu0 0.0
      %599 = vmatpush1.msra.mxu0 0.0
      %600 = vmatprep.subr.mxu0 0.0
      %601 = vmatpush1.msra.mxu0 0.0
      %602 = vmatprep.subr.mxu0 0.0
      %603 = vmatpush1.msra.mxu0 0.0
      %604 = vmatprep.subr.mxu0 0.0
      %605 = vmatpush1.msra.mxu0 0.0
      %606 = vmatprep.subr.mxu0 0.0
      %607 = vmatpush1.msra.mxu0 0.0
      %608 = vmatprep.subr.mxu0 0.0
      %609 = vmatpush1.msra.mxu0 0.0
      %610 = vmatprep.subr.mxu0 0.0
      %611 = vmatpush1.msra.mxu0 0.0
      %612 = vmatprep.subr.mxu0 0.0
      %613 = vmatpush1.msra.mxu0 0.0
      %614 = vmatprep.subr.mxu0 0.0
      %615 = vmatpush1.msra.mxu0 0.0
      %616 = vmatprep.subr.mxu0 0.0
      %617 = vmatpush1.msra.mxu0 0.0
      %618 = vmatprep.subr.mxu0 0.0
      %619 = vmatpush1.msra.mxu0 0.0
      %620 = vmatprep.subr.mxu0 0.0
      %621 = vmatpush1.msra.mxu0 0.0
      %622 = vmatprep.subr.mxu0 0.0
      %623 = vmatpush1.msra.mxu0 0.0
      %624 = vmatprep.mubr.f32.mxu0 0.0
      %625 = vmatmul.mubr.f32.gmra.mrb[0].mxu0 %v428
      %v626 = vpop.f32.mrb[0].mxu0
      %v627 = vadd.f32 0.0, %v626
      %v628 = vpop.f32.mrb[0].mxu0
      %629 = vmatprep.mubr.f32.mxu0 0.0
      %630 = vmatmul.mubr.f32.gmra.mrb[0].mxu0 %v431
      %v631 = vpop.f32.mrb[0].mxu0
      %v632 = vadd.f32 0.0, %v631
      %v633 = vpop.f32.mrb[0].mxu0
      %634 = vmatprep.mubr.f32.mxu0 0.0
      %635 = vmatmul.mubr.f32.gmra.mrb[0].mxu0 %v434
      %v636 = vpop.f32.mrb[0].mxu0
      %v637 = vadd.f32 0.0, %v636
      %v638 = vpop.f32.mrb[0].mxu0
      %639 = vmatprep.mubr.f32.mxu0 0.0
      %640 = vmatmul.mubr.f32.gmra.mrb[0].mxu0 %v437
      %v641 = vpop.f32.mrb[0].mxu0
      %v642 = vadd.f32 0.0, %v641
      %v643 = vpop.f32.mrb[0].mxu0
      %644 = vmatprep.mubr.f32.mxu0 0.0
      %645 = vmatmul.mubr.f32.gmra.mrb[0].mxu0 %v440
      %v646 = vpop.f32.mrb[0].mxu0
      %v647 = vadd.f32 0.0, %v646
      %v648 = vpop.f32.mrb[0].mxu0
      %649 = vmatprep.mubr.f32.mxu0 0.0
      %650 = vmatmul.mubr.f32.gmra.mrb[0].mxu0 %v443
      %v651 = vpop.f32.mrb[0].mxu0
      %v652 = vadd.f32 0.0, %v651
      %v653 = vpop.f32.mrb[0].mxu0
      %654 = vmatprep.mubr.f32.mxu0 0.0
      %655 = vmatmul.mubr.f32.gmra.mrb[0].mxu0 %v446
      %v656 = vpop.f32.mrb[0].mxu0
      %v657 = vadd.f32 0.0, %v656
      %v658 = vpop.f32.mrb[0].mxu0
      %659 = vmatprep.mubr.f32.mxu0 0.0
      %660 = vmatmul.mubr.f32.gmra.mrb[0].mxu0 %v449
      %v661 = vpop.f32.mrb[0].mxu0
      %v662 = vadd.f32 0.0, %v661
      %v663 = vpop.f32.mrb[0].mxu0
      %664 = vdwg.mxu0
      %vm665 = vcmask 64512
      %v667 = vsel %vm665, %v518, 0
      %v670 = vsel %vm665, %v523, 0
      %v673 = vsel %vm665, %v528, 0
      %v676 = vsel %vm665, %v533, 0
      %v679 = vsel %vm665, %v538, 0
      %v682 = vsel %vm665, %v543, 0
      %v685 = vsel %vm665, %v548, 0
      %v688 = vsel %vm665, %v553, 0
      %v691 = vsel %vm665, %v627, 0
      %v694 = vsel %vm665, %v632, 0
      %v697 = vsel %vm665, %v637, 0
      %v700 = vsel %vm665, %v642, 0
      %v703 = vsel %vm665, %v647, 0
      %v706 = vsel %vm665, %v652, 0
      %v709 = vsel %vm665, %v657, 0
      %v712 = vsel %vm665, %v662, 0
      %714 = vmatprep.subr.mxu0 0.0
      %715 = vmatpush1.xpose.msra.mxu0 %v691
      %716 = vmatprep.subr.mxu0 0.0
      %717 = vmatpush1.xpose.msra.mxu0 %v694
      %718 = vmatprep.subr.mxu0 0.0
      %719 = vmatpush1.xpose.msra.mxu0 %v697
      %720 = vmatprep.subr.mxu0 0.0
      %721 = vmatpush1.xpose.msra.mxu0 %v700
      %722 = vmatprep.subr.mxu0 0.0
      %723 = vmatpush1.xpose.msra.mxu0 %v703
      %724 = vmatprep.subr.mxu0 0.0
      %725 = vmatpush1.xpose.msra.mxu0 %v706
      %726 = vmatprep.subr.mxu0 0.0
      %727 = vmatpush1.xpose.msra.mxu0 %v709
      %728 = vmatprep.subr.mxu0 0.0
      %729 = vmatpush1.xpose.msra.mxu0 %v712
      %730 = vmatprep.subr.mxu0 0.0
      %731 = vmatpush1.xpose.msra.mxu0 0.0
      %732 = vmatprep.subr.mxu0 0.0
      %733 = vmatpush1.xpose.msra.mxu0 0.0
      %734 = vmatprep.subr.mxu0 0.0
      %735 = vmatpush1.xpose.msra.mxu0 0.0
      %736 = vmatprep.subr.mxu0 0.0
      %737 = vmatpush1.xpose.msra.mxu0 0.0
      %738 = vmatprep.subr.mxu0 0.0
      %739 = vmatpush1.xpose.msra.mxu0 0.0
      %740 = vmatprep.subr.mxu0 0.0
      %741 = vmatpush1.xpose.msra.mxu0 0.0
      %742 = vmatprep.subr.mxu0 0.0
      %743 = vmatpush1.xpose.msra.mxu0 0.0
      %744 = vmatprep.subr.mxu0 0.0
      %745 = vmatpush1.xpose.msra.mxu0 0.0
      %746 = vmatprep.subr.mxu0 0.0
      %747 = vmatpush1.xpose.msra.mxu0 0.0
      %748 = vmatprep.subr.mxu0 0.0
      %749 = vmatpush1.xpose.msra.mxu0 0.0
      %750 = vmatprep.subr.mxu0 0.0
      %751 = vmatpush1.xpose.msra.mxu0 0.0
      %752 = vmatprep.subr.mxu0 0.0
      %753 = vmatpush1.xpose.msra.mxu0 0.0
      %754 = vmatprep.subr.mxu0 0.0
      %755 = vmatpush1.xpose.msra.mxu0 0.0
      %756 = vmatprep.subr.mxu0 0.0
      %757 = vmatpush1.xpose.msra.mxu0 0.0
      %758 = vmatprep.subr.mxu0 0.0
      %759 = vmatpush1.xpose.msra.mxu0 0.0
      %760 = vmatprep.subr.mxu0 0.0
      %761 = vmatpush1.xpose.msra.mxu0 0.0
      %762 = vmatprep.subr.mxu0 0.0
      %763 = vmatpush1.xpose.msra.mxu0 0.0
      %764 = vmatprep.subr.mxu0 0.0
      %765 = vmatpush1.xpose.msra.mxu0 0.0
      %766 = vmatprep.subr.mxu0 0.0
      %767 = vmatpush1.xpose.msra.mxu0 0.0
      %768 = vmatprep.subr.mxu0 0.0
      %769 = vmatpush1.xpose.msra.mxu0 0.0
      %770 = vmatprep.subr.mxu0 0.0
      %771 = vmatpush1.xpose.msra.mxu0 0.0
      %772 = vmatprep.subr.mxu0 0.0
      %773 = vmatpush1.xpose.msra.mxu0 0.0
      %774 = vmatprep.subr.mxu0 0.0
      %775 = vmatpush1.xpose.msra.mxu0 0.0
      %776 = vmatprep.subr.mxu0 0.0
      %777 = vmatpush1.xpose.msra.mxu0 0.0
      %778 = vmatprep.mubr.f32.mxu0 0.0
      %779 = vmatmul.mubr.f32.gmra.mrb[0].mxu0 %v667
      %v780 = vpop.f32.mrb[0].mxu0
      %v781 = vadd.f32 0.0, %v780
      %v782 = vpop.f32.mrb[0].mxu0
      %783 = vmatprep.mubr.f32.mxu0 0.0
      %784 = vmatmul.mubr.f32.gmra.mrb[0].mxu0 %v670
      %v785 = vpop.f32.mrb[0].mxu0
      %v786 = vadd.f32 0.0, %v785
      %v787 = vpop.f32.mrb[0].mxu0
      %788 = vmatprep.mubr.f32.mxu0 0.0
      %789 = vmatmul.mubr.f32.gmra.mrb[0].mxu0 %v673
      %v790 = vpop.f32.mrb[0].mxu0
      %v791 = vadd.f32 0.0, %v790
      %v792 = vpop.f32.mrb[0].mxu0
      %793 = vmatprep.mubr.f32.mxu0 0.0
      %794 = vmatmul.mubr.f32.gmra.mrb[0].mxu0 %v676
      %v795 = vpop.f32.mrb[0].mxu0
      %v796 = vadd.f32 0.0, %v795
      %v797 = vpop.f32.mrb[0].mxu0
      %798 = vmatprep.mubr.f32.mxu0 0.0
      %799 = vmatmul.mubr.f32.gmra.mrb[0].mxu0 %v679
      %v800 = vpop.f32.mrb[0].mxu0
      %v801 = vadd.f32 0.0, %v800
      %v802 = vpop.f32.mrb[0].mxu0
      %803 = vmatprep.mubr.f32.mxu0 0.0
      %804 = vmatmul.mubr.f32.gmra.mrb[0].mxu0 %v682
      %v805 = vpop.f32.mrb[0].mxu0
      %v806 = vadd.f32 0.0, %v805
      %v807 = vpop.f32.mrb[0].mxu0
      %808 = vmatprep.mubr.f32.mxu0 0.0
      %809 = vmatmul.mubr.f32.gmra.mrb[0].mxu0 %v685
      %v810 = vpop.f32.mrb[0].mxu0
      %v811 = vadd.f32 0.0, %v810
      %v812 = vpop.f32.mrb[0].mxu0
      %813 = vmatprep.mubr.f32.mxu0 0.0
      %814 = vmatmul.mubr.f32.gmra.mrb[0].mxu0 %v688
      %v815 = vpop.f32.mrb[0].mxu0
      %v816 = vadd.f32 0.0, %v815
      %v817 = vpop.f32.mrb[0].mxu0
      %818 = vdwg.mxu0
      %v819 = vmul.f32 %v781, 0.35355338
      %v820 = vmul.f32 %v786, 0.35355338
      %v821 = vmul.f32 %v791, 0.35355338
      %v822 = vmul.f32 %v796, 0.35355338
      %v823 = vmul.f32 %v801, 0.35355338
      %v824 = vmul.f32 %v806, 0.35355338
      %v825 = vmul.f32 %v811, 0.35355338
      %v826 = vmul.f32 %v816, 0.35355338
      %vm827 = vcmask 523264
      %v828 = vsel %vm827, %v819, -inf
      %829 = vmax.xlane.f32.xlu0 %v828
      %v830 = vpop.xlane.xlu0 %829
      %v831 = vsel %vm827, %v820, -inf
      %832 = vmax.xlane.f32.xlu0 %v831
      %v833 = vpop.xlane.xlu0 %832
      %v834 = vsel %vm827, %v821, -inf
      %835 = vmax.xlane.f32.xlu0 %v834
      %v836 = vpop.xlane.xlu0 %835
      %v837 = vsel %vm827, %v822, -inf
      %838 = vmax.xlane.f32.xlu0 %v837
      %v839 = vpop.xlane.xlu0 %838
      %v840 = vsel %vm827, %v823, -inf
      %841 = vmax.xlane.f32.xlu0 %v840
      %v842 = vpop.xlane.xlu0 %841
      %v843 = vsel %vm827, %v824, -inf
      %844 = vmax.xlane.f32.xlu0 %v843
      %v845 = vpop.xlane.xlu0 %844
      %v846 = vsel %vm827, %v825, -inf
      %847 = vmax.xlane.f32.xlu0 %v846
      %v848 = vpop.xlane.xlu0 %847
      %v849 = vsel %vm827, %v826, -inf
      %850 = vmax.xlane.f32.xlu0 %v849
      %v851 = vpop.xlane.xlu0 %850
      %v852 = vsub.f32 %v819, %v830
      %v853 = vsub.f32 %v820, %v833
      %v854 = vsub.f32 %v821, %v836
      %v855 = vsub.f32 %v822, %v839
      %v856 = vsub.f32 %v823, %v842
      %v857 = vsub.f32 %v824, %v845
      %v858 = vsub.f32 %v825, %v848
      %v859 = vsub.f32 %v826, %v851
      %v860 = vmul.f32 %v852, 1.442695
      %v861 = vpow.pop %v860
      %v862 = vmul.f32 %v853, 1.442695
      %v863 = vpow.pop %v862
      %v864 = vmul.f32 %v854, 1.442695
      %v865 = vpow.pop %v864
      %v866 = vmul.f32 %v855, 1.442695
      %v867 = vpow.pop %v866
      %v868 = vmul.f32 %v856, 1.442695
      %v869 = vpow.pop %v868
      %v870 = vmul.f32 %v857, 1.442695
      %v871 = vpow.pop %v870
      %v872 = vmul.f32 %v858, 1.442695
      %v873 = vpow.pop %v872
      %v874 = vmul.f32 %v859, 1.442695
      %v875 = vpow.pop %v874
      %v876 = vsel %vm827, %v861, 0.0
      %877 = vadd.xlane.f32.xlu0 %v876
      %v878 = vpop.xlane.xlu0 %877
      %v879 = vsel %vm827, %v863, 0.0
      %880 = vadd.xlane.f32.xlu0 %v879
      %v881 = vpop.xlane.xlu0 %880
      %v882 = vsel %vm827, %v865, 0.0
      %883 = vadd.xlane.f32.xlu0 %v882
      %v884 = vpop.xlane.xlu0 %883
      %v885 = vsel %vm827, %v867, 0.0
      %886 = vadd.xlane.f32.xlu0 %v885
      %v887 = vpop.xlane.xlu0 %886
      %v888 = vsel %vm827, %v869, 0.0
      %889 = vadd.xlane.f32.xlu0 %v888
      %v890 = vpop.xlane.xlu0 %889
      %v891 = vsel %vm827, %v871, 0.0
      %892 = vadd.xlane.f32.xlu0 %v891
      %v893 = vpop.xlane.xlu0 %892
      %v894 = vsel %vm827, %v873, 0.0
      %895 = vadd.xlane.f32.xlu0 %v894
      %v896 = vpop.xlane.xlu0 %895
      %v897 = vsel %vm827, %v875, 0.0
      %898 = vadd.xlane.f32.xlu0 %v897
      %v899 = vpop.xlane.xlu0 %898
      %v900 = vrcp.pop %v878
      %v901 = vrcp.pop %v881
      %v902 = vrcp.pop %v884
      %v903 = vrcp.pop %v887
      %v904 = vrcp.pop %v890
      %v905 = vrcp.pop %v893
      %v906 = vrcp.pop %v896
      %v907 = vrcp.pop %v899
      %908 = vrot.lane.b32.xlu0 %v627, 96
      %v909 = vpop.permute.xlu0 %908
      %910 = vrot.lane.b32.xlu0 %v632, 96
      %v911 = vpop.permute.xlu0 %910
      %912 = vrot.lane.b32.xlu0 %v637, 96
      %v913 = vpop.permute.xlu0 %912
      %914 = vrot.lane.b32.xlu0 %v642, 96
      %v915 = vpop.permute.xlu0 %914
      %916 = vrot.lane.b32.xlu0 %v647, 96
      %v917 = vpop.permute.xlu0 %916
      %918 = vrot.lane.b32.xlu0 %v652, 96
      %v919 = vpop.permute.xlu0 %918
      %920 = vrot.lane.b32.xlu0 %v657, 96
      %v921 = vpop.permute.xlu0 %920
      %922 = vrot.lane.b32.xlu0 %v662, 96
      %v923 = vpop.permute.xlu0 %922
      %v933 = vsel %vm827, %v861, 0
      %v936 = vsel %vm827, %v863, 0
      %v939 = vsel %vm827, %v865, 0
      %v942 = vsel %vm827, %v867, 0
      %v945 = vsel %vm827, %v869, 0
      %v948 = vsel %vm827, %v871, 0
      %v951 = vsel %vm827, %v873, 0
      %v954 = vsel %vm827, %v875, 0
      %956 = vmatprep.subr.mxu0 0.0
      %957 = vmatpush1.msra.mxu0 %v909
      %958 = vmatprep.subr.mxu0 0.0
      %959 = vmatpush1.msra.mxu0 %v911
      %960 = vmatprep.subr.mxu0 0.0
      %961 = vmatpush1.msra.mxu0 %v913
      %962 = vmatprep.subr.mxu0 0.0
      %963 = vmatpush1.msra.mxu0 %v915
      %964 = vmatprep.subr.mxu0 0.0
      %965 = vmatpush1.msra.mxu0 %v917
      %966 = vmatprep.subr.mxu0 0.0
      %967 = vmatpush1.msra.mxu0 %v919
      %968 = vmatprep.subr.mxu0 0.0
      %969 = vmatpush1.msra.mxu0 %v921
      %970 = vmatprep.subr.mxu0 0.0
      %971 = vmatpush1.msra.mxu0 %v923
      %972 = vmatprep.subr.mxu0 0.0
      %973 = vmatpush1.msra.mxu0 0.0
      %974 = vmatprep.subr.mxu0 0.0
      %975 = vmatpush1.msra.mxu0 0.0
      %976 = vmatprep.subr.mxu0 0.0
      %977 = vmatpush1.msra.mxu0 0.0
      %978 = vmatprep.subr.mxu0 0.0
      %979 = vmatpush1.msra.mxu0 0.0
      %980 = vmatprep.subr.mxu0 0.0
      %981 = vmatpush1.msra.mxu0 0.0
      %982 = vmatprep.subr.mxu0 0.0
      %983 = vmatpush1.msra.mxu0 0.0
      %984 = vmatprep.subr.mxu0 0.0
      %985 = vmatpush1.msra.mxu0 0.0
      %986 = vmatprep.subr.mxu0 0.0
      %987 = vmatpush1.msra.mxu0 0.0
      %988 = vmatprep.subr.mxu0 0.0
      %989 = vmatpush1.msra.mxu0 0.0
      %990 = vmatprep.subr.mxu0 0.0
      %991 = vmatpush1.msra.mxu0 0.0
      %992 = vmatprep.subr.mxu0 0.0
      %993 = vmatpush1.msra.mxu0 0.0
      %994 = vmatprep.subr.mxu0 0.0
      %995 = vmatpush1.msra.mxu0 0.0
      %996 = vmatprep.subr.mxu0 0.0
      %997 = vmatpush1.msra.mxu0 0.0
      %998 = vmatprep.subr.mxu0 0.0
      %999 = vmatpush1.msra.mxu0 0.0
      %1000 = vmatprep.subr.mxu0 0.0
      %1001 = vmatpush1.msra.mxu0 0.0
      %1002 = vmatprep.subr.mxu0 0.0
      %1003 = vmatpush1.msra.mxu0 0.0
      %1004 = vmatprep.subr.mxu0 0.0
      %1005 = vmatpush1.msra.mxu0 0.0
      %1006 = vmatprep.subr.mxu0 0.0
      %1007 = vmatpush1.msra.mxu0 0.0
      %1008 = vmatprep.subr.mxu0 0.0
      %1009 = vmatpush1.msra.mxu0 0.0
      %1010 = vmatprep.subr.mxu0 0.0
      %1011 = vmatpush1.msra.mxu0 0.0
      %1012 = vmatprep.subr.mxu0 0.0
      %1013 = vmatpush1.msra.mxu0 0.0
      %1014 = vmatprep.subr.mxu0 0.0
      %1015 = vmatpush1.msra.mxu0 0.0
      %1016 = vmatprep.subr.mxu0 0.0
      %1017 = vmatpush1.msra.mxu0 0.0
      %1018 = vmatprep.subr.mxu0 0.0
      %1019 = vmatpush1.msra.mxu0 0.0
      %1020 = vmatprep.mubr.f32.mxu0 0.0
      %1021 = vmatmul.mubr.f32.gmra.mrb[0].mxu0 %v933
      %v1022 = vpop.f32.mrb[0].mxu0
      %v1023 = vadd.f32 0.0, %v1022
      %v1024 = vpop.f32.mrb[0].mxu0
      %1025 = vmatprep.mubr.f32.mxu0 0.0
      %1026 = vmatmul.mubr.f32.gmra.mrb[0].mxu0 %v936
      %v1027 = vpop.f32.mrb[0].mxu0
      %v1028 = vadd.f32 0.0, %v1027
      %v1029 = vpop.f32.mrb[0].mxu0
      %1030 = vmatprep.mubr.f32.mxu0 0.0
      %1031 = vmatmul.mubr.f32.gmra.mrb[0].mxu0 %v939
      %v1032 = vpop.f32.mrb[0].mxu0
      %v1033 = vadd.f32 0.0, %v1032
      %v1034 = vpop.f32.mrb[0].mxu0
      %1035 = vmatprep.mubr.f32.mxu0 0.0
      %1036 = vmatmul.mubr.f32.gmra.mrb[0].mxu0 %v942
      %v1037 = vpop.f32.mrb[0].mxu0
      %v1038 = vadd.f32 0.0, %v1037
      %v1039 = vpop.f32.mrb[0].mxu0
      %1040 = vmatprep.mubr.f32.mxu0 0.0
      %1041 = vmatmul.mubr.f32.gmra.mrb[0].mxu0 %v945
      %v1042 = vpop.f32.mrb[0].mxu0
      %v1043 = vadd.f32 0.0, %v1042
      %v1044 = vpop.f32.mrb[0].mxu0
      %1045 = vmatprep.mubr.f32.mxu0 0.0
      %1046 = vmatmul.mubr.f32.gmra.mrb[0].mxu0 %v948
      %v1047 = vpop.f32.mrb[0].mxu0
      %v1048 = vadd.f32 0.0, %v1047
      %v1049 = vpop.f32.mrb[0].mxu0
      %1050 = vmatprep.mubr.f32.mxu0 0.0
      %1051 = vmatmul.mubr.f32.gmra.mrb[0].mxu0 %v951
      %v1052 = vpop.f32.mrb[0].mxu0
      %v1053 = vadd.f32 0.0, %v1052
      %v1054 = vpop.f32.mrb[0].mxu0
      %1055 = vmatprep.mubr.f32.mxu0 0.0
      %1056 = vmatmul.mubr.f32.gmra.mrb[0].mxu0 %v954
      %v1057 = vpop.f32.mrb[0].mxu0
      %v1058 = vadd.f32 0.0, %v1057
      %v1059 = vpop.f32.mrb[0].mxu0
      %1060 = vdwg.mxu0
      %v1061 = vmul.f32 %v1023, %v900
      %v1062 = vmul.f32 %v1028, %v901
      %v1063 = vmul.f32 %v1033, %v902
      %v1064 = vmul.f32 %v1038, %v903
      %v1065 = vmul.f32 %v1043, %v904
      %v1066 = vmul.f32 %v1048, %v905
      %v1067 = vmul.f32 %v1053, %v906
      %v1068 = vmul.f32 %v1058, %v907
      %v1069 = vld [vmem:[%s5] sm:$0xff]
      %1070 = vrot.lane.b32.xlu0 %v518, 120
      %v1071 = vpop.permute.xlu0 %1070
      %1072 = vrot.lane.b32.xlu0 %v523, 120
      %v1073 = vpop.permute.xlu0 %1072
      %1074 = vrot.lane.b32.xlu0 %v528, 120
      %v1075 = vpop.permute.xlu0 %1074
      %1076 = vrot.lane.b32.xlu0 %v533, 120
      %v1077 = vpop.permute.xlu0 %1076
      %1078 = vrot.lane.b32.xlu0 %v538, 120
      %v1079 = vpop.permute.xlu0 %1078
      %1080 = vrot.lane.b32.xlu0 %v543, 120
      %v1081 = vpop.permute.xlu0 %1080
      %1082 = vrot.lane.b32.xlu0 %v548, 120
      %v1083 = vpop.permute.xlu0 %1082
      %1084 = vrot.lane.b32.xlu0 %v553, 120
      %v1085 = vpop.permute.xlu0 %1084
      %1086 = vrot.lane.b32.xlu0 %v627, 120
      %v1087 = vpop.permute.xlu0 %1086
      %1088 = vrot.lane.b32.xlu0 %v632, 120
      %v1089 = vpop.permute.xlu0 %1088
      %1090 = vrot.lane.b32.xlu0 %v637, 120
      %v1091 = vpop.permute.xlu0 %1090
      %1092 = vrot.lane.b32.xlu0 %v642, 120
      %v1093 = vpop.permute.xlu0 %1092
      %1094 = vrot.lane.b32.xlu0 %v647, 120
      %v1095 = vpop.permute.xlu0 %1094
      %1096 = vrot.lane.b32.xlu0 %v652, 120
      %v1097 = vpop.permute.xlu0 %1096
      %1098 = vrot.lane.b32.xlu0 %v657, 120
      %v1099 = vpop.permute.xlu0 %1098
      %1100 = vrot.lane.b32.xlu0 %v662, 120
      %v1101 = vpop.permute.xlu0 %1100
      %v1102 = vsel %vm665, %v1071, 0
      %v1104 = vsel %vm665, %v1073, 0
      %v1106 = vsel %vm665, %v1075, 0
      %v1108 = vsel %vm665, %v1077, 0
      %v1110 = vsel %vm665, %v1079, 0
      %v1112 = vsel %vm665, %v1081, 0
      %v1114 = vsel %vm665, %v1083, 0
      %v1116 = vsel %vm665, %v1085, 0
      %v1118 = vsel %vm665, %v1087, 0
      %v1120 = vsel %vm665, %v1089, 0
      %v1122 = vsel %vm665, %v1091, 0
      %v1124 = vsel %vm665, %v1093, 0
      %v1126 = vsel %vm665, %v1095, 0
      %v1128 = vsel %vm665, %v1097, 0
      %v1130 = vsel %vm665, %v1099, 0
      %v1132 = vsel %vm665, %v1101, 0
      %1134 = vmatprep.subr.mxu0 0.0
      %1135 = vmatpush1.xpose.msra.mxu0 %v1118
      %1136 = vmatprep.subr.mxu0 0.0
      %1137 = vmatpush1.xpose.msra.mxu0 %v1120
      %1138 = vmatprep.subr.mxu0 0.0
      %1139 = vmatpush1.xpose.msra.mxu0 %v1122
      %1140 = vmatprep.subr.mxu0 0.0
      %1141 = vmatpush1.xpose.msra.mxu0 %v1124
      %1142 = vmatprep.subr.mxu0 0.0
      %1143 = vmatpush1.xpose.msra.mxu0 %v1126
      %1144 = vmatprep.subr.mxu0 0.0
      %1145 = vmatpush1.xpose.msra.mxu0 %v1128
      %1146 = vmatprep.subr.mxu0 0.0
      %1147 = vmatpush1.xpose.msra.mxu0 %v1130
      %1148 = vmatprep.subr.mxu0 0.0
      %1149 = vmatpush1.xpose.msra.mxu0 %v1132
      %1150 = vmatprep.subr.mxu0 0.0
      %1151 = vmatpush1.xpose.msra.mxu0 0.0
      %1152 = vmatprep.subr.mxu0 0.0
      %1153 = vmatpush1.xpose.msra.mxu0 0.0
      %1154 = vmatprep.subr.mxu0 0.0
      %1155 = vmatpush1.xpose.msra.mxu0 0.0
      %1156 = vmatprep.subr.mxu0 0.0
      %1157 = vmatpush1.xpose.msra.mxu0 0.0
      %1158 = vmatprep.subr.mxu0 0.0
      %1159 = vmatpush1.xpose.msra.mxu0 0.0
      %1160 = vmatprep.subr.mxu0 0.0
      %1161 = vmatpush1.xpose.msra.mxu0 0.0
      %1162 = vmatprep.subr.mxu0 0.0
      %1163 = vmatpush1.xpose.msra.mxu0 0.0
      %1164 = vmatprep.subr.mxu0 0.0
      %1165 = vmatpush1.xpose.msra.mxu0 0.0
      %1166 = vmatprep.subr.mxu0 0.0
      %1167 = vmatpush1.xpose.msra.mxu0 0.0
      %1168 = vmatprep.subr.mxu0 0.0
      %1169 = vmatpush1.xpose.msra.mxu0 0.0
      %1170 = vmatprep.subr.mxu0 0.0
      %1171 = vmatpush1.xpose.msra.mxu0 0.0
      %1172 = vmatprep.subr.mxu0 0.0
      %1173 = vmatpush1.xpose.msra.mxu0 0.0
      %1174 = vmatprep.subr.mxu0 0.0
      %1175 = vmatpush1.xpose.msra.mxu0 0.0
      %1176 = vmatprep.subr.mxu0 0.0
      %1177 = vmatpush1.xpose.msra.mxu0 0.0
      %1178 = vmatprep.subr.mxu0 0.0
      %1179 = vmatpush1.xpose.msra.mxu0 0.0
      %1180 = vmatprep.subr.mxu0 0.0
      %1181 = vmatpush1.xpose.msra.mxu0 0.0
      %1182 = vmatprep.subr.mxu0 0.0
      %1183 = vmatpush1.xpose.msra.mxu0 0.0
      %1184 = vmatprep.subr.mxu0 0.0
      %1185 = vmatpush1.xpose.msra.mxu0 0.0
      %1186 = vmatprep.subr.mxu0 0.0
      %1187 = vmatpush1.xpose.msra.mxu0 0.0
      %1188 = vmatprep.subr.mxu0 0.0
      %1189 = vmatpush1.xpose.msra.mxu0 0.0
      %1190 = vmatprep.subr.mxu0 0.0
      %1191 = vmatpush1.xpose.msra.mxu0 0.0
      %1192 = vmatprep.subr.mxu0 0.0
      %1193 = vmatpush1.xpose.msra.mxu0 0.0
      %1194 = vmatprep.subr.mxu0 0.0
      %1195 = vmatpush1.xpose.msra.mxu0 0.0
      %1196 = vmatprep.subr.mxu0 0.0
      %1197 = vmatpush1.xpose.msra.mxu0 0.0
      %1198 = vmatprep.mubr.f32.mxu0 0.0
      %1199 = vmatmul.mubr.f32.gmra.mrb[0].mxu0 %v1102
      %v1200 = vpop.f32.mrb[0].mxu0
      %v1201 = vadd.f32 0.0, %v1200
      %v1202 = vpop.f32.mrb[0].mxu0
      %1203 = vmatprep.mubr.f32.mxu0 0.0
      %1204 = vmatmul.mubr.f32.gmra.mrb[0].mxu0 %v1104
      %v1205 = vpop.f32.mrb[0].mxu0
      %v1206 = vadd.f32 0.0, %v1205
      %v1207 = vpop.f32.mrb[0].mxu0
      %1208 = vmatprep.mubr.f32.mxu0 0.0
      %1209 = vmatmul.mubr.f32.gmra.mrb[0].mxu0 %v1106
      %v1210 = vpop.f32.mrb[0].mxu0
      %v1211 = vadd.f32 0.0, %v1210
      %v1212 = vpop.f32.mrb[0].mxu0
      %1213 = vmatprep.mubr.f32.mxu0 0.0
      %1214 = vmatmul.mubr.f32.gmra.mrb[0].mxu0 %v1108
      %v1215 = vpop.f32.mrb[0].mxu0
      %v1216 = vadd.f32 0.0, %v1215
      %v1217 = vpop.f32.mrb[0].mxu0
      %1218 = vmatprep.mubr.f32.mxu0 0.0
      %1219 = vmatmul.mubr.f32.gmra.mrb[0].mxu0 %v1110
      %v1220 = vpop.f32.mrb[0].mxu0
      %v1221 = vadd.f32 0.0, %v1220
      %v1222 = vpop.f32.mrb[0].mxu0
      %1223 = vmatprep.mubr.f32.mxu0 0.0
      %1224 = vmatmul.mubr.f32.gmra.mrb[0].mxu0 %v1112
      %v1225 = vpop.f32.mrb[0].mxu0
      %v1226 = vadd.f32 0.0, %v1225
      %v1227 = vpop.f32.mrb[0].mxu0
      %1228 = vmatprep.mubr.f32.mxu0 0.0
      %1229 = vmatmul.mubr.f32.gmra.mrb[0].mxu0 %v1114
      %v1230 = vpop.f32.mrb[0].mxu0
      %v1231 = vadd.f32 0.0, %v1230
      %v1232 = vpop.f32.mrb[0].mxu0
      %1233 = vmatprep.mubr.f32.mxu0 0.0
      %1234 = vmatmul.mubr.f32.gmra.mrb[0].mxu0 %v1116
      %v1235 = vpop.f32.mrb[0].mxu0
      %v1236 = vadd.f32 0.0, %v1235
      %v1237 = vpop.f32.mrb[0].mxu0
      %1238 = vdwg.mxu0
      %v1239 = vmul.f32 %v1201, 0.35355338
      %v1240 = vmul.f32 %v1206, 0.35355338
      %v1241 = vmul.f32 %v1211, 0.35355338
      %v1242 = vmul.f32 %v1216, 0.35355338
      %v1243 = vmul.f32 %v1221, 0.35355338
      %v1244 = vmul.f32 %v1226, 0.35355338
      %v1245 = vmul.f32 %v1231, 0.35355338
      %v1246 = vmul.f32 %v1236, 0.35355338
      %v1247 = vsel %vm827, %v1239, -inf
      %1248 = vmax.xlane.f32.xlu0 %v1247
      %v1249 = vpop.xlane.xlu0 %1248
      %v1250 = vsel %vm827, %v1240, -inf
      %1251 = vmax.xlane.f32.xlu0 %v1250
      %v1252 = vpop.xlane.xlu0 %1251
      %v1253 = vsel %vm827, %v1241, -inf
      %1254 = vmax.xlane.f32.xlu0 %v1253
      %v1255 = vpop.xlane.xlu0 %1254
      %v1256 = vsel %vm827, %v1242, -inf
      %1257 = vmax.xlane.f32.xlu0 %v1256
      %v1258 = vpop.xlane.xlu0 %1257
      %v1259 = vsel %vm827, %v1243, -inf
      %1260 = vmax.xlane.f32.xlu0 %v1259
      %v1261 = vpop.xlane.xlu0 %1260
      %v1262 = vsel %vm827, %v1244, -inf
      %1263 = vmax.xlane.f32.xlu0 %v1262
      %v1264 = vpop.xlane.xlu0 %1263
      %v1265 = vsel %vm827, %v1245, -inf
      %1266 = vmax.xlane.f32.xlu0 %v1265
      %v1267 = vpop.xlane.xlu0 %1266
      %v1268 = vsel %vm827, %v1246, -inf
      %1269 = vmax.xlane.f32.xlu0 %v1268
      %v1270 = vpop.xlane.xlu0 %1269
      %v1271 = vsub.f32 %v1239, %v1249
      %v1272 = vsub.f32 %v1240, %v1252
      %v1273 = vsub.f32 %v1241, %v1255
      %v1274 = vsub.f32 %v1242, %v1258
      %v1275 = vsub.f32 %v1243, %v1261
      %v1276 = vsub.f32 %v1244, %v1264
      %v1277 = vsub.f32 %v1245, %v1267
      %v1278 = vsub.f32 %v1246, %v1270
      %v1279 = vmul.f32 %v1271, 1.442695
      %v1280 = vpow.pop %v1279
      %v1281 = vmul.f32 %v1272, 1.442695
      %v1282 = vpow.pop %v1281
      %v1283 = vmul.f32 %v1273, 1.442695
      %v1284 = vpow.pop %v1283
      %v1285 = vmul.f32 %v1274, 1.442695
      %v1286 = vpow.pop %v1285
      %v1287 = vmul.f32 %v1275, 1.442695
      %v1288 = vpow.pop %v1287
      %v1289 = vmul.f32 %v1276, 1.442695
      %v1290 = vpow.pop %v1289
      %v1291 = vmul.f32 %v1277, 1.442695
      %v1292 = vpow.pop %v1291
      %v1293 = vmul.f32 %v1278, 1.442695
      %v1294 = vpow.pop %v1293
      %v1295 = vsel %vm827, %v1280, 0.0
      %1296 = vadd.xlane.f32.xlu0 %v1295
      %v1297 = vpop.xlane.xlu0 %1296
      %v1298 = vsel %vm827, %v1282, 0.0
      %1299 = vadd.xlane.f32.xlu0 %v1298
      %v1300 = vpop.xlane.xlu0 %1299
      %v1301 = vsel %vm827, %v1284, 0.0
      %1302 = vadd.xlane.f32.xlu0 %v1301
      %v1303 = vpop.xlane.xlu0 %1302
      %v1304 = vsel %vm827, %v1286, 0.0
      %1305 = vadd.xlane.f32.xlu0 %v1304
      %v1306 = vpop.xlane.xlu0 %1305
      %v1307 = vsel %vm827, %v1288, 0.0
      %1308 = vadd.xlane.f32.xlu0 %v1307
      %v1309 = vpop.xlane.xlu0 %1308
      %v1310 = vsel %vm827, %v1290, 0.0
      %1311 = vadd.xlane.f32.xlu0 %v1310
      %v1312 = vpop.xlane.xlu0 %1311
      %v1313 = vsel %vm827, %v1292, 0.0
      %1314 = vadd.xlane.f32.xlu0 %v1313
      %v1315 = vpop.xlane.xlu0 %1314
      %v1316 = vsel %vm827, %v1294, 0.0
      %1317 = vadd.xlane.f32.xlu0 %v1316
      %v1318 = vpop.xlane.xlu0 %1317
      %v1319 = vrcp.pop %v1297
      %v1320 = vrcp.pop %v1300
      %v1321 = vrcp.pop %v1303
      %v1322 = vrcp.pop %v1306
      %v1323 = vrcp.pop %v1309
      %v1324 = vrcp.pop %v1312
      %v1325 = vrcp.pop %v1315
      %v1326 = vrcp.pop %v1318
      %1327 = vrot.lane.b32.xlu0 %v627, 88
      %v1328 = vpop.permute.xlu0 %1327
      %1329 = vrot.lane.b32.xlu0 %v632, 88
      %v1330 = vpop.permute.xlu0 %1329
      %1331 = vrot.lane.b32.xlu0 %v637, 88
      %v1332 = vpop.permute.xlu0 %1331
      %1333 = vrot.lane.b32.xlu0 %v642, 88
      %v1334 = vpop.permute.xlu0 %1333
      %1335 = vrot.lane.b32.xlu0 %v647, 88
      %v1336 = vpop.permute.xlu0 %1335
      %1337 = vrot.lane.b32.xlu0 %v652, 88
      %v1338 = vpop.permute.xlu0 %1337
      %1339 = vrot.lane.b32.xlu0 %v657, 88
      %v1340 = vpop.permute.xlu0 %1339
      %1341 = vrot.lane.b32.xlu0 %v662, 88
      %v1342 = vpop.permute.xlu0 %1341
      %v1352 = vsel %vm827, %v1280, 0
      %v1355 = vsel %vm827, %v1282, 0
      %v1358 = vsel %vm827, %v1284, 0
      %v1361 = vsel %vm827, %v1286, 0
      %v1364 = vsel %vm827, %v1288, 0
      %v1367 = vsel %vm827, %v1290, 0
      %v1370 = vsel %vm827, %v1292, 0
      %v1373 = vsel %vm827, %v1294, 0
      %1375 = vmatprep.subr.mxu0 0.0
      %1376 = vmatpush1.msra.mxu0 %v1328
      %1377 = vmatprep.subr.mxu0 0.0
      %1378 = vmatpush1.msra.mxu0 %v1330
      %1379 = vmatprep.subr.mxu0 0.0
      %1380 = vmatpush1.msra.mxu0 %v1332
      %1381 = vmatprep.subr.mxu0 0.0
      %1382 = vmatpush1.msra.mxu0 %v1334
      %1383 = vmatprep.subr.mxu0 0.0
      %1384 = vmatpush1.msra.mxu0 %v1336
      %1385 = vmatprep.subr.mxu0 0.0
      %1386 = vmatpush1.msra.mxu0 %v1338
      %1387 = vmatprep.subr.mxu0 0.0
      %1388 = vmatpush1.msra.mxu0 %v1340
      %1389 = vmatprep.subr.mxu0 0.0
      %1390 = vmatpush1.msra.mxu0 %v1342
      %1391 = vmatprep.subr.mxu0 0.0
      %1392 = vmatpush1.msra.mxu0 0.0
      %1393 = vmatprep.subr.mxu0 0.0
      %1394 = vmatpush1.msra.mxu0 0.0
      %1395 = vmatprep.subr.mxu0 0.0
      %1396 = vmatpush1.msra.mxu0 0.0
      %1397 = vmatprep.subr.mxu0 0.0
      %1398 = vmatpush1.msra.mxu0 0.0
      %1399 = vmatprep.subr.mxu0 0.0
      %1400 = vmatpush1.msra.mxu0 0.0
      %1401 = vmatprep.subr.mxu0 0.0
      %1402 = vmatpush1.msra.mxu0 0.0
      %1403 = vmatprep.subr.mxu0 0.0
      %1404 = vmatpush1.msra.mxu0 0.0
      %1405 = vmatprep.subr.mxu0 0.0
      %1406 = vmatpush1.msra.mxu0 0.0
      %1407 = vmatprep.subr.mxu0 0.0
      %1408 = vmatpush1.msra.mxu0 0.0
      %1409 = vmatprep.subr.mxu0 0.0
      %1410 = vmatpush1.msra.mxu0 0.0
      %1411 = vmatprep.subr.mxu0 0.0
      %1412 = vmatpush1.msra.mxu0 0.0
      %1413 = vmatprep.subr.mxu0 0.0
      %1414 = vmatpush1.msra.mxu0 0.0
      %1415 = vmatprep.subr.mxu0 0.0
      %1416 = vmatpush1.msra.mxu0 0.0
      %1417 = vmatprep.subr.mxu0 0.0
      %1418 = vmatpush1.msra.mxu0 0.0
      %1419 = vmatprep.subr.mxu0 0.0
      %1420 = vmatpush1.msra.mxu0 0.0
      %1421 = vmatprep.subr.mxu0 0.0
      %1422 = vmatpush1.msra.mxu0 0.0
      %1423 = vmatprep.subr.mxu0 0.0
      %1424 = vmatpush1.msra.mxu0 0.0
      %1425 = vmatprep.subr.mxu0 0.0
      %1426 = vmatpush1.msra.mxu0 0.0
      %1427 = vmatprep.subr.mxu0 0.0
      %1428 = vmatpush1.msra.mxu0 0.0
      %1429 = vmatprep.subr.mxu0 0.0
      %1430 = vmatpush1.msra.mxu0 0.0
      %1431 = vmatprep.subr.mxu0 0.0
      %1432 = vmatpush1.msra.mxu0 0.0
      %1433 = vmatprep.subr.mxu0 0.0
      %1434 = vmatpush1.msra.mxu0 0.0
      %1435 = vmatprep.subr.mxu0 0.0
      %1436 = vmatpush1.msra.mxu0 0.0
      %1437 = vmatprep.subr.mxu0 0.0
      %1438 = vmatpush1.msra.mxu0 0.0
      %1439 = vmatprep.mubr.f32.mxu0 0.0
      %1440 = vmatmul.mubr.f32.gmra.mrb[0].mxu0 %v1352
      %v1441 = vpop.f32.mrb[0].mxu0
      %v1442 = vadd.f32 0.0, %v1441
      %v1443 = vpop.f32.mrb[0].mxu0
      %1444 = vmatprep.mubr.f32.mxu0 0.0
      %1445 = vmatmul.mubr.f32.gmra.mrb[0].mxu0 %v1355
      %v1446 = vpop.f32.mrb[0].mxu0
      %v1447 = vadd.f32 0.0, %v1446
      %v1448 = vpop.f32.mrb[0].mxu0
      %1449 = vmatprep.mubr.f32.mxu0 0.0
      %1450 = vmatmul.mubr.f32.gmra.mrb[0].mxu0 %v1358
      %v1451 = vpop.f32.mrb[0].mxu0
      %v1452 = vadd.f32 0.0, %v1451
      %v1453 = vpop.f32.mrb[0].mxu0
      %1454 = vmatprep.mubr.f32.mxu0 0.0
      %1455 = vmatmul.mubr.f32.gmra.mrb[0].mxu0 %v1361
      %v1456 = vpop.f32.mrb[0].mxu0
      %v1457 = vadd.f32 0.0, %v1456
      %v1458 = vpop.f32.mrb[0].mxu0
      %1459 = vmatprep.mubr.f32.mxu0 0.0
      %1460 = vmatmul.mubr.f32.gmra.mrb[0].mxu0 %v1364
      %v1461 = vpop.f32.mrb[0].mxu0
      %v1462 = vadd.f32 0.0, %v1461
      %v1463 = vpop.f32.mrb[0].mxu0
      %1464 = vmatprep.mubr.f32.mxu0 0.0
      %1465 = vmatmul.mubr.f32.gmra.mrb[0].mxu0 %v1367
      %v1466 = vpop.f32.mrb[0].mxu0
      %v1467 = vadd.f32 0.0, %v1466
      %v1468 = vpop.f32.mrb[0].mxu0
      %1469 = vmatprep.mubr.f32.mxu0 0.0
      %1470 = vmatmul.mubr.f32.gmra.mrb[0].mxu0 %v1370
      %v1471 = vpop.f32.mrb[0].mxu0
      %v1472 = vadd.f32 0.0, %v1471
      %v1473 = vpop.f32.mrb[0].mxu0
      %1474 = vmatprep.mubr.f32.mxu0 0.0
      %1475 = vmatmul.mubr.f32.gmra.mrb[0].mxu0 %v1373
      %v1476 = vpop.f32.mrb[0].mxu0
      %v1477 = vadd.f32 0.0, %v1476
      %v1478 = vpop.f32.mrb[0].mxu0
      %1479 = vdwg.mxu0
      %v1480 = vmul.f32 %v1442, %v1319
      %v1481 = vmul.f32 %v1447, %v1320
      %v1482 = vmul.f32 %v1452, %v1321
      %v1483 = vmul.f32 %v1457, %v1322
      %v1484 = vmul.f32 %v1462, %v1323
      %v1485 = vmul.f32 %v1467, %v1324
      %v1486 = vmul.f32 %v1472, %v1325
      %v1487 = vmul.f32 %v1477, %v1326
      %v1488 = vld [vmem:[%s5 + $0x8] sm:$0xff]
      %v1490 = vsel %vm665, %v1480, 0
      %v1493 = vsel %vm665, %v1481, 0
      %v1496 = vsel %vm665, %v1482, 0
      %v1499 = vsel %vm665, %v1483, 0
      %v1502 = vsel %vm665, %v1484, 0
      %v1505 = vsel %vm665, %v1485, 0
      %v1508 = vsel %vm665, %v1486, 0
      %v1511 = vsel %vm665, %v1487, 0
      %1513 = vmatprep.subr.mxu0 0.0
      %1514 = vmatpush1.msra.mxu0 %v1488
      %1515 = vmatprep.subr.mxu0 0.0
      %1516 = vmatpush1.msra.mxu0 0.0
      %1517 = vmatprep.subr.mxu0 0.0
      %1518 = vmatpush1.msra.mxu0 0.0
      %1519 = vmatprep.subr.mxu0 0.0
      %1520 = vmatpush1.msra.mxu0 0.0
      %1521 = vmatprep.subr.mxu0 0.0
      %1522 = vmatpush1.msra.mxu0 0.0
      %1523 = vmatprep.subr.mxu0 0.0
      %1524 = vmatpush1.msra.mxu0 0.0
      %1525 = vmatprep.subr.mxu0 0.0
      %1526 = vmatpush1.msra.mxu0 0.0
      %1527 = vmatprep.subr.mxu0 0.0
      %1528 = vmatpush1.msra.mxu0 0.0
      %1529 = vmatprep.subr.mxu0 0.0
      %1530 = vmatpush1.msra.mxu0 0.0
      %1531 = vmatprep.subr.mxu0 0.0
      %1532 = vmatpush1.msra.mxu0 0.0
      %1533 = vmatprep.subr.mxu0 0.0
      %1534 = vmatpush1.msra.mxu0 0.0
      %1535 = vmatprep.subr.mxu0 0.0
      %1536 = vmatpush1.msra.mxu0 0.0
      %1537 = vmatprep.subr.mxu0 0.0
      %1538 = vmatpush1.msra.mxu0 0.0
      %1539 = vmatprep.subr.mxu0 0.0
      %1540 = vmatpush1.msra.mxu0 0.0
      %1541 = vmatprep.subr.mxu0 0.0
      %1542 = vmatpush1.msra.mxu0 0.0
      %1543 = vmatprep.subr.mxu0 0.0
      %1544 = vmatpush1.msra.mxu0 0.0
      %1545 = vmatprep.subr.mxu0 0.0
      %1546 = vmatpush1.msra.mxu0 0.0
      %1547 = vmatprep.subr.mxu0 0.0
      %1548 = vmatpush1.msra.mxu0 0.0
      %1549 = vmatprep.subr.mxu0 0.0
      %1550 = vmatpush1.msra.mxu0 0.0
      %1551 = vmatprep.subr.mxu0 0.0
      %1552 = vmatpush1.msra.mxu0 0.0
      %1553 = vmatprep.subr.mxu0 0.0
      %1554 = vmatpush1.msra.mxu0 0.0
      %1555 = vmatprep.subr.mxu0 0.0
      %1556 = vmatpush1.msra.mxu0 0.0
      %1557 = vmatprep.subr.mxu0 0.0
      %1558 = vmatpush1.msra.mxu0 0.0
      %1559 = vmatprep.subr.mxu0 0.0
      %1560 = vmatpush1.msra.mxu0 0.0
      %1561 = vmatprep.subr.mxu0 0.0
      %1562 = vmatpush1.msra.mxu0 0.0
      %1563 = vmatprep.subr.mxu0 0.0
      %1564 = vmatpush1.msra.mxu0 0.0
      %1565 = vmatprep.subr.mxu0 0.0
      %1566 = vmatpush1.msra.mxu0 0.0
      %1567 = vmatprep.subr.mxu0 0.0
      %1568 = vmatpush1.msra.mxu0 0.0
      %1569 = vmatprep.subr.mxu0 0.0
      %1570 = vmatpush1.msra.mxu0 0.0
      %1571 = vmatprep.subr.mxu0 0.0
      %1572 = vmatpush1.msra.mxu0 0.0
      %1573 = vmatprep.subr.mxu0 0.0
      %1574 = vmatpush1.msra.mxu0 0.0
      %1575 = vmatprep.subr.mxu0 0.0
      %1576 = vmatpush1.msra.mxu0 0.0
      %1577 = vmatprep.mubr.f32.mxu0 0.0
      %1578 = vmatmul.mubr.f32.gmra.mrb[0].mxu0 %v1490
      %v1579 = vpop.f32.mrb[0].mxu0
      %v1580 = vadd.f32 0.0, %v1579
      %v1581 = vpop.f32.mrb[0].mxu0
      %1582 = vmatprep.mubr.f32.mxu0 0.0
      %1583 = vmatmul.mubr.f32.gmra.mrb[0].mxu0 %v1493
      %v1584 = vpop.f32.mrb[0].mxu0
      %v1585 = vadd.f32 0.0, %v1584
      %v1586 = vpop.f32.mrb[0].mxu0
      %1587 = vmatprep.mubr.f32.mxu0 0.0
      %1588 = vmatmul.mubr.f32.gmra.mrb[0].mxu0 %v1496
      %v1589 = vpop.f32.mrb[0].mxu0
      %v1590 = vadd.f32 0.0, %v1589
      %v1591 = vpop.f32.mrb[0].mxu0
      %1592 = vmatprep.mubr.f32.mxu0 0.0
      %1593 = vmatmul.mubr.f32.gmra.mrb[0].mxu0 %v1499
      %v1594 = vpop.f32.mrb[0].mxu0
      %v1595 = vadd.f32 0.0, %v1594
      %v1596 = vpop.f32.mrb[0].mxu0
      %1597 = vmatprep.mubr.f32.mxu0 0.0
      %1598 = vmatmul.mubr.f32.gmra.mrb[0].mxu0 %v1502
      %v1599 = vpop.f32.mrb[0].mxu0
      %v1600 = vadd.f32 0.0, %v1599
      %v1601 = vpop.f32.mrb[0].mxu0
      %1602 = vmatprep.mubr.f32.mxu0 0.0
      %1603 = vmatmul.mubr.f32.gmra.mrb[0].mxu0 %v1505
      %v1604 = vpop.f32.mrb[0].mxu0
      %v1605 = vadd.f32 0.0, %v1604
      %v1606 = vpop.f32.mrb[0].mxu0
      %1607 = vmatprep.mubr.f32.mxu0 0.0
      %1608 = vmatmul.mubr.f32.gmra.mrb[0].mxu0 %v1508
      %v1609 = vpop.f32.mrb[0].mxu0
      %v1610 = vadd.f32 0.0, %v1609
      %v1611 = vpop.f32.mrb[0].mxu0
      %1612 = vmatprep.mubr.f32.mxu0 0.0
      %1613 = vmatmul.mubr.f32.gmra.mrb[0].mxu0 %v1511
      %v1614 = vpop.f32.mrb[0].mxu0
      %v1615 = vadd.f32 0.0, %v1614
      %v1616 = vpop.f32.mrb[0].mxu0
      %1617 = vdwg.mxu0
      %v1619 = vsel %vm665, %v1061, 0
      %v1622 = vsel %vm665, %v1062, 0
      %v1625 = vsel %vm665, %v1063, 0
      %v1628 = vsel %vm665, %v1064, 0
      %v1631 = vsel %vm665, %v1065, 0
      %v1634 = vsel %vm665, %v1066, 0
      %v1637 = vsel %vm665, %v1067, 0
      %v1640 = vsel %vm665, %v1068, 0
      %1642 = vmatprep.subr.mxu0 0.0
      %1643 = vmatpush1.msra.mxu0 %v1069
      %1644 = vmatprep.subr.mxu0 0.0
      %1645 = vmatpush1.msra.mxu0 0.0
      %1646 = vmatprep.subr.mxu0 0.0
      %1647 = vmatpush1.msra.mxu0 0.0
      %1648 = vmatprep.subr.mxu0 0.0
      %1649 = vmatpush1.msra.mxu0 0.0
      %1650 = vmatprep.subr.mxu0 0.0
      %1651 = vmatpush1.msra.mxu0 0.0
      %1652 = vmatprep.subr.mxu0 0.0
      %1653 = vmatpush1.msra.mxu0 0.0
      %1654 = vmatprep.subr.mxu0 0.0
      %1655 = vmatpush1.msra.mxu0 0.0
      %1656 = vmatprep.subr.mxu0 0.0
      %1657 = vmatpush1.msra.mxu0 0.0
      %1658 = vmatprep.subr.mxu0 0.0
      %1659 = vmatpush1.msra.mxu0 0.0
      %1660 = vmatprep.subr.mxu0 0.0
      %1661 = vmatpush1.msra.mxu0 0.0
      %1662 = vmatprep.subr.mxu0 0.0
      %1663 = vmatpush1.msra.mxu0 0.0
      %1664 = vmatprep.subr.mxu0 0.0
      %1665 = vmatpush1.msra.mxu0 0.0
      %1666 = vmatprep.subr.mxu0 0.0
      %1667 = vmatpush1.msra.mxu0 0.0
      %1668 = vmatprep.subr.mxu0 0.0
      %1669 = vmatpush1.msra.mxu0 0.0
      %1670 = vmatprep.subr.mxu0 0.0
      %1671 = vmatpush1.msra.mxu0 0.0
      %1672 = vmatprep.subr.mxu0 0.0
      %1673 = vmatpush1.msra.mxu0 0.0
      %1674 = vmatprep.subr.mxu0 0.0
      %1675 = vmatpush1.msra.mxu0 0.0
      %1676 = vmatprep.subr.mxu0 0.0
      %1677 = vmatpush1.msra.mxu0 0.0
      %1678 = vmatprep.subr.mxu0 0.0
      %1679 = vmatpush1.msra.mxu0 0.0
      %1680 = vmatprep.subr.mxu0 0.0
      %1681 = vmatpush1.msra.mxu0 0.0
      %1682 = vmatprep.subr.mxu0 0.0
      %1683 = vmatpush1.msra.mxu0 0.0
      %1684 = vmatprep.subr.mxu0 0.0
      %1685 = vmatpush1.msra.mxu0 0.0
      %1686 = vmatprep.subr.mxu0 0.0
      %1687 = vmatpush1.msra.mxu0 0.0
      %1688 = vmatprep.subr.mxu0 0.0
      %1689 = vmatpush1.msra.mxu0 0.0
      %1690 = vmatprep.subr.mxu0 0.0
      %1691 = vmatpush1.msra.mxu0 0.0
      %1692 = vmatprep.subr.mxu0 0.0
      %1693 = vmatpush1.msra.mxu0 0.0
      %1694 = vmatprep.subr.mxu0 0.0
      %1695 = vmatpush1.msra.mxu0 0.0
      %1696 = vmatprep.subr.mxu0 0.0
      %1697 = vmatpush1.msra.mxu0 0.0
      %1698 = vmatprep.subr.mxu0 0.0
      %1699 = vmatpush1.msra.mxu0 0.0
      %1700 = vmatprep.subr.mxu0 0.0
      %1701 = vmatpush1.msra.mxu0 0.0
      %1702 = vmatprep.subr.mxu0 0.0
      %1703 = vmatpush1.msra.mxu0 0.0
      %1704 = vmatprep.subr.mxu0 0.0
      %1705 = vmatpush1.msra.mxu0 0.0
      %1706 = vmatprep.mubr.f32.mxu0 0.0
      %1707 = vmatmul.mubr.f32.gmra.mrb[0].mxu0 %v1619
      %v1708 = vpop.f32.mrb[0].mxu0
      %v1709 = vadd.f32 %v1580, %v1708
      %v1710 = vpop.f32.mrb[0].mxu0
      %1711 = vmatprep.mubr.f32.mxu0 0.0
      %1712 = vmatmul.mubr.f32.gmra.mrb[0].mxu0 %v1622
      %v1713 = vpop.f32.mrb[0].mxu0
      %v1714 = vadd.f32 %v1585, %v1713
      %v1715 = vpop.f32.mrb[0].mxu0
      %1716 = vmatprep.mubr.f32.mxu0 0.0
      %1717 = vmatmul.mubr.f32.gmra.mrb[0].mxu0 %v1625
      %v1718 = vpop.f32.mrb[0].mxu0
      %v1719 = vadd.f32 %v1590, %v1718
      %v1720 = vpop.f32.mrb[0].mxu0
      %1721 = vmatprep.mubr.f32.mxu0 0.0
      %1722 = vmatmul.mubr.f32.gmra.mrb[0].mxu0 %v1628
      %v1723 = vpop.f32.mrb[0].mxu0
      %v1724 = vadd.f32 %v1595, %v1723
      %v1725 = vpop.f32.mrb[0].mxu0
      %1726 = vmatprep.mubr.f32.mxu0 0.0
      %1727 = vmatmul.mubr.f32.gmra.mrb[0].mxu0 %v1631
      %v1728 = vpop.f32.mrb[0].mxu0
      %v1729 = vadd.f32 %v1600, %v1728
      %v1730 = vpop.f32.mrb[0].mxu0
      %1731 = vmatprep.mubr.f32.mxu0 0.0
      %1732 = vmatmul.mubr.f32.gmra.mrb[0].mxu0 %v1634
      %v1733 = vpop.f32.mrb[0].mxu0
      %v1734 = vadd.f32 %v1605, %v1733
      %v1735 = vpop.f32.mrb[0].mxu0
      %1736 = vmatprep.mubr.f32.mxu0 0.0
      %1737 = vmatmul.mubr.f32.gmra.mrb[0].mxu0 %v1637
      %v1738 = vpop.f32.mrb[0].mxu0
      %v1739 = vadd.f32 %v1610, %v1738
      %v1740 = vpop.f32.mrb[0].mxu0
      %1741 = vmatprep.mubr.f32.mxu0 0.0
      %1742 = vmatmul.mubr.f32.gmra.mrb[0].mxu0 %v1640
      %v1743 = vpop.f32.mrb[0].mxu0
      %v1744 = vadd.f32 %v1615, %v1743
      %v1745 = vpop.f32.mrb[0].mxu0
      %1746 = vdwg.mxu0
      %1747 = vrot.lane.b32.xlu0 %v518, 112
      %v1748 = vpop.permute.xlu0 %1747
      %1749 = vrot.lane.b32.xlu0 %v523, 112
      %v1750 = vpop.permute.xlu0 %1749
      %1751 = vrot.lane.b32.xlu0 %v528, 112
      %v1752 = vpop.permute.xlu0 %1751
      %1753 = vrot.lane.b32.xlu0 %v533, 112
      %v1754 = vpop.permute.xlu0 %1753
      %1755 = vrot.lane.b32.xlu0 %v538, 112
      %v1756 = vpop.permute.xlu0 %1755
      %1757 = vrot.lane.b32.xlu0 %v543, 112
      %v1758 = vpop.permute.xlu0 %1757
      %1759 = vrot.lane.b32.xlu0 %v548, 112
      %v1760 = vpop.permute.xlu0 %1759
      %1761 = vrot.lane.b32.xlu0 %v553, 112
      %v1762 = vpop.permute.xlu0 %1761
      %1763 = vrot.lane.b32.xlu0 %v627, 112
      %v1764 = vpop.permute.xlu0 %1763
      %1765 = vrot.lane.b32.xlu0 %v632, 112
      %v1766 = vpop.permute.xlu0 %1765
      %1767 = vrot.lane.b32.xlu0 %v637, 112
      %v1768 = vpop.permute.xlu0 %1767
      %1769 = vrot.lane.b32.xlu0 %v642, 112
      %v1770 = vpop.permute.xlu0 %1769
      %1771 = vrot.lane.b32.xlu0 %v647, 112
      %v1772 = vpop.permute.xlu0 %1771
      %1773 = vrot.lane.b32.xlu0 %v652, 112
      %v1774 = vpop.permute.xlu0 %1773
      %1775 = vrot.lane.b32.xlu0 %v657, 112
      %v1776 = vpop.permute.xlu0 %1775
      %1777 = vrot.lane.b32.xlu0 %v662, 112
      %v1778 = vpop.permute.xlu0 %1777
      %v1779 = vsel %vm665, %v1748, 0
      %v1781 = vsel %vm665, %v1750, 0
      %v1783 = vsel %vm665, %v1752, 0
      %v1785 = vsel %vm665, %v1754, 0
      %v1787 = vsel %vm665, %v1756, 0
      %v1789 = vsel %vm665, %v1758, 0
      %v1791 = vsel %vm665, %v1760, 0
      %v1793 = vsel %vm665, %v1762, 0
      %v1795 = vsel %vm665, %v1764, 0
      %v1797 = vsel %vm665, %v1766, 0
      %v1799 = vsel %vm665, %v1768, 0
      %v1801 = vsel %vm665, %v1770, 0
      %v1803 = vsel %vm665, %v1772, 0
      %v1805 = vsel %vm665, %v1774, 0
      %v1807 = vsel %vm665, %v1776, 0
      %v1809 = vsel %vm665, %v1778, 0
      %1811 = vmatprep.subr.mxu0 0.0
      %1812 = vmatpush1.xpose.msra.mxu0 %v1795
      %1813 = vmatprep.subr.mxu0 0.0
      %1814 = vmatpush1.xpose.msra.mxu0 %v1797
      %1815 = vmatprep.subr.mxu0 0.0
      %1816 = vmatpush1.xpose.msra.mxu0 %v1799
      %1817 = vmatprep.subr.mxu0 0.0
      %1818 = vmatpush1.xpose.msra.mxu0 %v1801
      %1819 = vmatprep.subr.mxu0 0.0
      %1820 = vmatpush1.xpose.msra.mxu0 %v1803
      %1821 = vmatprep.subr.mxu0 0.0
      %1822 = vmatpush1.xpose.msra.mxu0 %v1805
      %1823 = vmatprep.subr.mxu0 0.0
      %1824 = vmatpush1.xpose.msra.mxu0 %v1807
      %1825 = vmatprep.subr.mxu0 0.0
      %1826 = vmatpush1.xpose.msra.mxu0 %v1809
      %1827 = vmatprep.subr.mxu0 0.0
      %1828 = vmatpush1.xpose.msra.mxu0 0.0
      %1829 = vmatprep.subr.mxu0 0.0
      %1830 = vmatpush1.xpose.msra.mxu0 0.0
      %1831 = vmatprep.subr.mxu0 0.0
      %1832 = vmatpush1.xpose.msra.mxu0 0.0
      %1833 = vmatprep.subr.mxu0 0.0
      %1834 = vmatpush1.xpose.msra.mxu0 0.0
      %1835 = vmatprep.subr.mxu0 0.0
      %1836 = vmatpush1.xpose.msra.mxu0 0.0
      %1837 = vmatprep.subr.mxu0 0.0
      %1838 = vmatpush1.xpose.msra.mxu0 0.0
      %1839 = vmatprep.subr.mxu0 0.0
      %1840 = vmatpush1.xpose.msra.mxu0 0.0
      %1841 = vmatprep.subr.mxu0 0.0
      %1842 = vmatpush1.xpose.msra.mxu0 0.0
      %1843 = vmatprep.subr.mxu0 0.0
      %1844 = vmatpush1.xpose.msra.mxu0 0.0
      %1845 = vmatprep.subr.mxu0 0.0
      %1846 = vmatpush1.xpose.msra.mxu0 0.0
      %1847 = vmatprep.subr.mxu0 0.0
      %1848 = vmatpush1.xpose.msra.mxu0 0.0
      %1849 = vmatprep.subr.mxu0 0.0
      %1850 = vmatpush1.xpose.msra.mxu0 0.0
      %1851 = vmatprep.subr.mxu0 0.0
      %1852 = vmatpush1.xpose.msra.mxu0 0.0
      %1853 = vmatprep.subr.mxu0 0.0
      %1854 = vmatpush1.xpose.msra.mxu0 0.0
      %1855 = vmatprep.subr.mxu0 0.0
      %1856 = vmatpush1.xpose.msra.mxu0 0.0
      %1857 = vmatprep.subr.mxu0 0.0
      %1858 = vmatpush1.xpose.msra.mxu0 0.0
      %1859 = vmatprep.subr.mxu0 0.0
      %1860 = vmatpush1.xpose.msra.mxu0 0.0
      %1861 = vmatprep.subr.mxu0 0.0
      %1862 = vmatpush1.xpose.msra.mxu0 0.0
      %1863 = vmatprep.subr.mxu0 0.0
      %1864 = vmatpush1.xpose.msra.mxu0 0.0
      %1865 = vmatprep.subr.mxu0 0.0
      %1866 = vmatpush1.xpose.msra.mxu0 0.0
      %1867 = vmatprep.subr.mxu0 0.0
      %1868 = vmatpush1.xpose.msra.mxu0 0.0
      %1869 = vmatprep.subr.mxu0 0.0
      %1870 = vmatpush1.xpose.msra.mxu0 0.0
      %1871 = vmatprep.subr.mxu0 0.0
      %1872 = vmatpush1.xpose.msra.mxu0 0.0
      %1873 = vmatprep.subr.mxu0 0.0
      %1874 = vmatpush1.xpose.msra.mxu0 0.0
      %1875 = vmatprep.mubr.f32.mxu0 0.0
      %1876 = vmatmul.mubr.f32.gmra.mrb[0].mxu0 %v1779
      %v1877 = vpop.f32.mrb[0].mxu0
      %v1878 = vadd.f32 0.0, %v1877
      %v1879 = vpop.f32.mrb[0].mxu0
      %1880 = vmatprep.mubr.f32.mxu0 0.0
      %1881 = vmatmul.mubr.f32.gmra.mrb[0].mxu0 %v1781
      %v1882 = vpop.f32.mrb[0].mxu0
      %v1883 = vadd.f32 0.0, %v1882
      %v1884 = vpop.f32.mrb[0].mxu0
      %1885 = vmatprep.mubr.f32.mxu0 0.0
      %1886 = vmatmul.mubr.f32.gmra.mrb[0].mxu0 %v1783
      %v1887 = vpop.f32.mrb[0].mxu0
      %v1888 = vadd.f32 0.0, %v1887
      %v1889 = vpop.f32.mrb[0].mxu0
      %1890 = vmatprep.mubr.f32.mxu0 0.0
      %1891 = vmatmul.mubr.f32.gmra.mrb[0].mxu0 %v1785
      %v1892 = vpop.f32.mrb[0].mxu0
      %v1893 = vadd.f32 0.0, %v1892
      %v1894 = vpop.f32.mrb[0].mxu0
      %1895 = vmatprep.mubr.f32.mxu0 0.0
      %1896 = vmatmul.mubr.f32.gmra.mrb[0].mxu0 %v1787
      %v1897 = vpop.f32.mrb[0].mxu0
      %v1898 = vadd.f32 0.0, %v1897
      %v1899 = vpop.f32.mrb[0].mxu0
      %1900 = vmatprep.mubr.f32.mxu0 0.0
      %1901 = vmatmul.mubr.f32.gmra.mrb[0].mxu0 %v1789
      %v1902 = vpop.f32.mrb[0].mxu0
      %v1903 = vadd.f32 0.0, %v1902
      %v1904 = vpop.f32.mrb[0].mxu0
      %1905 = vmatprep.mubr.f32.mxu0 0.0
      %1906 = vmatmul.mubr.f32.gmra.mrb[0].mxu0 %v1791
      %v1907 = vpop.f32.mrb[0].mxu0
      %v1908 = vadd.f32 0.0, %v1907
      %v1909 = vpop.f32.mrb[0].mxu0
      %1910 = vmatprep.mubr.f32.mxu0 0.0
      %1911 = vmatmul.mubr.f32.gmra.mrb[0].mxu0 %v1793
      %v1912 = vpop.f32.mrb[0].mxu0
      %v1913 = vadd.f32 0.0, %v1912
      %v1914 = vpop.f32.mrb[0].mxu0
      %1915 = vdwg.mxu0
      %v1916 = vmul.f32 %v1878, 0.35355338
      %v1917 = vmul.f32 %v1883, 0.35355338
      %v1918 = vmul.f32 %v1888, 0.35355338
      %v1919 = vmul.f32 %v1893, 0.35355338
      %v1920 = vmul.f32 %v1898, 0.35355338
      %v1921 = vmul.f32 %v1903, 0.35355338
      %v1922 = vmul.f32 %v1908, 0.35355338
      %v1923 = vmul.f32 %v1913, 0.35355338
      %v1924 = vsel %vm827, %v1916, -inf
      %1925 = vmax.xlane.f32.xlu0 %v1924
      %v1926 = vpop.xlane.xlu0 %1925
      %v1927 = vsel %vm827, %v1917, -inf
      %1928 = vmax.xlane.f32.xlu0 %v1927
      %v1929 = vpop.xlane.xlu0 %1928
      %v1930 = vsel %vm827, %v1918, -inf
      %1931 = vmax.xlane.f32.xlu0 %v1930
      %v1932 = vpop.xlane.xlu0 %1931
      %v1933 = vsel %vm827, %v1919, -inf
      %1934 = vmax.xlane.f32.xlu0 %v1933
      %v1935 = vpop.xlane.xlu0 %1934
      %v1936 = vsel %vm827, %v1920, -inf
      %1937 = vmax.xlane.f32.xlu0 %v1936
      %v1938 = vpop.xlane.xlu0 %1937
      %v1939 = vsel %vm827, %v1921, -inf
      %1940 = vmax.xlane.f32.xlu0 %v1939
      %v1941 = vpop.xlane.xlu0 %1940
      %v1942 = vsel %vm827, %v1922, -inf
      %1943 = vmax.xlane.f32.xlu0 %v1942
      %v1944 = vpop.xlane.xlu0 %1943
      %v1945 = vsel %vm827, %v1923, -inf
      %1946 = vmax.xlane.f32.xlu0 %v1945
      %v1947 = vpop.xlane.xlu0 %1946
      %v1948 = vsub.f32 %v1916, %v1926
      %v1949 = vsub.f32 %v1917, %v1929
      %v1950 = vsub.f32 %v1918, %v1932
      %v1951 = vsub.f32 %v1919, %v1935
      %v1952 = vsub.f32 %v1920, %v1938
      %v1953 = vsub.f32 %v1921, %v1941
      %v1954 = vsub.f32 %v1922, %v1944
      %v1955 = vsub.f32 %v1923, %v1947
      %v1956 = vmul.f32 %v1948, 1.442695
      %v1957 = vpow.pop %v1956
      %v1958 = vmul.f32 %v1949, 1.442695
      %v1959 = vpow.pop %v1958
      %v1960 = vmul.f32 %v1950, 1.442695
      %v1961 = vpow.pop %v1960
      %v1962 = vmul.f32 %v1951, 1.442695
      %v1963 = vpow.pop %v1962
      %v1964 = vmul.f32 %v1952, 1.442695
      %v1965 = vpow.pop %v1964
      %v1966 = vmul.f32 %v1953, 1.442695
      %v1967 = vpow.pop %v1966
      %v1968 = vmul.f32 %v1954, 1.442695
      %v1969 = vpow.pop %v1968
      %v1970 = vmul.f32 %v1955, 1.442695
      %v1971 = vpow.pop %v1970
      %v1972 = vsel %vm827, %v1957, 0.0
      %1973 = vadd.xlane.f32.xlu0 %v1972
      %v1974 = vpop.xlane.xlu0 %1973
      %v1975 = vsel %vm827, %v1959, 0.0
      %1976 = vadd.xlane.f32.xlu0 %v1975
      %v1977 = vpop.xlane.xlu0 %1976
      %v1978 = vsel %vm827, %v1961, 0.0
      %1979 = vadd.xlane.f32.xlu0 %v1978
      %v1980 = vpop.xlane.xlu0 %1979
      %v1981 = vsel %vm827, %v1963, 0.0
      %1982 = vadd.xlane.f32.xlu0 %v1981
      %v1983 = vpop.xlane.xlu0 %1982
      %v1984 = vsel %vm827, %v1965, 0.0
      %1985 = vadd.xlane.f32.xlu0 %v1984
      %v1986 = vpop.xlane.xlu0 %1985
      %v1987 = vsel %vm827, %v1967, 0.0
      %1988 = vadd.xlane.f32.xlu0 %v1987
      %v1989 = vpop.xlane.xlu0 %1988
      %v1990 = vsel %vm827, %v1969, 0.0
      %1991 = vadd.xlane.f32.xlu0 %v1990
      %v1992 = vpop.xlane.xlu0 %1991
      %v1993 = vsel %vm827, %v1971, 0.0
      %1994 = vadd.xlane.f32.xlu0 %v1993
      %v1995 = vpop.xlane.xlu0 %1994
      %v1996 = vrcp.pop %v1974
      %v1997 = vrcp.pop %v1977
      %v1998 = vrcp.pop %v1980
      %v1999 = vrcp.pop %v1983
      %v2000 = vrcp.pop %v1986
      %v2001 = vrcp.pop %v1989
      %v2002 = vrcp.pop %v1992
      %v2003 = vrcp.pop %v1995
      %2004 = vrot.lane.b32.xlu0 %v627, 80
      %v2005 = vpop.permute.xlu0 %2004
      %2006 = vrot.lane.b32.xlu0 %v632, 80
      %v2007 = vpop.permute.xlu0 %2006
      %2008 = vrot.lane.b32.xlu0 %v637, 80
      %v2009 = vpop.permute.xlu0 %2008
      %2010 = vrot.lane.b32.xlu0 %v642, 80
      %v2011 = vpop.permute.xlu0 %2010
      %2012 = vrot.lane.b32.xlu0 %v647, 80
      %v2013 = vpop.permute.xlu0 %2012
      %2014 = vrot.lane.b32.xlu0 %v652, 80
      %v2015 = vpop.permute.xlu0 %2014
      %2016 = vrot.lane.b32.xlu0 %v657, 80
      %v2017 = vpop.permute.xlu0 %2016
      %2018 = vrot.lane.b32.xlu0 %v662, 80
      %v2019 = vpop.permute.xlu0 %2018
      %v2029 = vsel %vm827, %v1957, 0
      %v2032 = vsel %vm827, %v1959, 0
      %v2035 = vsel %vm827, %v1961, 0
      %v2038 = vsel %vm827, %v1963, 0
      %v2041 = vsel %vm827, %v1965, 0
      %v2044 = vsel %vm827, %v1967, 0
      %v2047 = vsel %vm827, %v1969, 0
      %v2050 = vsel %vm827, %v1971, 0
      %2052 = vmatprep.subr.mxu0 0.0
      %2053 = vmatpush1.msra.mxu0 %v2005
      %2054 = vmatprep.subr.mxu0 0.0
      %2055 = vmatpush1.msra.mxu0 %v2007
      %2056 = vmatprep.subr.mxu0 0.0
      %2057 = vmatpush1.msra.mxu0 %v2009
      %2058 = vmatprep.subr.mxu0 0.0
      %2059 = vmatpush1.msra.mxu0 %v2011
      %2060 = vmatprep.subr.mxu0 0.0
      %2061 = vmatpush1.msra.mxu0 %v2013
      %2062 = vmatprep.subr.mxu0 0.0
      %2063 = vmatpush1.msra.mxu0 %v2015
      %2064 = vmatprep.subr.mxu0 0.0
      %2065 = vmatpush1.msra.mxu0 %v2017
      %2066 = vmatprep.subr.mxu0 0.0
      %2067 = vmatpush1.msra.mxu0 %v2019
      %2068 = vmatprep.subr.mxu0 0.0
      %2069 = vmatpush1.msra.mxu0 0.0
      %2070 = vmatprep.subr.mxu0 0.0
      %2071 = vmatpush1.msra.mxu0 0.0
      %2072 = vmatprep.subr.mxu0 0.0
      %2073 = vmatpush1.msra.mxu0 0.0
      %2074 = vmatprep.subr.mxu0 0.0
      %2075 = vmatpush1.msra.mxu0 0.0
      %2076 = vmatprep.subr.mxu0 0.0
      %2077 = vmatpush1.msra.mxu0 0.0
      %2078 = vmatprep.subr.mxu0 0.0
      %2079 = vmatpush1.msra.mxu0 0.0
      %2080 = vmatprep.subr.mxu0 0.0
      %2081 = vmatpush1.msra.mxu0 0.0
      %2082 = vmatprep.subr.mxu0 0.0
      %2083 = vmatpush1.msra.mxu0 0.0
      %2084 = vmatprep.subr.mxu0 0.0
      %2085 = vmatpush1.msra.mxu0 0.0
      %2086 = vmatprep.subr.mxu0 0.0
      %2087 = vmatpush1.msra.mxu0 0.0
      %2088 = vmatprep.subr.mxu0 0.0
      %2089 = vmatpush1.msra.mxu0 0.0
      %2090 = vmatprep.subr.mxu0 0.0
      %2091 = vmatpush1.msra.mxu0 0.0
      %2092 = vmatprep.subr.mxu0 0.0
      %2093 = vmatpush1.msra.mxu0 0.0
      %2094 = vmatprep.subr.mxu0 0.0
      %2095 = vmatpush1.msra.mxu0 0.0
      %2096 = vmatprep.subr.mxu0 0.0
      %2097 = vmatpush1.msra.mxu0 0.0
      %2098 = vmatprep.subr.mxu0 0.0
      %2099 = vmatpush1.msra.mxu0 0.0
      %2100 = vmatprep.subr.mxu0 0.0
      %2101 = vmatpush1.msra.mxu0 0.0
      %2102 = vmatprep.subr.mxu0 0.0
      %2103 = vmatpush1.msra.mxu0 0.0
      %2104 = vmatprep.subr.mxu0 0.0
      %2105 = vmatpush1.msra.mxu0 0.0
      %2106 = vmatprep.subr.mxu0 0.0
      %2107 = vmatpush1.msra.mxu0 0.0
      %2108 = vmatprep.subr.mxu0 0.0
      %2109 = vmatpush1.msra.mxu0 0.0
      %2110 = vmatprep.subr.mxu0 0.0
      %2111 = vmatpush1.msra.mxu0 0.0
      %2112 = vmatprep.subr.mxu0 0.0
      %2113 = vmatpush1.msra.mxu0 0.0
      %2114 = vmatprep.subr.mxu0 0.0
      %2115 = vmatpush1.msra.mxu0 0.0
      %2116 = vmatprep.mubr.f32.mxu0 0.0
      %2117 = vmatmul.mubr.f32.gmra.mrb[0].mxu0 %v2029
      %v2118 = vpop.f32.mrb[0].mxu0
      %v2119 = vadd.f32 0.0, %v2118
      %v2120 = vpop.f32.mrb[0].mxu0
      %2121 = vmatprep.mubr.f32.mxu0 0.0
      %2122 = vmatmul.mubr.f32.gmra.mrb[0].mxu0 %v2032
      %v2123 = vpop.f32.mrb[0].mxu0
      %v2124 = vadd.f32 0.0, %v2123
      %v2125 = vpop.f32.mrb[0].mxu0
      %2126 = vmatprep.mubr.f32.mxu0 0.0
      %2127 = vmatmul.mubr.f32.gmra.mrb[0].mxu0 %v2035
      %v2128 = vpop.f32.mrb[0].mxu0
      %v2129 = vadd.f32 0.0, %v2128
      %v2130 = vpop.f32.mrb[0].mxu0
      %2131 = vmatprep.mubr.f32.mxu0 0.0
      %2132 = vmatmul.mubr.f32.gmra.mrb[0].mxu0 %v2038
      %v2133 = vpop.f32.mrb[0].mxu0
      %v2134 = vadd.f32 0.0, %v2133
      %v2135 = vpop.f32.mrb[0].mxu0
      %2136 = vmatprep.mubr.f32.mxu0 0.0
      %2137 = vmatmul.mubr.f32.gmra.mrb[0].mxu0 %v2041
      %v2138 = vpop.f32.mrb[0].mxu0
      %v2139 = vadd.f32 0.0, %v2138
      %v2140 = vpop.f32.mrb[0].mxu0
      %2141 = vmatprep.mubr.f32.mxu0 0.0
      %2142 = vmatmul.mubr.f32.gmra.mrb[0].mxu0 %v2044
      %v2143 = vpop.f32.mrb[0].mxu0
      %v2144 = vadd.f32 0.0, %v2143
      %v2145 = vpop.f32.mrb[0].mxu0
      %2146 = vmatprep.mubr.f32.mxu0 0.0
      %2147 = vmatmul.mubr.f32.gmra.mrb[0].mxu0 %v2047
      %v2148 = vpop.f32.mrb[0].mxu0
      %v2149 = vadd.f32 0.0, %v2148
      %v2150 = vpop.f32.mrb[0].mxu0
      %2151 = vmatprep.mubr.f32.mxu0 0.0
      %2152 = vmatmul.mubr.f32.gmra.mrb[0].mxu0 %v2050
      %v2153 = vpop.f32.mrb[0].mxu0
      %v2154 = vadd.f32 0.0, %v2153
      %v2155 = vpop.f32.mrb[0].mxu0
      %2156 = vdwg.mxu0
      %v2157 = vmul.f32 %v2119, %v1996
      %v2158 = vmul.f32 %v2124, %v1997
      %v2159 = vmul.f32 %v2129, %v1998
      %v2160 = vmul.f32 %v2134, %v1999
      %v2161 = vmul.f32 %v2139, %v2000
      %v2162 = vmul.f32 %v2144, %v2001
      %v2163 = vmul.f32 %v2149, %v2002
      %v2164 = vmul.f32 %v2154, %v2003
      %v2165 = vld [vmem:[%s5 + $0x10] sm:$0xff]
      %v2167 = vsel %vm665, %v2157, 0
      %v2170 = vsel %vm665, %v2158, 0
      %v2173 = vsel %vm665, %v2159, 0
      %v2176 = vsel %vm665, %v2160, 0
      %v2179 = vsel %vm665, %v2161, 0
      %v2182 = vsel %vm665, %v2162, 0
      %v2185 = vsel %vm665, %v2163, 0
      %v2188 = vsel %vm665, %v2164, 0
      %2190 = vmatprep.subr.mxu0 0.0
      %2191 = vmatpush1.msra.mxu0 %v2165
      %2192 = vmatprep.subr.mxu0 0.0
      %2193 = vmatpush1.msra.mxu0 0.0
      %2194 = vmatprep.subr.mxu0 0.0
      %2195 = vmatpush1.msra.mxu0 0.0
      %2196 = vmatprep.subr.mxu0 0.0
      %2197 = vmatpush1.msra.mxu0 0.0
      %2198 = vmatprep.subr.mxu0 0.0
      %2199 = vmatpush1.msra.mxu0 0.0
      %2200 = vmatprep.subr.mxu0 0.0
      %2201 = vmatpush1.msra.mxu0 0.0
      %2202 = vmatprep.subr.mxu0 0.0
      %2203 = vmatpush1.msra.mxu0 0.0
      %2204 = vmatprep.subr.mxu0 0.0
      %2205 = vmatpush1.msra.mxu0 0.0
      %2206 = vmatprep.subr.mxu0 0.0
      %2207 = vmatpush1.msra.mxu0 0.0
      %2208 = vmatprep.subr.mxu0 0.0
      %2209 = vmatpush1.msra.mxu0 0.0
      %2210 = vmatprep.subr.mxu0 0.0
      %2211 = vmatpush1.msra.mxu0 0.0
      %2212 = vmatprep.subr.mxu0 0.0
      %2213 = vmatpush1.msra.mxu0 0.0
      %2214 = vmatprep.subr.mxu0 0.0
      %2215 = vmatpush1.msra.mxu0 0.0
      %2216 = vmatprep.subr.mxu0 0.0
      %2217 = vmatpush1.msra.mxu0 0.0
      %2218 = vmatprep.subr.mxu0 0.0
      %2219 = vmatpush1.msra.mxu0 0.0
      %2220 = vmatprep.subr.mxu0 0.0
      %2221 = vmatpush1.msra.mxu0 0.0
      %2222 = vmatprep.subr.mxu0 0.0
      %2223 = vmatpush1.msra.mxu0 0.0
      %2224 = vmatprep.subr.mxu0 0.0
      %2225 = vmatpush1.msra.mxu0 0.0
      %2226 = vmatprep.subr.mxu0 0.0
      %2227 = vmatpush1.msra.mxu0 0.0
      %2228 = vmatprep.subr.mxu0 0.0
      %2229 = vmatpush1.msra.mxu0 0.0
      %2230 = vmatprep.subr.mxu0 0.0
      %2231 = vmatpush1.msra.mxu0 0.0
      %2232 = vmatprep.subr.mxu0 0.0
      %2233 = vmatpush1.msra.mxu0 0.0
      %2234 = vmatprep.subr.mxu0 0.0
      %2235 = vmatpush1.msra.mxu0 0.0
      %2236 = vmatprep.subr.mxu0 0.0
      %2237 = vmatpush1.msra.mxu0 0.0
      %2238 = vmatprep.subr.mxu0 0.0
      %2239 = vmatpush1.msra.mxu0 0.0
      %2240 = vmatprep.subr.mxu0 0.0
      %2241 = vmatpush1.msra.mxu0 0.0
      %2242 = vmatprep.subr.mxu0 0.0
      %2243 = vmatpush1.msra.mxu0 0.0
      %2244 = vmatprep.subr.mxu0 0.0
      %2245 = vmatpush1.msra.mxu0 0.0
      %2246 = vmatprep.subr.mxu0 0.0
      %2247 = vmatpush1.msra.mxu0 0.0
      %2248 = vmatprep.subr.mxu0 0.0
      %2249 = vmatpush1.msra.mxu0 0.0
      %2250 = vmatprep.subr.mxu0 0.0
      %2251 = vmatpush1.msra.mxu0 0.0
      %2252 = vmatprep.subr.mxu0 0.0
      %2253 = vmatpush1.msra.mxu0 0.0
      %2254 = vmatprep.mubr.f32.mxu0 0.0
      %2255 = vmatmul.mubr.f32.gmra.mrb[0].mxu0 %v2167
      %v2256 = vpop.f32.mrb[0].mxu0
      %v2257 = vadd.f32 0.0, %v2256
      %v2258 = vpop.f32.mrb[0].mxu0
      %2259 = vmatprep.mubr.f32.mxu0 0.0
      %2260 = vmatmul.mubr.f32.gmra.mrb[0].mxu0 %v2170
      %v2261 = vpop.f32.mrb[0].mxu0
      %v2262 = vadd.f32 0.0, %v2261
      %v2263 = vpop.f32.mrb[0].mxu0
      %2264 = vmatprep.mubr.f32.mxu0 0.0
      %2265 = vmatmul.mubr.f32.gmra.mrb[0].mxu0 %v2173
      %v2266 = vpop.f32.mrb[0].mxu0
      %v2267 = vadd.f32 0.0, %v2266
      %v2268 = vpop.f32.mrb[0].mxu0
      %2269 = vmatprep.mubr.f32.mxu0 0.0
      %2270 = vmatmul.mubr.f32.gmra.mrb[0].mxu0 %v2176
      %v2271 = vpop.f32.mrb[0].mxu0
      %v2272 = vadd.f32 0.0, %v2271
      %v2273 = vpop.f32.mrb[0].mxu0
      %2274 = vmatprep.mubr.f32.mxu0 0.0
      %2275 = vmatmul.mubr.f32.gmra.mrb[0].mxu0 %v2179
      %v2276 = vpop.f32.mrb[0].mxu0
      %v2277 = vadd.f32 0.0, %v2276
      %v2278 = vpop.f32.mrb[0].mxu0
      %2279 = vmatprep.mubr.f32.mxu0 0.0
      %2280 = vmatmul.mubr.f32.gmra.mrb[0].mxu0 %v2182
      %v2281 = vpop.f32.mrb[0].mxu0
      %v2282 = vadd.f32 0.0, %v2281
      %v2283 = vpop.f32.mrb[0].mxu0
      %2284 = vmatprep.mubr.f32.mxu0 0.0
      %2285 = vmatmul.mubr.f32.gmra.mrb[0].mxu0 %v2185
      %v2286 = vpop.f32.mrb[0].mxu0
      %v2287 = vadd.f32 0.0, %v2286
      %v2288 = vpop.f32.mrb[0].mxu0
      %2289 = vmatprep.mubr.f32.mxu0 0.0
      %2290 = vmatmul.mubr.f32.gmra.mrb[0].mxu0 %v2188
      %v2291 = vpop.f32.mrb[0].mxu0
      %v2292 = vadd.f32 0.0, %v2291
      %v2293 = vpop.f32.mrb[0].mxu0
      %2294 = vdwg.mxu0
      %v2295 = vadd.f32 %v1709, %v2257
      %v2296 = vadd.f32 %v1714, %v2262
      %v2297 = vadd.f32 %v1719, %v2267
      %v2298 = vadd.f32 %v1724, %v2272
      %v2299 = vadd.f32 %v1729, %v2277
      %v2300 = vadd.f32 %v1734, %v2282
      %v2301 = vadd.f32 %v1739, %v2287
      %v2302 = vadd.f32 %v1744, %v2292
      %2303 = vrot.lane.b32.xlu0 %v518, 104
      %v2304 = vpop.permute.xlu0 %2303
      %2305 = vrot.lane.b32.xlu0 %v523, 104
      %v2306 = vpop.permute.xlu0 %2305
      %2307 = vrot.lane.b32.xlu0 %v528, 104
      %v2308 = vpop.permute.xlu0 %2307
      %2309 = vrot.lane.b32.xlu0 %v533, 104
      %v2310 = vpop.permute.xlu0 %2309
      %2311 = vrot.lane.b32.xlu0 %v538, 104
      %v2312 = vpop.permute.xlu0 %2311
      %2313 = vrot.lane.b32.xlu0 %v543, 104
      %v2314 = vpop.permute.xlu0 %2313
      %2315 = vrot.lane.b32.xlu0 %v548, 104
      %v2316 = vpop.permute.xlu0 %2315
      %2317 = vrot.lane.b32.xlu0 %v553, 104
      %v2318 = vpop.permute.xlu0 %2317
      %2319 = vrot.lane.b32.xlu0 %v627, 104
      %v2320 = vpop.permute.xlu0 %2319
      %2321 = vrot.lane.b32.xlu0 %v632, 104
      %v2322 = vpop.permute.xlu0 %2321
      %2323 = vrot.lane.b32.xlu0 %v637, 104
      %v2324 = vpop.permute.xlu0 %2323
      %2325 = vrot.lane.b32.xlu0 %v642, 104
      %v2326 = vpop.permute.xlu0 %2325
      %2327 = vrot.lane.b32.xlu0 %v647, 104
      %v2328 = vpop.permute.xlu0 %2327
      %2329 = vrot.lane.b32.xlu0 %v652, 104
      %v2330 = vpop.permute.xlu0 %2329
      %2331 = vrot.lane.b32.xlu0 %v657, 104
      %v2332 = vpop.permute.xlu0 %2331
      %2333 = vrot.lane.b32.xlu0 %v662, 104
      %v2334 = vpop.permute.xlu0 %2333
      %v2335 = vsel %vm665, %v2304, 0
      %v2337 = vsel %vm665, %v2306, 0
      %v2339 = vsel %vm665, %v2308, 0
      %v2341 = vsel %vm665, %v2310, 0
      %v2343 = vsel %vm665, %v2312, 0
      %v2345 = vsel %vm665, %v2314, 0
      %v2347 = vsel %vm665, %v2316, 0
      %v2349 = vsel %vm665, %v2318, 0
      %v2351 = vsel %vm665, %v2320, 0
      %v2353 = vsel %vm665, %v2322, 0
      %v2355 = vsel %vm665, %v2324, 0
      %v2357 = vsel %vm665, %v2326, 0
      %v2359 = vsel %vm665, %v2328, 0
      %v2361 = vsel %vm665, %v2330, 0
      %v2363 = vsel %vm665, %v2332, 0
      %v2365 = vsel %vm665, %v2334, 0
      %2367 = vmatprep.subr.mxu0 0.0
      %2368 = vmatpush1.xpose.msra.mxu0 %v2351
      %2369 = vmatprep.subr.mxu0 0.0
      %2370 = vmatpush1.xpose.msra.mxu0 %v2353
      %2371 = vmatprep.subr.mxu0 0.0
      %2372 = vmatpush1.xpose.msra.mxu0 %v2355
      %2373 = vmatprep.subr.mxu0 0.0
      %2374 = vmatpush1.xpose.msra.mxu0 %v2357
      %2375 = vmatprep.subr.mxu0 0.0
      %2376 = vmatpush1.xpose.msra.mxu0 %v2359
      %2377 = vmatprep.subr.mxu0 0.0
      %2378 = vmatpush1.xpose.msra.mxu0 %v2361
      %2379 = vmatprep.subr.mxu0 0.0
      %2380 = vmatpush1.xpose.msra.mxu0 %v2363
      %2381 = vmatprep.subr.mxu0 0.0
      %2382 = vmatpush1.xpose.msra.mxu0 %v2365
      %2383 = vmatprep.subr.mxu0 0.0
      %2384 = vmatpush1.xpose.msra.mxu0 0.0
      %2385 = vmatprep.subr.mxu0 0.0
      %2386 = vmatpush1.xpose.msra.mxu0 0.0
      %2387 = vmatprep.subr.mxu0 0.0
      %2388 = vmatpush1.xpose.msra.mxu0 0.0
      %2389 = vmatprep.subr.mxu0 0.0
      %2390 = vmatpush1.xpose.msra.mxu0 0.0
      %2391 = vmatprep.subr.mxu0 0.0
      %2392 = vmatpush1.xpose.msra.mxu0 0.0
      %2393 = vmatprep.subr.mxu0 0.0
      %2394 = vmatpush1.xpose.msra.mxu0 0.0
      %2395 = vmatprep.subr.mxu0 0.0
      %2396 = vmatpush1.xpose.msra.mxu0 0.0
      %2397 = vmatprep.subr.mxu0 0.0
      %2398 = vmatpush1.xpose.msra.mxu0 0.0
      %2399 = vmatprep.subr.mxu0 0.0
      %2400 = vmatpush1.xpose.msra.mxu0 0.0
      %2401 = vmatprep.subr.mxu0 0.0
      %2402 = vmatpush1.xpose.msra.mxu0 0.0
      %2403 = vmatprep.subr.mxu0 0.0
      %2404 = vmatpush1.xpose.msra.mxu0 0.0
      %2405 = vmatprep.subr.mxu0 0.0
      %2406 = vmatpush1.xpose.msra.mxu0 0.0
      %2407 = vmatprep.subr.mxu0 0.0
      %2408 = vmatpush1.xpose.msra.mxu0 0.0
      %2409 = vmatprep.subr.mxu0 0.0
      %2410 = vmatpush1.xpose.msra.mxu0 0.0
      %2411 = vmatprep.subr.mxu0 0.0
      %2412 = vmatpush1.xpose.msra.mxu0 0.0
      %2413 = vmatprep.subr.mxu0 0.0
      %2414 = vmatpush1.xpose.msra.mxu0 0.0
      %2415 = vmatprep.subr.mxu0 0.0
      %2416 = vmatpush1.xpose.msra.mxu0 0.0
      %2417 = vmatprep.subr.mxu0 0.0
      %2418 = vmatpush1.xpose.msra.mxu0 0.0
      %2419 = vmatprep.subr.mxu0 0.0
      %2420 = vmatpush1.xpose.msra.mxu0 0.0
      %2421 = vmatprep.subr.mxu0 0.0
      %2422 = vmatpush1.xpose.msra.mxu0 0.0
      %2423 = vmatprep.subr.mxu0 0.0
      %2424 = vmatpush1.xpose.msra.mxu0 0.0
      %2425 = vmatprep.subr.mxu0 0.0
      %2426 = vmatpush1.xpose.msra.mxu0 0.0
      %2427 = vmatprep.subr.mxu0 0.0
      %2428 = vmatpush1.xpose.msra.mxu0 0.0
      %2429 = vmatprep.subr.mxu0 0.0
      %2430 = vmatpush1.xpose.msra.mxu0 0.0
      %2431 = vmatprep.mubr.f32.mxu0 0.0
      %2432 = vmatmul.mubr.f32.gmra.mrb[0].mxu0 %v2335
      %v2433 = vpop.f32.mrb[0].mxu0
      %v2434 = vadd.f32 0.0, %v2433
      %v2435 = vpop.f32.mrb[0].mxu0
      %2436 = vmatprep.mubr.f32.mxu0 0.0
      %2437 = vmatmul.mubr.f32.gmra.mrb[0].mxu0 %v2337
      %v2438 = vpop.f32.mrb[0].mxu0
      %v2439 = vadd.f32 0.0, %v2438
      %v2440 = vpop.f32.mrb[0].mxu0
      %2441 = vmatprep.mubr.f32.mxu0 0.0
      %2442 = vmatmul.mubr.f32.gmra.mrb[0].mxu0 %v2339
      %v2443 = vpop.f32.mrb[0].mxu0
      %v2444 = vadd.f32 0.0, %v2443
      %v2445 = vpop.f32.mrb[0].mxu0
      %2446 = vmatprep.mubr.f32.mxu0 0.0
      %2447 = vmatmul.mubr.f32.gmra.mrb[0].mxu0 %v2341
      %v2448 = vpop.f32.mrb[0].mxu0
      %v2449 = vadd.f32 0.0, %v2448
      %v2450 = vpop.f32.mrb[0].mxu0
      %2451 = vmatprep.mubr.f32.mxu0 0.0
      %2452 = vmatmul.mubr.f32.gmra.mrb[0].mxu0 %v2343
      %v2453 = vpop.f32.mrb[0].mxu0
      %v2454 = vadd.f32 0.0, %v2453
      %v2455 = vpop.f32.mrb[0].mxu0
      %2456 = vmatprep.mubr.f32.mxu0 0.0
      %2457 = vmatmul.mubr.f32.gmra.mrb[0].mxu0 %v2345
      %v2458 = vpop.f32.mrb[0].mxu0
      %v2459 = vadd.f32 0.0, %v2458
      %v2460 = vpop.f32.mrb[0].mxu0
      %2461 = vmatprep.mubr.f32.mxu0 0.0
      %2462 = vmatmul.mubr.f32.gmra.mrb[0].mxu0 %v2347
      %v2463 = vpop.f32.mrb[0].mxu0
      %v2464 = vadd.f32 0.0, %v2463
      %v2465 = vpop.f32.mrb[0].mxu0
      %2466 = vmatprep.mubr.f32.mxu0 0.0
      %2467 = vmatmul.mubr.f32.gmra.mrb[0].mxu0 %v2349
      %v2468 = vpop.f32.mrb[0].mxu0
      %v2469 = vadd.f32 0.0, %v2468
      %v2470 = vpop.f32.mrb[0].mxu0
      %2471 = vdwg.mxu0
      %v2472 = vmul.f32 %v2434, 0.35355338
      %v2473 = vmul.f32 %v2439, 0.35355338
      %v2474 = vmul.f32 %v2444, 0.35355338
      %v2475 = vmul.f32 %v2449, 0.35355338
      %v2476 = vmul.f32 %v2454, 0.35355338
      %v2477 = vmul.f32 %v2459, 0.35355338
      %v2478 = vmul.f32 %v2464, 0.35355338
      %v2479 = vmul.f32 %v2469, 0.35355338
      %v2480 = vsel %vm827, %v2472, -inf
      %2481 = vmax.xlane.f32.xlu0 %v2480
      %v2482 = vpop.xlane.xlu0 %2481
      %v2483 = vsel %vm827, %v2473, -inf
      %2484 = vmax.xlane.f32.xlu0 %v2483
      %v2485 = vpop.xlane.xlu0 %2484
      %v2486 = vsel %vm827, %v2474, -inf
      %2487 = vmax.xlane.f32.xlu0 %v2486
      %v2488 = vpop.xlane.xlu0 %2487
      %v2489 = vsel %vm827, %v2475, -inf
      %2490 = vmax.xlane.f32.xlu0 %v2489
      %v2491 = vpop.xlane.xlu0 %2490
      %v2492 = vsel %vm827, %v2476, -inf
      %2493 = vmax.xlane.f32.xlu0 %v2492
      %v2494 = vpop.xlane.xlu0 %2493
      %v2495 = vsel %vm827, %v2477, -inf
      %2496 = vmax.xlane.f32.xlu0 %v2495
      %v2497 = vpop.xlane.xlu0 %2496
      %v2498 = vsel %vm827, %v2478, -inf
      %2499 = vmax.xlane.f32.xlu0 %v2498
      %v2500 = vpop.xlane.xlu0 %2499
      %v2501 = vsel %vm827, %v2479, -inf
      %2502 = vmax.xlane.f32.xlu0 %v2501
      %v2503 = vpop.xlane.xlu0 %2502
      %v2504 = vsub.f32 %v2472, %v2482
      %v2505 = vsub.f32 %v2473, %v2485
      %v2506 = vsub.f32 %v2474, %v2488
      %v2507 = vsub.f32 %v2475, %v2491
      %v2508 = vsub.f32 %v2476, %v2494
      %v2509 = vsub.f32 %v2477, %v2497
      %v2510 = vsub.f32 %v2478, %v2500
      %v2511 = vsub.f32 %v2479, %v2503
      %v2512 = vmul.f32 %v2504, 1.442695
      %v2513 = vpow.pop %v2512
      %v2514 = vmul.f32 %v2505, 1.442695
      %v2515 = vpow.pop %v2514
      %v2516 = vmul.f32 %v2506, 1.442695
      %v2517 = vpow.pop %v2516
      %v2518 = vmul.f32 %v2507, 1.442695
      %v2519 = vpow.pop %v2518
      %v2520 = vmul.f32 %v2508, 1.442695
      %v2521 = vpow.pop %v2520
      %v2522 = vmul.f32 %v2509, 1.442695
      %v2523 = vpow.pop %v2522
      %v2524 = vmul.f32 %v2510, 1.442695
      %v2525 = vpow.pop %v2524
      %v2526 = vmul.f32 %v2511, 1.442695
      %v2527 = vpow.pop %v2526
      %v2528 = vsel %vm827, %v2513, 0.0
      %2529 = vadd.xlane.f32.xlu0 %v2528
      %v2530 = vpop.xlane.xlu0 %2529
      %v2531 = vsel %vm827, %v2515, 0.0
      %2532 = vadd.xlane.f32.xlu0 %v2531
      %v2533 = vpop.xlane.xlu0 %2532
      %v2534 = vsel %vm827, %v2517, 0.0
      %2535 = vadd.xlane.f32.xlu0 %v2534
      %v2536 = vpop.xlane.xlu0 %2535
      %v2537 = vsel %vm827, %v2519, 0.0
      %2538 = vadd.xlane.f32.xlu0 %v2537
      %v2539 = vpop.xlane.xlu0 %2538
      %v2540 = vsel %vm827, %v2521, 0.0
      %2541 = vadd.xlane.f32.xlu0 %v2540
      %v2542 = vpop.xlane.xlu0 %2541
      %v2543 = vsel %vm827, %v2523, 0.0
      %2544 = vadd.xlane.f32.xlu0 %v2543
      %v2545 = vpop.xlane.xlu0 %2544
      %v2546 = vsel %vm827, %v2525, 0.0
      %2547 = vadd.xlane.f32.xlu0 %v2546
      %v2548 = vpop.xlane.xlu0 %2547
      %v2549 = vsel %vm827, %v2527, 0.0
      %2550 = vadd.xlane.f32.xlu0 %v2549
      %v2551 = vpop.xlane.xlu0 %2550
      %v2552 = vrcp.pop %v2530
      %v2553 = vrcp.pop %v2533
      %v2554 = vrcp.pop %v2536
      %v2555 = vrcp.pop %v2539
      %v2556 = vrcp.pop %v2542
      %v2557 = vrcp.pop %v2545
      %v2558 = vrcp.pop %v2548
      %v2559 = vrcp.pop %v2551
      %2560 = vrot.lane.b32.xlu0 %v627, 72
      %v2561 = vpop.permute.xlu0 %2560
      %2562 = vrot.lane.b32.xlu0 %v632, 72
      %v2563 = vpop.permute.xlu0 %2562
      %2564 = vrot.lane.b32.xlu0 %v637, 72
      %v2565 = vpop.permute.xlu0 %2564
      %2566 = vrot.lane.b32.xlu0 %v642, 72
      %v2567 = vpop.permute.xlu0 %2566
      %2568 = vrot.lane.b32.xlu0 %v647, 72
      %v2569 = vpop.permute.xlu0 %2568
      %2570 = vrot.lane.b32.xlu0 %v652, 72
      %v2571 = vpop.permute.xlu0 %2570
      %2572 = vrot.lane.b32.xlu0 %v657, 72
      %v2573 = vpop.permute.xlu0 %2572
      %2574 = vrot.lane.b32.xlu0 %v662, 72
      %v2575 = vpop.permute.xlu0 %2574
      %v2585 = vsel %vm827, %v2513, 0
      %v2588 = vsel %vm827, %v2515, 0
      %v2591 = vsel %vm827, %v2517, 0
      %v2594 = vsel %vm827, %v2519, 0
      %v2597 = vsel %vm827, %v2521, 0
      %v2600 = vsel %vm827, %v2523, 0
      %v2603 = vsel %vm827, %v2525, 0
      %v2606 = vsel %vm827, %v2527, 0
      %2608 = vmatprep.subr.mxu0 0.0
      %2609 = vmatpush1.msra.mxu0 %v2561
      %2610 = vmatprep.subr.mxu0 0.0
      %2611 = vmatpush1.msra.mxu0 %v2563
      %2612 = vmatprep.subr.mxu0 0.0
      %2613 = vmatpush1.msra.mxu0 %v2565
      %2614 = vmatprep.subr.mxu0 0.0
      %2615 = vmatpush1.msra.mxu0 %v2567
      %2616 = vmatprep.subr.mxu0 0.0
      %2617 = vmatpush1.msra.mxu0 %v2569
      %2618 = vmatprep.subr.mxu0 0.0
      %2619 = vmatpush1.msra.mxu0 %v2571
      %2620 = vmatprep.subr.mxu0 0.0
      %2621 = vmatpush1.msra.mxu0 %v2573
      %2622 = vmatprep.subr.mxu0 0.0
      %2623 = vmatpush1.msra.mxu0 %v2575
      %2624 = vmatprep.subr.mxu0 0.0
      %2625 = vmatpush1.msra.mxu0 0.0
      %2626 = vmatprep.subr.mxu0 0.0
      %2627 = vmatpush1.msra.mxu0 0.0
      %2628 = vmatprep.subr.mxu0 0.0
      %2629 = vmatpush1.msra.mxu0 0.0
      %2630 = vmatprep.subr.mxu0 0.0
      %2631 = vmatpush1.msra.mxu0 0.0
      %2632 = vmatprep.subr.mxu0 0.0
      %2633 = vmatpush1.msra.mxu0 0.0
      %2634 = vmatprep.subr.mxu0 0.0
      %2635 = vmatpush1.msra.mxu0 0.0
      %2636 = vmatprep.subr.mxu0 0.0
      %2637 = vmatpush1.msra.mxu0 0.0
      %2638 = vmatprep.subr.mxu0 0.0
      %2639 = vmatpush1.msra.mxu0 0.0
      %2640 = vmatprep.subr.mxu0 0.0
      %2641 = vmatpush1.msra.mxu0 0.0
      %2642 = vmatprep.subr.mxu0 0.0
      %2643 = vmatpush1.msra.mxu0 0.0
      %2644 = vmatprep.subr.mxu0 0.0
      %2645 = vmatpush1.msra.mxu0 0.0
      %2646 = vmatprep.subr.mxu0 0.0
      %2647 = vmatpush1.msra.mxu0 0.0
      %2648 = vmatprep.subr.mxu0 0.0
      %2649 = vmatpush1.msra.mxu0 0.0
      %2650 = vmatprep.subr.mxu0 0.0
      %2651 = vmatpush1.msra.mxu0 0.0
      %2652 = vmatprep.subr.mxu0 0.0
      %2653 = vmatpush1.msra.mxu0 0.0
      %2654 = vmatprep.subr.mxu0 0.0
      %2655 = vmatpush1.msra.mxu0 0.0
      %2656 = vmatprep.subr.mxu0 0.0
      %2657 = vmatpush1.msra.mxu0 0.0
      %2658 = vmatprep.subr.mxu0 0.0
      %2659 = vmatpush1.msra.mxu0 0.0
      %2660 = vmatprep.subr.mxu0 0.0
      %2661 = vmatpush1.msra.mxu0 0.0
      %2662 = vmatprep.subr.mxu0 0.0
      %2663 = vmatpush1.msra.mxu0 0.0
      %2664 = vmatprep.subr.mxu0 0.0
      %2665 = vmatpush1.msra.mxu0 0.0
      %2666 = vmatprep.subr.mxu0 0.0
      %2667 = vmatpush1.msra.mxu0 0.0
      %2668 = vmatprep.subr.mxu0 0.0
      %2669 = vmatpush1.msra.mxu0 0.0
      %2670 = vmatprep.subr.mxu0 0.0
      %2671 = vmatpush1.msra.mxu0 0.0
      %2672 = vmatprep.mubr.f32.mxu0 0.0
      %2673 = vmatmul.mubr.f32.gmra.mrb[0].mxu0 %v2585
      %v2674 = vpop.f32.mrb[0].mxu0
      %v2675 = vadd.f32 0.0, %v2674
      %v2676 = vpop.f32.mrb[0].mxu0
      %2677 = vmatprep.mubr.f32.mxu0 0.0
      %2678 = vmatmul.mubr.f32.gmra.mrb[0].mxu0 %v2588
      %v2679 = vpop.f32.mrb[0].mxu0
      %v2680 = vadd.f32 0.0, %v2679
      %v2681 = vpop.f32.mrb[0].mxu0
      %2682 = vmatprep.mubr.f32.mxu0 0.0
      %2683 = vmatmul.mubr.f32.gmra.mrb[0].mxu0 %v2591
      %v2684 = vpop.f32.mrb[0].mxu0
      %v2685 = vadd.f32 0.0, %v2684
      %v2686 = vpop.f32.mrb[0].mxu0
      %2687 = vmatprep.mubr.f32.mxu0 0.0
      %2688 = vmatmul.mubr.f32.gmra.mrb[0].mxu0 %v2594
      %v2689 = vpop.f32.mrb[0].mxu0
      %v2690 = vadd.f32 0.0, %v2689
      %v2691 = vpop.f32.mrb[0].mxu0
      %2692 = vmatprep.mubr.f32.mxu0 0.0
      %2693 = vmatmul.mubr.f32.gmra.mrb[0].mxu0 %v2597
      %v2694 = vpop.f32.mrb[0].mxu0
      %v2695 = vadd.f32 0.0, %v2694
      %v2696 = vpop.f32.mrb[0].mxu0
      %2697 = vmatprep.mubr.f32.mxu0 0.0
      %2698 = vmatmul.mubr.f32.gmra.mrb[0].mxu0 %v2600
      %v2699 = vpop.f32.mrb[0].mxu0
      %v2700 = vadd.f32 0.0, %v2699
      %v2701 = vpop.f32.mrb[0].mxu0
      %2702 = vmatprep.mubr.f32.mxu0 0.0
      %2703 = vmatmul.mubr.f32.gmra.mrb[0].mxu0 %v2603
      %v2704 = vpop.f32.mrb[0].mxu0
      %v2705 = vadd.f32 0.0, %v2704
      %v2706 = vpop.f32.mrb[0].mxu0
      %2707 = vmatprep.mubr.f32.mxu0 0.0
      %2708 = vmatmul.mubr.f32.gmra.mrb[0].mxu0 %v2606
      %v2709 = vpop.f32.mrb[0].mxu0
      %v2710 = vadd.f32 0.0, %v2709
      %v2711 = vpop.f32.mrb[0].mxu0
      %2712 = vdwg.mxu0
      %v2713 = vmul.f32 %v2675, %v2552
      %v2714 = vmul.f32 %v2680, %v2553
      %v2715 = vmul.f32 %v2685, %v2554
      %v2716 = vmul.f32 %v2690, %v2555
      %v2717 = vmul.f32 %v2695, %v2556
      %v2718 = vmul.f32 %v2700, %v2557
      %v2719 = vmul.f32 %v2705, %v2558
      %v2720 = vmul.f32 %v2710, %v2559
      %v2721 = vld [vmem:[%s5 + $0x18] sm:$0xff]
      %v2723 = vsel %vm665, %v2713, 0
      %v2726 = vsel %vm665, %v2714, 0
      %v2729 = vsel %vm665, %v2715, 0
      %v2732 = vsel %vm665, %v2716, 0
      %v2735 = vsel %vm665, %v2717, 0
      %v2738 = vsel %vm665, %v2718, 0
      %v2741 = vsel %vm665, %v2719, 0
      %v2744 = vsel %vm665, %v2720, 0
      %2746 = vmatprep.subr.mxu0 0.0
      %2747 = vmatpush1.msra.mxu0 %v2721
      %2748 = vmatprep.subr.mxu0 0.0
      %2749 = vmatpush1.msra.mxu0 0.0
      %2750 = vmatprep.subr.mxu0 0.0
      %2751 = vmatpush1.msra.mxu0 0.0
      %2752 = vmatprep.subr.mxu0 0.0
      %2753 = vmatpush1.msra.mxu0 0.0
      %2754 = vmatprep.subr.mxu0 0.0
      %2755 = vmatpush1.msra.mxu0 0.0
      %2756 = vmatprep.subr.mxu0 0.0
      %2757 = vmatpush1.msra.mxu0 0.0
      %2758 = vmatprep.subr.mxu0 0.0
      %2759 = vmatpush1.msra.mxu0 0.0
      %2760 = vmatprep.subr.mxu0 0.0
      %2761 = vmatpush1.msra.mxu0 0.0
      %2762 = vmatprep.subr.mxu0 0.0
      %2763 = vmatpush1.msra.mxu0 0.0
      %2764 = vmatprep.subr.mxu0 0.0
      %2765 = vmatpush1.msra.mxu0 0.0
      %2766 = vmatprep.subr.mxu0 0.0
      %2767 = vmatpush1.msra.mxu0 0.0
      %2768 = vmatprep.subr.mxu0 0.0
      %2769 = vmatpush1.msra.mxu0 0.0
      %2770 = vmatprep.subr.mxu0 0.0
      %2771 = vmatpush1.msra.mxu0 0.0
      %2772 = vmatprep.subr.mxu0 0.0
      %2773 = vmatpush1.msra.mxu0 0.0
      %2774 = vmatprep.subr.mxu0 0.0
      %2775 = vmatpush1.msra.mxu0 0.0
      %2776 = vmatprep.subr.mxu0 0.0
      %2777 = vmatpush1.msra.mxu0 0.0
      %2778 = vmatprep.subr.mxu0 0.0
      %2779 = vmatpush1.msra.mxu0 0.0
      %2780 = vmatprep.subr.mxu0 0.0
      %2781 = vmatpush1.msra.mxu0 0.0
      %2782 = vmatprep.subr.mxu0 0.0
      %2783 = vmatpush1.msra.mxu0 0.0
      %2784 = vmatprep.subr.mxu0 0.0
      %2785 = vmatpush1.msra.mxu0 0.0
      %2786 = vmatprep.subr.mxu0 0.0
      %2787 = vmatpush1.msra.mxu0 0.0
      %2788 = vmatprep.subr.mxu0 0.0
      %2789 = vmatpush1.msra.mxu0 0.0
      %2790 = vmatprep.subr.mxu0 0.0
      %2791 = vmatpush1.msra.mxu0 0.0
      %2792 = vmatprep.subr.mxu0 0.0
      %2793 = vmatpush1.msra.mxu0 0.0
      %2794 = vmatprep.subr.mxu0 0.0
      %2795 = vmatpush1.msra.mxu0 0.0
      %2796 = vmatprep.subr.mxu0 0.0
      %2797 = vmatpush1.msra.mxu0 0.0
      %2798 = vmatprep.subr.mxu0 0.0
      %2799 = vmatpush1.msra.mxu0 0.0
      %2800 = vmatprep.subr.mxu0 0.0
      %2801 = vmatpush1.msra.mxu0 0.0
      %2802 = vmatprep.subr.mxu0 0.0
      %2803 = vmatpush1.msra.mxu0 0.0
      %2804 = vmatprep.subr.mxu0 0.0
      %2805 = vmatpush1.msra.mxu0 0.0
      %2806 = vmatprep.subr.mxu0 0.0
      %2807 = vmatpush1.msra.mxu0 0.0
      %2808 = vmatprep.subr.mxu0 0.0
      %2809 = vmatpush1.msra.mxu0 0.0
      %2810 = vmatprep.mubr.f32.mxu0 0.0
      %2811 = vmatmul.mubr.f32.gmra.mrb[0].mxu0 %v2723
      %v2812 = vpop.f32.mrb[0].mxu0
      %v2813 = vadd.f32 0.0, %v2812
      %v2814 = vpop.f32.mrb[0].mxu0
      %2815 = vmatprep.mubr.f32.mxu0 0.0
      %2816 = vmatmul.mubr.f32.gmra.mrb[0].mxu0 %v2726
      %v2817 = vpop.f32.mrb[0].mxu0
      %v2818 = vadd.f32 0.0, %v2817
      %v2819 = vpop.f32.mrb[0].mxu0
      %2820 = vmatprep.mubr.f32.mxu0 0.0
      %2821 = vmatmul.mubr.f32.gmra.mrb[0].mxu0 %v2729
      %v2822 = vpop.f32.mrb[0].mxu0
      %v2823 = vadd.f32 0.0, %v2822
      %v2824 = vpop.f32.mrb[0].mxu0
      %2825 = vmatprep.mubr.f32.mxu0 0.0
      %2826 = vmatmul.mubr.f32.gmra.mrb[0].mxu0 %v2732
      %v2827 = vpop.f32.mrb[0].mxu0
      %v2828 = vadd.f32 0.0, %v2827
      %v2829 = vpop.f32.mrb[0].mxu0
      %2830 = vmatprep.mubr.f32.mxu0 0.0
      %2831 = vmatmul.mubr.f32.gmra.mrb[0].mxu0 %v2735
      %v2832 = vpop.f32.mrb[0].mxu0
      %v2833 = vadd.f32 0.0, %v2832
      %v2834 = vpop.f32.mrb[0].mxu0
      %2835 = vmatprep.mubr.f32.mxu0 0.0
      %2836 = vmatmul.mubr.f32.gmra.mrb[0].mxu0 %v2738
      %v2837 = vpop.f32.mrb[0].mxu0
      %v2838 = vadd.f32 0.0, %v2837
      %v2839 = vpop.f32.mrb[0].mxu0
      %2840 = vmatprep.mubr.f32.mxu0 0.0
      %2841 = vmatmul.mubr.f32.gmra.mrb[0].mxu0 %v2741
      %v2842 = vpop.f32.mrb[0].mxu0
      %v2843 = vadd.f32 0.0, %v2842
      %v2844 = vpop.f32.mrb[0].mxu0
      %2845 = vmatprep.mubr.f32.mxu0 0.0
      %2846 = vmatmul.mubr.f32.gmra.mrb[0].mxu0 %v2744
      %v2847 = vpop.f32.mrb[0].mxu0
      %v2848 = vadd.f32 0.0, %v2847
      %v2849 = vpop.f32.mrb[0].mxu0
      %2850 = vdwg.mxu0
      %v2851 = vadd.f32 %v2295, %v2813
      %v2852 = vadd.f32 %v2296, %v2818
      %v2853 = vadd.f32 %v2297, %v2823
      %v2854 = vadd.f32 %v2298, %v2828
      %v2855 = vadd.f32 %v2299, %v2833
      %v2856 = vadd.f32 %v2300, %v2838
      %v2857 = vadd.f32 %v2301, %v2843
      %v2858 = vadd.f32 %v2302, %v2848
      %v2859 = vadd.f32 %v279, %v2851
      %v2860 = vadd.f32 %v280, %v2852
      %v2861 = vadd.f32 %v281, %v2853
      %v2862 = vadd.f32 %v282, %v2854
      %v2863 = vadd.f32 %v283, %v2855
      %v2864 = vadd.f32 %v284, %v2856
      %v2865 = vadd.f32 %v285, %v2857
      %v2866 = vadd.f32 %v286, %v2858
      %v2867 = vld [vmem:[%s6] sm:$0x1]
      %v2869 = vlaneseq
      %v2870 = vshrl.u32 %v2869, 7
      %v2871 = vsub.s32 0, %v2870
      %v2872 = vrot.slane %v2867, %v2871
      %v2874 = vadd.f32 %v2859, %v2872
      %v2875 = vadd.f32 %v2860, %v2872
      %v2876 = vadd.f32 %v2861, %v2872
      %v2877 = vadd.f32 %v2862, %v2872
      %v2878 = vadd.f32 %v2863, %v2872
      %v2879 = vadd.f32 %v2864, %v2872
      %v2880 = vadd.f32 %v2865, %v2872
      %v2881 = vadd.f32 %v2866, %v2872
      %2882 = vst.msk [vmem:[%s278] sm:$0xff] %vm287, %v2874
      %2883 = vst.msk [vmem:[%s278 + $0x8] sm:$0xff] %vm287, %v2875
      %2884 = vst.msk [vmem:[%s278 + $0x10] sm:$0xff] %vm287, %v2876
      %2885 = vst.msk [vmem:[%s278 + $0x18] sm:$0xff] %vm287, %v2877
      %2886 = vst.msk [vmem:[%s278 + $0x20] sm:$0xff] %vm287, %v2878
      %2887 = vst.msk [vmem:[%s278 + $0x28] sm:$0xff] %vm287, %v2879
      %2888 = vst.msk [vmem:[%s278 + $0x30] sm:$0xff] %vm287, %v2880
      %2889 = vst.msk [vmem:[%s278 + $0x38] sm:$0xff] %vm287, %v2881
      %p2890 = scmp.lt.s32.totalorder %s18, 1
      %s2891 = scalar_select %p2890, %s18, 1
      %s2892 = smul.addr %s2891, 8
      %s2893 = smul.addr %s2892, 8
      %s2894 = scalar_lea.vmem %s7, %s2893
      // Predicated region
      $region49: #{block_forward.2} parent=47 // pred_check
        %p2895 = pneg %p188
      $region50: #{block_forward.2} parent=47 // pred_check_branch
        %2897 = sbr.rel (%p2895) target = $region52
      $region51: #{block_forward.2} parent=47 // pred_region
        _
      $region52: #{block_forward.2} parent=47 // pred_fallthru
        _
    $region48: #{block_forward.2} parent=5 // pred_fallthru
      _
    %p2898 = scmp.le.s32.totalorder 2, %s13
    // Predicated region
    $region53: #{block_forward.2} parent=5 // pred_check
      %p2899 = pneg %p2898
    $region54: #{block_forward.2} parent=5 // pred_check_branch
      %2901 = sbr.rel (%p2899) target = $region56
    $region55: #{block_forward.2} parent=5 // pred_region
      %s2902 = ssub.s32 %s13, 2
      // Predicated region
      $region57: #{block_forward.2} parent=55 // pred_check
        %p2903 = pneg %p194
      $region58: #{block_forward.2} parent=55 // pred_check_branch
        %2905 = sbr.rel (%p2903) target = $region60
      $region59: #{block_forward.2} parent=55 // pred_region
        %p2906 = scmp.lt.s32.totalorder %s19, 1
        %s2907 = scalar_select %p2906, %s19, 1
        %s2908 = smul.addr %s2907, 8
        %s2909 = smul.addr %s2908, 8
        %s2910 = scalar_lea.vmem %s7, %s2909
      $region60: #{block_forward.2} parent=55 // pred_fallthru
        _
    $region56: #{block_forward.2} parent=5 // pred_fallthru
      _
  $region6: #{block_forward.2} parent=0 // loop_footer
    %s17 = sadd.s32 1, %s13
  $region7: #{block_forward.2} parent=0 // loop_footer_branch
    %12 = sbr.rel target = $region3
  $region8: #{block_forward.2} parent=0 // loop_exit
    _

</llo_original>
